<compile_context>
chip_gen: v6e
topology: v6e:2x2x1
jax: 0.10.0
libtpu: 0.0.40
codegen_flags: <defaults>
</compile_context>

<pallas_src>
import jax
import jax.numpy as jnp
from jax import lax
from jax.experimental import pallas as pl
from jax.experimental.pallas import tpu as pltpu

LANE = 128
SUB = 8


def _mlp_kernel(x_ref,                                   # (tb, F)   f32  batch-major tile
                w1_ref, b1_ref,                          # (512, Fp) bf16, (512, 1) f32
                w2_ref, b2_ref,                          # (256, 512) bf16, (256, 1) f32
                w3_ref, b3_ref,                          # (128, 256) bf16, (128, 1) f32
                ws_ref, bs_ref,                          # (32, 6), (32, 1) f32
                wc1s_ref, wc1t_ref, bc1_ref,             # (64, 128), (64, 32), (64, 1) f32
                wc2_ref, bc2_ref,                        # (32, 64), (32, 1) f32
                wc3_ref, bc3_ref,                        # (32, 1), (1, 1) f32
                out_ref,                                 # (1, tb) f32
                xt_ref, st_ref):                         # scratch: (Fp, tb) f32, (6, tb) f32
    tb, f = x_ref.shape
    fp = xt_ref.shape[0]

    # ---- 1. transpose the x tile into a feature-major VMEM scratch ------------------
    # Aligned (tb, 128) -> (128, tb) block transposes; the final block overlaps the
    # previous one so the transposed width is always exactly 128 lanes.
    if f >= LANE:
        col_starts = list(range(0, f - LANE + 1, LANE))
        if f % LANE:
            col_starts.append(f - LANE)                  # overlap re-writes identical rows
        for s in col_starts:
            xt_ref[s:s + LANE, :] = jnp.transpose(x_ref[:, s:s + LANE])
    else:  # not reachable for input_size=365; kept for generality
        xt_ref[0:f, :] = jnp.transpose(x_ref[...])
    if fp > f:
        # Zero the K-padding rows so the zero-padded w1 columns stay inert (no NaN*0).
        xt_ref[f:fp, :] = jnp.zeros((fp - f, tb), jnp.float32)

    # ---- 2. feature_extractor: Linear->ReLU x3 (bf16 operands, f32 accumulation) ----
    xt_bf = xt_ref[...].astype(jnp.bfloat16)             # (Fp, tb)
    h = jnp.dot(w1_ref[...], xt_bf, preferred_element_type=jnp.float32) + b1_ref[...]
    h = jnp.maximum(h, 0.0)                              # (512, tb)
    h = jnp.dot(w2_ref[...], h.astype(jnp.bfloat16),
                preferred_element_type=jnp.float32) + b2_ref[...]
    h = jnp.maximum(h, 0.0)                              # (256, tb)
    seq = jnp.dot(w3_ref[...], h.astype(jnp.bfloat16),
                  preferred_element_type=jnp.float32) + b3_ref[...]
    seq = jnp.maximum(seq, 0.0)                          # (128, tb)

    # ---- 3. per-sample statistics: fused two-pass over feature chunks ---------------
    n_chunks = f // SUB                                  # 45 full 8-row chunks
    tail = f - n_chunks * SUB                            # 5 leftover feature rows
    lane_blk = min(LANE, tb)                             # 128-lane batch blocks
    n_blk = tb // lane_blk
    inv_n = 1.0 / f
    inv_nm1 = 1.0 / (f - 1)

    def stats_block(bi, carry):
        off = bi * lane_blk
        if not isinstance(off, int):
            off = pl.multiple_of(off, lane_blk)
        col = pl.ds(off, lane_blk)

        # pass A: sum / min / max (register-resident (8, lane_blk) accumulators)
        s1 = jnp.zeros((SUB, lane_blk), jnp.float32)
        mn = jnp.full((SUB, lane_blk), jnp.inf, jnp.float32)
        mx = jnp.full((SUB, lane_blk), -jnp.inf, jnp.float32)
        for ci in range(n_chunks):
            v = xt_ref[ci * SUB:(ci + 1) * SUB, col]
            s1 = s1 + v
            mn = jnp.minimum(mn, v)
            mx = jnp.maximum(mx, v)
        s1 = jnp.sum(s1, axis=0, keepdims=True)
        mn = jnp.min(mn, axis=0, keepdims=True)
        mx = jnp.max(mx, axis=0, keepdims=True)
        if tail:
            t = xt_ref[n_chunks * SUB:f, col]
            s1 = s1 + jnp.sum(t, axis=0, keepdims=True)
            mn = jnp.minimum(mn, jnp.min(t, axis=0, keepdims=True))
            mx = jnp.maximum(mx, jnp.max(t, axis=0, keepdims=True))
        mean = s1 * inv_n                                # (1, lane_blk)

        # pass B: centered power sums (two-pass keeps the centered numerics)
        s2 = jnp.zeros((SUB, lane_blk), jnp.float32)
        s3 = jnp.zeros((SUB, lane_blk), jnp.float32)
        s4 = jnp.zeros((SUB, lane_blk), jnp.float32)
        for ci in range(n_chunks):
            cen = xt_ref[ci * SUB:(ci + 1) * SUB, col] - mean
            c2 = cen * cen
            s2 = s2 + c2
            s3 = s3 + c2 * cen
            s4 = s4 + c2 * c2
        s2 = jnp.sum(s2, axis=0, keepdims=True)
        s3 = jnp.sum(s3, axis=0, keepdims=True)
        s4 = jnp.sum(s4, axis=0, keepdims=True)
        if tail:
            cen = xt_ref[n_chunks * SUB:f, col] - mean
            c2 = cen * cen
            s2 = s2 + jnp.sum(c2, axis=0, keepdims=True)
            s3 = s3 + jnp.sum(c2 * cen, axis=0, keepdims=True)
            s4 = s4 + jnp.sum(c2 * c2, axis=0, keepdims=True)

        # torch semantics: unbiased std, biased central moments, mixed in skew/kurt.
        var_unb = s2 * inv_nm1
        std = jnp.sqrt(var_unb)
        m3 = s3 * inv_n
        m4 = s4 * inv_n
        skew = m3 / (std * var_unb + 1e-8)               # m3 / (std**3 + 1e-8)
        kurt = m4 / (var_unb * var_unb + 1e-8)           # m4 / (std**4 + 1e-8)

        st_ref[0:1, col] = mean
        st_ref[1:2, col] = std
        st_ref[2:3, col] = mn
        st_ref[3:4, col] = mx
        st_ref[4:5, col] = skew
        st_ref[5:6, col] = kurt
        return carry

    if n_blk == 1:
        stats_block(0, 0)                                # fully static path (small tb)
    else:
        lax.fori_loop(0, n_blk, stats_block, 0)

    # ---- 4. stat_features Linear(6, 32) as rank-1 broadcasts -------------------------
    ws = ws_ref[...]                                     # (32, 6)
    stat = (ws[:, 0:1] * st_ref[0:1, :] + ws[:, 1:2] * st_ref[1:2, :]
            + ws[:, 2:3] * st_ref[2:3, :] + ws[:, 3:4] * st_ref[3:4, :]
            + ws[:, 4:5] * st_ref[4:5, :] + ws[:, 5:6] * st_ref[5:6, :]
            + bs_ref[...])                               # (32, tb)

    # ---- 5. classifier (concat folded into a split matmul), f32 ----------------------
    c = (jnp.dot(wc1s_ref[...], seq, preferred_element_type=jnp.float32)
         + jnp.dot(wc1t_ref[...], stat, preferred_element_type=jnp.float32)
         + bc1_ref[...])
    c = jnp.maximum(c, 0.0)                              # (64, tb)
    c = jnp.dot(wc2_ref[...], c, preferred_element_type=jnp.float32) + bc2_ref[...]
    c = jnp.maximum(c, 0.0)                              # (32, tb)
    logit = jnp.sum(wc3_ref[...] * c, axis=0, keepdims=True) + bc3_ref[...]  # (1, tb)

    out_ref[...] = jax.nn.sigmoid(logit) * 4.0 + 6.0


def init_params(key, input_size=365):
    """Deterministic init mirroring nn.Linear shapes.

    Weights are stored (out, in) -- the PyTorch nn.Linear layout -- and biases
    as (out, 1) columns; wc3 is stored as a (32, 1) column.
    """
    spec = [
        ("w1", (512, input_size), input_size), ("b1", (512, 1), input_size),
        ("w2", (256, 512), 512),               ("b2", (256, 1), 512),
        ("w3", (128, 256), 256),               ("b3", (128, 1), 256),
        ("ws", (32, 6), 6),                    ("bs", (32, 1), 6),
        ("wc1", (64, 160), 160),               ("bc1", (64, 1), 160),
        ("wc2", (32, 64), 64),                 ("bc2", (32, 1), 64),
        ("wc3", (32, 1), 32),                  ("bc3", (1, 1), 32),
    ]
    params = {}
    keys = jax.random.split(key, len(spec))
    for k, (name, shape, fan_in) in zip(keys, spec):
        bound = 1.0 / (float(fan_in) ** 0.5)
        params[name] = jax.random.uniform(k, shape, jnp.float32, -bound, bound)
    return params


def _round_up(a, b):
    return (a + b - 1) // b * b


def mlp_forward(x, params, *, tb_max=1024, vmem_limit_bytes=32 << 20):
    """x: (B, F) float32 batch-major (no wrapper-side transpose).

    tb_max / vmem_limit_bytes defaults are safe on all generations (v7x has
    64 MiB VMEM per core); on v5e/v6e pass tb_max=2048, vmem_limit_bytes=48<<20
    to amortize per-step overhead further.
    """
    B, F = x.shape
    assert tb_max % 128 == 0
    Fp = _round_up(F, SUB)

    # One-time wrapper-side weight prep: bf16 casts for matmuls 1-3, w1 zero-padded
    # to the 8-aligned K; classifier first layer split to fold the concat.
    w1p = jnp.pad(params["w1"], ((0, 0), (0, Fp - F))).astype(jnp.bfloat16)
    w2 = params["w2"].astype(jnp.bfloat16)
    w3 = params["w3"].astype(jnp.bfloat16)
    wc1_seq = params["wc1"][:, :128]
    wc1_stat = params["wc1"][:, 128:]

    # Batch tile: multiple of 128 for B > 128 (aligned in-kernel lane blocks) and
    # >= 2 grid steps so the parallel batch axis can split across v7x TensorCores.
    if B <= 128:
        tb = B
    else:
        tb = min(tb_max, _round_up(pl.cdiv(B, 2), 128))
    grid = (pl.cdiv(B, tb),)

    args = (x,
            w1p, params["b1"], w2, params["b2"], w3, params["b3"],
            params["ws"], params["bs"],
            wc1_seq, wc1_stat, params["bc1"],
            params["wc2"], params["bc2"], params["wc3"], params["bc3"])

    # x is tiled over batch; every weight/bias is a full-extent block with a constant
    # index_map -> DMA'd once and resident in VMEM across grid steps.
    in_specs = [pl.BlockSpec((tb, F), lambda i: (i, 0))] + [
        pl.BlockSpec(a.shape, lambda i: (0, 0)) for a in args[1:]
    ]

    weight_bytes = sum(int(a.size) * a.dtype.itemsize for a in args[1:])
    flops = 2 * B * (Fp * 512 + 512 * 256 + 256 * 128 + 160 * 64 + 64 * 32 + 32) \
        + 12 * B * F
    cost = pl.CostEstimate(
        flops=flops,
        transcendentals=2 * B,
        bytes_accessed=B * F * 4 + B * 4 + weight_bytes,
    )

    out = pl.pallas_call(
        _mlp_kernel,
        out_shape=jax.ShapeDtypeStruct((1, B), jnp.float32),
        grid=grid,
        in_specs=in_specs,
        out_specs=pl.BlockSpec((1, tb), lambda i: (0, i)),
        scratch_shapes=[
            pltpu.VMEM((Fp, tb), jnp.float32),           # feature-major x tile
            pltpu.VMEM((6, tb), jnp.float32),            # six per-sample stat rows
        ],
        compiler_params=pltpu.CompilerParams(
            dimension_semantics=("parallel",),           # megacore sharding on v7x
            vmem_limit_bytes=vmem_limit_bytes,
        ),
        cost_estimate=cost,
    )(*args)
    return out[0]                                        # (B,) -- matches .squeeze(-1)


def mlp_reference(x, params):
    """Pure-JAX f32 reference mirroring the PyTorch forward (eval mode)."""
    h = jnp.maximum(x @ params["w1"].T + params["b1"][:, 0], 0.0)
    h = jnp.maximum(h @ params["w2"].T + params["b2"][:, 0], 0.0)
    seq = jnp.maximum(h @ params["w3"].T + params["b3"][:, 0], 0.0)
    mean = x.mean(axis=1)
    std = x.std(axis=1, ddof=1)
    mn = x.min(axis=1)
    mx = x.max(axis=1)
    cen = x - mean[:, None]
    skew = (cen ** 3).mean(axis=1) / (std ** 3 + 1e-8)
    kurt = (cen ** 4).mean(axis=1) / (std ** 4 + 1e-8)
    stat_feats = jnp.stack([mean, std, mn, mx, skew, kurt], axis=1)
    stat = stat_feats @ params["ws"].T + params["bs"][:, 0]
    comb = jnp.concatenate([seq, stat], axis=1)
    c = jnp.maximum(comb @ params["wc1"].T + params["bc1"][:, 0], 0.0)
    c = jnp.maximum(c @ params["wc2"].T + params["bc2"][:, 0], 0.0)
    logit = (c @ params["wc3"])[:, 0] + params["bc3"][0, 0]
    return jax.nn.sigmoid(logit) * 4.0 + 6.0


if __name__ == "__main__":
    key = jax.random.PRNGKey(0)
    pkey, xkey = jax.random.split(key)

    B, F = 8, 365
    params = init_params(pkey, input_size=F)
    x = jax.random.normal(xkey, (B, F), jnp.float32)

    y = mlp_forward(x, params)
    y = jax.block_until_ready(y)
    assert y.shape == (B,) and y.dtype == jnp.float32

    y_ref = mlp_reference(x, params)
    err = float(jnp.max(jnp.abs(y - y_ref)))
    assert err < 0.1, f"max abs error vs f32 reference too large: {err}"

    print("KERNEL_OK")
</pallas_src>

<mosaic_0001>
module attributes {stable_mosaic.version = 11 : i64} {
  func.func @_mlp_kernel(%arg0: i32, %arg1: memref<8x365xf32, #tpu.memory_space<vmem>>, %arg2: memref<512x368xbf16, #tpu.memory_space<vmem>>, %arg3: memref<512x1xf32, #tpu.memory_space<vmem>>, %arg4: memref<256x512xbf16, #tpu.memory_space<vmem>>, %arg5: memref<256x1xf32, #tpu.memory_space<vmem>>, %arg6: memref<128x256xbf16, #tpu.memory_space<vmem>>, %arg7: memref<128x1xf32, #tpu.memory_space<vmem>>, %arg8: memref<32x6xf32, #tpu.memory_space<vmem>>, %arg9: memref<32x1xf32, #tpu.memory_space<vmem>>, %arg10: memref<64x128xf32, #tpu.memory_space<vmem>>, %arg11: memref<64x32xf32, #tpu.memory_space<vmem>>, %arg12: memref<64x1xf32, #tpu.memory_space<vmem>>, %arg13: memref<32x64xf32, #tpu.memory_space<vmem>>, %arg14: memref<32x1xf32, #tpu.memory_space<vmem>>, %arg15: memref<32x1xf32, #tpu.memory_space<vmem>>, %arg16: memref<1x1xf32, #tpu.memory_space<vmem>>, %arg17: memref<1x8xf32, #tpu.memory_space<vmem>>, %arg18: memref<368x8xf32, #tpu.memory_space<vmem>>, %arg19: memref<6x8xf32, #tpu.memory_space<vmem>>) attributes {dimension_semantics = [#tpu.dimension_semantics<parallel>], iteration_bounds = array<i64: 1>, scalar_prefetch = 0 : i64, scratch_operands = 2 : i64, tpu.core_type = #tpu.core_type<tc>, window_params = [{transform_indices = @transform_0, window_bounds = array<i64: 8, 365>}, {pipeline_mode = #tpu.pipeline_mode<synchronous>, transform_indices = @transform_1, window_bounds = array<i64: 512, 368>}, {pipeline_mode = #tpu.pipeline_mode<synchronous>, transform_indices = @transform_2, window_bounds = array<i64: 512, 1>}, {pipeline_mode = #tpu.pipeline_mode<synchronous>, transform_indices = @transform_3, window_bounds = array<i64: 256, 512>}, {pipeline_mode = #tpu.pipeline_mode<synchronous>, transform_indices = @transform_4, window_bounds = array<i64: 256, 1>}, {pipeline_mode = #tpu.pipeline_mode<synchronous>, transform_indices = @transform_5, window_bounds = array<i64: 128, 256>}, {pipeline_mode = #tpu.pipeline_mode<synchronous>, transform_indices = @transform_6, window_bounds = array<i64: 128, 1>}, {pipeline_mode = #tpu.pipeline_mode<synchronous>, transform_indices = @transform_7, window_bounds = array<i64: 32, 6>}, {pipeline_mode = #tpu.pipeline_mode<synchronous>, transform_indices = @transform_8, window_bounds = array<i64: 32, 1>}, {pipeline_mode = #tpu.pipeline_mode<synchronous>, transform_indices = @transform_9, window_bounds = array<i64: 64, 128>}, {pipeline_mode = #tpu.pipeline_mode<synchronous>, transform_indices = @transform_10, window_bounds = array<i64: 64, 32>}, {pipeline_mode = #tpu.pipeline_mode<synchronous>, transform_indices = @transform_11, window_bounds = array<i64: 64, 1>}, {pipeline_mode = #tpu.pipeline_mode<synchronous>, transform_indices = @transform_12, window_bounds = array<i64: 32, 64>}, {pipeline_mode = #tpu.pipeline_mode<synchronous>, transform_indices = @transform_13, window_bounds = array<i64: 32, 1>}, {pipeline_mode = #tpu.pipeline_mode<synchronous>, transform_indices = @transform_14, window_bounds = array<i64: 32, 1>}, {pipeline_mode = #tpu.pipeline_mode<synchronous>, transform_indices = @transform_15, window_bounds = array<i64: 1, 1>}, {transform_indices = @transform_16, window_bounds = array<i64: 1, 8>}]} {
    %c0 = arith.constant 0 : index
    %c0_0 = arith.constant 0 : index
    %0 = vector.load %arg1[%c0, %c0_0] : memref<8x365xf32, #tpu.memory_space<vmem>>, vector<8x128xf32>
    %1 = tpu.transpose %0, [1, 0] : vector<8x128xf32> -> vector<128x8xf32>
    %c0_1 = arith.constant 0 : index
    %c0_2 = arith.constant 0 : index
    %2 = vector.load %arg18[%c0_1, %c0_2] : memref<368x8xf32, #tpu.memory_space<vmem>>, vector<128x8xf32>
    tpu.vector_store %arg18[%c0_1, %c0_2], %1 {strides = array<i32>} : memref<368x8xf32, #tpu.memory_space<vmem>>, vector<128x8xf32>,
    %c0_3 = arith.constant 0 : index
    %c128 = arith.constant 128 : index
    %3 = vector.load %arg1[%c0_3, %c128] : memref<8x365xf32, #tpu.memory_space<vmem>>, vector<8x128xf32>
    %4 = tpu.transpose %3, [1, 0] : vector<8x128xf32> -> vector<128x8xf32>
    %c128_4 = arith.constant 128 : index
    %c0_5 = arith.constant 0 : index
    %5 = vector.load %arg18[%c128_4, %c0_5] : memref<368x8xf32, #tpu.memory_space<vmem>>, vector<128x8xf32>
    tpu.vector_store %arg18[%c128_4, %c0_5], %4 {strides = array<i32>} : memref<368x8xf32, #tpu.memory_space<vmem>>, vector<128x8xf32>,
    %c0_6 = arith.constant 0 : index
    %c237 = arith.constant 237 : index
    %6 = vector.load %arg1[%c0_6, %c237] : memref<8x365xf32, #tpu.memory_space<vmem>>, vector<8x128xf32>
    %7 = tpu.transpose %6, [1, 0] : vector<8x128xf32> -> vector<128x8xf32>
    %c237_7 = arith.constant 237 : index
    %c0_8 = arith.constant 0 : index
    %8 = vector.load %arg18[%c237_7, %c0_8] : memref<368x8xf32, #tpu.memory_space<vmem>>, vector<128x8xf32>
    tpu.vector_store %arg18[%c237_7, %c0_8], %7 {strides = array<i32>} : memref<368x8xf32, #tpu.memory_space<vmem>>, vector<128x8xf32>,
    %cst = arith.constant 0.000000e+00 : f32
    %9 = vector.broadcast %cst : f32 to vector<3x8xf32>
    %c365 = arith.constant 365 : index
    %c0_9 = arith.constant 0 : index
    %10 = vector.load %arg18[%c365, %c0_9] : memref<368x8xf32, #tpu.memory_space<vmem>>, vector<3x8xf32>
    tpu.vector_store %arg18[%c365, %c0_9], %9 {strides = array<i32>} : memref<368x8xf32, #tpu.memory_space<vmem>>, vector<3x8xf32>,
    %c0_10 = arith.constant 0 : index
    %c0_11 = arith.constant 0 : index
    %11 = vector.load %arg18[%c0_10, %c0_11] : memref<368x8xf32, #tpu.memory_space<vmem>>, vector<368x8xf32>
    %12 = arith.truncf %11 : vector<368x8xf32> to vector<368x8xbf16>
    %c0_12 = arith.constant 0 : index
    %c0_13 = arith.constant 0 : index
    %13 = vector.load %arg2[%c0_12, %c0_13] : memref<512x368xbf16, #tpu.memory_space<vmem>>, vector<512x368xbf16>
    %cst_14 = arith.constant dense<0.000000e+00> : vector<512x8xf32>
    %14 = tpu.matmul %13, %12, %cst_14 {dimension_numbers = #tpu.dot_dimension_numbers<[1], [0], [0], [1], [0, 0, 1, 1], [], []>} : vector<512x368xbf16>, vector<368x8xbf16>, vector<512x8xf32> -> vector<512x8xf32>
    %c0_15 = arith.constant 0 : index
    %c0_16 = arith.constant 0 : index
    %15 = vector.load %arg3[%c0_15, %c0_16] : memref<512x1xf32, #tpu.memory_space<vmem>>, vector<512x1xf32>
    %16 = vector.broadcast %15 : vector<512x1xf32> to vector<512x8xf32>
    %17 = arith.addf %14, %16 : vector<512x8xf32>
    %cst_17 = arith.constant 0.000000e+00 : f32
    %18 = vector.broadcast %cst_17 : f32 to vector<512x8xf32>
    %19 = arith.maximumf %17, %18 : vector<512x8xf32>
    %c0_18 = arith.constant 0 : index
    %c0_19 = arith.constant 0 : index
    %20 = vector.load %arg4[%c0_18, %c0_19] : memref<256x512xbf16, #tpu.memory_space<vmem>>, vector<256x512xbf16>
    %21 = arith.truncf %19 : vector<512x8xf32> to vector<512x8xbf16>
    %cst_20 = arith.constant dense<0.000000e+00> : vector<256x8xf32>
    %22 = tpu.matmul %20, %21, %cst_20 {dimension_numbers = #tpu.dot_dimension_numbers<[1], [0], [0], [1], [0, 0, 1, 1], [], []>} : vector<256x512xbf16>, vector<512x8xbf16>, vector<256x8xf32> -> vector<256x8xf32>
    %c0_21 = arith.constant 0 : index
    %c0_22 = arith.constant 0 : index
    %23 = vector.load %arg5[%c0_21, %c0_22] : memref<256x1xf32, #tpu.memory_space<vmem>>, vector<256x1xf32>
    %24 = vector.broadcast %23 : vector<256x1xf32> to vector<256x8xf32>
    %25 = arith.addf %22, %24 : vector<256x8xf32>
    %cst_23 = arith.constant 0.000000e+00 : f32
    %26 = vector.broadcast %cst_23 : f32 to vector<256x8xf32>
    %27 = arith.maximumf %25, %26 : vector<256x8xf32>
    %c0_24 = arith.constant 0 : index
    %c0_25 = arith.constant 0 : index
    %28 = vector.load %arg6[%c0_24, %c0_25] : memref<128x256xbf16, #tpu.memory_space<vmem>>, vector<128x256xbf16>
    %29 = arith.truncf %27 : vector<256x8xf32> to vector<256x8xbf16>
    %cst_26 = arith.constant dense<0.000000e+00> : vector<128x8xf32>
    %30 = tpu.matmul %28, %29, %cst_26 {dimension_numbers = #tpu.dot_dimension_numbers<[1], [0], [0], [1], [0, 0, 1, 1], [], []>} : vector<128x256xbf16>, vector<256x8xbf16>, vector<128x8xf32> -> vector<128x8xf32>
    %c0_27 = arith.constant 0 : index
    %c0_28 = arith.constant 0 : index
    %31 = vector.load %arg7[%c0_27, %c0_28] : memref<128x1xf32, #tpu.memory_space<vmem>>, vector<128x1xf32>
    %32 = vector.broadcast %31 : vector<128x1xf32> to vector<128x8xf32>
    %33 = arith.addf %30, %32 : vector<128x8xf32>
    %cst_29 = arith.constant 0.000000e+00 : f32
    %34 = vector.broadcast %cst_29 : f32 to vector<128x8xf32>
    %35 = arith.maximumf %33, %34 : vector<128x8xf32>
    %cst_30 = arith.constant 0.000000e+00 : f32
    %36 = vector.broadcast %cst_30 : f32 to vector<8x8xf32>
    %cst_31 = arith.constant 0x7F800000 : f32
    %37 = vector.broadcast %cst_31 : f32 to vector<8x8xf32>
    %cst_32 = arith.constant 0xFF800000 : f32
    %38 = vector.broadcast %cst_32 : f32 to vector<8x8xf32>
    %c0_33 = arith.constant 0 : index
    %c0_34 = arith.constant 0 : index
    %39 = vector.load %arg18[%c0_33, %c0_34] : memref<368x8xf32, #tpu.memory_space<vmem>>, vector<8x8xf32>
    %40 = arith.addf %36, %39 : vector<8x8xf32>
    %41 = arith.minimumf %37, %39 : vector<8x8xf32>
    %42 = arith.maximumf %38, %39 : vector<8x8xf32>
    %c8 = arith.constant 8 : index
    %c0_35 = arith.constant 0 : index
    %43 = vector.load %arg18[%c8, %c0_35] : memref<368x8xf32, #tpu.memory_space<vmem>>, vector<8x8xf32>
    %44 = arith.addf %40, %43 : vector<8x8xf32>
    %45 = arith.minimumf %41, %43 : vector<8x8xf32>
    %46 = arith.maximumf %42, %43 : vector<8x8xf32>
    %c16 = arith.constant 16 : index
    %c0_36 = arith.constant 0 : index
    %47 = vector.load %arg18[%c16, %c0_36] : memref<368x8xf32, #tpu.memory_space<vmem>>, vector<8x8xf32>
    %48 = arith.addf %44, %47 : vector<8x8xf32>
    %49 = arith.minimumf %45, %47 : vector<8x8xf32>
    %50 = arith.maximumf %46, %47 : vector<8x8xf32>
    %c24 = arith.constant 24 : index
    %c0_37 = arith.constant 0 : index
    %51 = vector.load %arg18[%c24, %c0_37] : memref<368x8xf32, #tpu.memory_space<vmem>>, vector<8x8xf32>
    %52 = arith.addf %48, %51 : vector<8x8xf32>
    %53 = arith.minimumf %49, %51 : vector<8x8xf32>
    %54 = arith.maximumf %50, %51 : vector<8x8xf32>
    %c32 = arith.constant 32 : index
    %c0_38 = arith.constant 0 : index
    %55 = vector.load %arg18[%c32, %c0_38] : memref<368x8xf32, #tpu.memory_space<vmem>>, vector<8x8xf32>
    %56 = arith.addf %52, %55 : vector<8x8xf32>
    %57 = arith.minimumf %53, %55 : vector<8x8xf32>
    %58 = arith.maximumf %54, %55 : vector<8x8xf32>
    %c40 = arith.constant 40 : index
    %c0_39 = arith.constant 0 : index
    %59 = vector.load %arg18[%c40, %c0_39] : memref<368x8xf32, #tpu.memory_space<vmem>>, vector<8x8xf32>
    %60 = arith.addf %56, %59 : vector<8x8xf32>
    %61 = arith.minimumf %57, %59 : vector<8x8xf32>
    %62 = arith.maximumf %58, %59 : vector<8x8xf32>
    %c48 = arith.constant 48 : index
    %c0_40 = arith.constant 0 : index
    %63 = vector.load %arg18[%c48, %c0_40] : memref<368x8xf32, #tpu.memory_space<vmem>>, vector<8x8xf32>
    %64 = arith.addf %60, %63 : vector<8x8xf32>
    %65 = arith.minimumf %61, %63 : vector<8x8xf32>
    %66 = arith.maximumf %62, %63 : vector<8x8xf32>
    %c56 = arith.constant 56 : index
    %c0_41 = arith.constant 0 : index
    %67 = vector.load %arg18[%c56, %c0_41] : memref<368x8xf32, #tpu.memory_space<vmem>>, vector<8x8xf32>
    %68 = arith.addf %64, %67 : vector<8x8xf32>
    %69 = arith.minimumf %65, %67 : vector<8x8xf32>
    %70 = arith.maximumf %66, %67 : vector<8x8xf32>
    %c64 = arith.constant 64 : index
    %c0_42 = arith.constant 0 : index
    %71 = vector.load %arg18[%c64, %c0_42] : memref<368x8xf32, #tpu.memory_space<vmem>>, vector<8x8xf32>
    %72 = arith.addf %68, %71 : vector<8x8xf32>
    %73 = arith.minimumf %69, %71 : vector<8x8xf32>
    %74 = arith.maximumf %70, %71 : vector<8x8xf32>
    %c72 = arith.constant 72 : index
    %c0_43 = arith.constant 0 : index
    %75 = vector.load %arg18[%c72, %c0_43] : memref<368x8xf32, #tpu.memory_space<vmem>>, vector<8x8xf32>
    %76 = arith.addf %72, %75 : vector<8x8xf32>
    %77 = arith.minimumf %73, %75 : vector<8x8xf32>
    %78 = arith.maximumf %74, %75 : vector<8x8xf32>
    %c80 = arith.constant 80 : index
    %c0_44 = arith.constant 0 : index
    %79 = vector.load %arg18[%c80, %c0_44] : memref<368x8xf32, #tpu.memory_space<vmem>>, vector<8x8xf32>
    %80 = arith.addf %76, %79 : vector<8x8xf32>
    %81 = arith.minimumf %77, %79 : vector<8x8xf32>
    %82 = arith.maximumf %78, %79 : vector<8x8xf32>
    %c88 = arith.constant 88 : index
    %c0_45 = arith.constant 0 : index
    %83 = vector.load %arg18[%c88, %c0_45] : memref<368x8xf32, #tpu.memory_space<vmem>>, vector<8x8xf32>
    %84 = arith.addf %80, %83 : vector<8x8xf32>
    %85 = arith.minimumf %81, %83 : vector<8x8xf32>
    %86 = arith.maximumf %82, %83 : vector<8x8xf32>
    %c96 = arith.constant 96 : index
    %c0_46 = arith.constant 0 : index
    %87 = vector.load %arg18[%c96, %c0_46] : memref<368x8xf32, #tpu.memory_space<vmem>>, vector<8x8xf32>
    %88 = arith.addf %84, %87 : vector<8x8xf32>
    %89 = arith.minimumf %85, %87 : vector<8x8xf32>
    %90 = arith.maximumf %86, %87 : vector<8x8xf32>
    %c104 = arith.constant 104 : index
    %c0_47 = arith.constant 0 : index
    %91 = vector.load %arg18[%c104, %c0_47] : memref<368x8xf32, #tpu.memory_space<vmem>>, vector<8x8xf32>
    %92 = arith.addf %88, %91 : vector<8x8xf32>
    %93 = arith.minimumf %89, %91 : vector<8x8xf32>
    %94 = arith.maximumf %90, %91 : vector<8x8xf32>
    %c112 = arith.constant 112 : index
    %c0_48 = arith.constant 0 : index
    %95 = vector.load %arg18[%c112, %c0_48] : memref<368x8xf32, #tpu.memory_space<vmem>>, vector<8x8xf32>
    %96 = arith.addf %92, %95 : vector<8x8xf32>
    %97 = arith.minimumf %93, %95 : vector<8x8xf32>
    %98 = arith.maximumf %94, %95 : vector<8x8xf32>
    %c120 = arith.constant 120 : index
    %c0_49 = arith.constant 0 : index
    %99 = vector.load %arg18[%c120, %c0_49] : memref<368x8xf32, #tpu.memory_space<vmem>>, vector<8x8xf32>
    %100 = arith.addf %96, %99 : vector<8x8xf32>
    %101 = arith.minimumf %97, %99 : vector<8x8xf32>
    %102 = arith.maximumf %98, %99 : vector<8x8xf32>
    %c128_50 = arith.constant 128 : index
    %c0_51 = arith.constant 0 : index
    %103 = vector.load %arg18[%c128_50, %c0_51] : memref<368x8xf32, #tpu.memory_space<vmem>>, vector<8x8xf32>
    %104 = arith.addf %100, %103 : vector<8x8xf32>
    %105 = arith.minimumf %101, %103 : vector<8x8xf32>
    %106 = arith.maximumf %102, %103 : vector<8x8xf32>
    %c136 = arith.constant 136 : index
    %c0_52 = arith.constant 0 : index
    %107 = vector.load %arg18[%c136, %c0_52] : memref<368x8xf32, #tpu.memory_space<vmem>>, vector<8x8xf32>
    %108 = arith.addf %104, %107 : vector<8x8xf32>
    %109 = arith.minimumf %105, %107 : vector<8x8xf32>
    %110 = arith.maximumf %106, %107 : vector<8x8xf32>
    %c144 = arith.constant 144 : index
    %c0_53 = arith.constant 0 : index
    %111 = vector.load %arg18[%c144, %c0_53] : memref<368x8xf32, #tpu.memory_space<vmem>>, vector<8x8xf32>
    %112 = arith.addf %108, %111 : vector<8x8xf32>
    %113 = arith.minimumf %109, %111 : vector<8x8xf32>
    %114 = arith.maximumf %110, %111 : vector<8x8xf32>
    %c152 = arith.constant 152 : index
    %c0_54 = arith.constant 0 : index
    %115 = vector.load %arg18[%c152, %c0_54] : memref<368x8xf32, #tpu.memory_space<vmem>>, vector<8x8xf32>
    %116 = arith.addf %112, %115 : vector<8x8xf32>
    %117 = arith.minimumf %113, %115 : vector<8x8xf32>
    %118 = arith.maximumf %114, %115 : vector<8x8xf32>
    %c160 = arith.constant 160 : index
    %c0_55 = arith.constant 0 : index
    %119 = vector.load %arg18[%c160, %c0_55] : memref<368x8xf32, #tpu.memory_space<vmem>>, vector<8x8xf32>
    %120 = arith.addf %116, %119 : vector<8x8xf32>
    %121 = arith.minimumf %117, %119 : vector<8x8xf32>
    %122 = arith.maximumf %118, %119 : vector<8x8xf32>
    %c168 = arith.constant 168 : index
    %c0_56 = arith.constant 0 : index
    %123 = vector.load %arg18[%c168, %c0_56] : memref<368x8xf32, #tpu.memory_space<vmem>>, vector<8x8xf32>
    %124 = arith.addf %120, %123 : vector<8x8xf32>
    %125 = arith.minimumf %121, %123 : vector<8x8xf32>
    %126 = arith.maximumf %122, %123 : vector<8x8xf32>
    %c176 = arith.constant 176 : index
    %c0_57 = arith.constant 0 : index
    %127 = vector.load %arg18[%c176, %c0_57] : memref<368x8xf32, #tpu.memory_space<vmem>>, vector<8x8xf32>
    %128 = arith.addf %124, %127 : vector<8x8xf32>
    %129 = arith.minimumf %125, %127 : vector<8x8xf32>
    %130 = arith.maximumf %126, %127 : vector<8x8xf32>
    %c184 = arith.constant 184 : index
    %c0_58 = arith.constant 0 : index
    %131 = vector.load %arg18[%c184, %c0_58] : memref<368x8xf32, #tpu.memory_space<vmem>>, vector<8x8xf32>
    %132 = arith.addf %128, %131 : vector<8x8xf32>
    %133 = arith.minimumf %129, %131 : vector<8x8xf32>
    %134 = arith.maximumf %130, %131 : vector<8x8xf32>
    %c192 = arith.constant 192 : index
    %c0_59 = arith.constant 0 : index
    %135 = vector.load %arg18[%c192, %c0_59] : memref<368x8xf32, #tpu.memory_space<vmem>>, vector<8x8xf32>
    %136 = arith.addf %132, %135 : vector<8x8xf32>
    %137 = arith.minimumf %133, %135 : vector<8x8xf32>
    %138 = arith.maximumf %134, %135 : vector<8x8xf32>
    %c200 = arith.constant 200 : index
    %c0_60 = arith.constant 0 : index
    %139 = vector.load %arg18[%c200, %c0_60] : memref<368x8xf32, #tpu.memory_space<vmem>>, vector<8x8xf32>
    %140 = arith.addf %136, %139 : vector<8x8xf32>
    %141 = arith.minimumf %137, %139 : vector<8x8xf32>
    %142 = arith.maximumf %138, %139 : vector<8x8xf32>
    %c208 = arith.constant 208 : index
    %c0_61 = arith.constant 0 : index
    %143 = vector.load %arg18[%c208, %c0_61] : memref<368x8xf32, #tpu.memory_space<vmem>>, vector<8x8xf32>
    %144 = arith.addf %140, %143 : vector<8x8xf32>
    %145 = arith.minimumf %141, %143 : vector<8x8xf32>
    %146 = arith.maximumf %142, %143 : vector<8x8xf32>
    %c216 = arith.constant 216 : index
    %c0_62 = arith.constant 0 : index
    %147 = vector.load %arg18[%c216, %c0_62] : memref<368x8xf32, #tpu.memory_space<vmem>>, vector<8x8xf32>
    %148 = arith.addf %144, %147 : vector<8x8xf32>
    %149 = arith.minimumf %145, %147 : vector<8x8xf32>
    %150 = arith.maximumf %146, %147 : vector<8x8xf32>
    %c224 = arith.constant 224 : index
    %c0_63 = arith.constant 0 : index
    %151 = vector.load %arg18[%c224, %c0_63] : memref<368x8xf32, #tpu.memory_space<vmem>>, vector<8x8xf32>
    %152 = arith.addf %148, %151 : vector<8x8xf32>
    %153 = arith.minimumf %149, %151 : vector<8x8xf32>
    %154 = arith.maximumf %150, %151 : vector<8x8xf32>
    %c232 = arith.constant 232 : index
    %c0_64 = arith.constant 0 : index
    %155 = vector.load %arg18[%c232, %c0_64] : memref<368x8xf32, #tpu.memory_space<vmem>>, vector<8x8xf32>
    %156 = arith.addf %152, %155 : vector<8x8xf32>
    %157 = arith.minimumf %153, %155 : vector<8x8xf32>
    %158 = arith.maximumf %154, %155 : vector<8x8xf32>
    %c240 = arith.constant 240 : index
    %c0_65 = arith.constant 0 : index
    %159 = vector.load %arg18[%c240, %c0_65] : memref<368x8xf32, #tpu.memory_space<vmem>>, vector<8x8xf32>
    %160 = arith.addf %156, %159 : vector<8x8xf32>
    %161 = arith.minimumf %157, %159 : vector<8x8xf32>
    %162 = arith.maximumf %158, %159 : vector<8x8xf32>
    %c248 = arith.constant 248 : index
    %c0_66 = arith.constant 0 : index
    %163 = vector.load %arg18[%c248, %c0_66] : memref<368x8xf32, #tpu.memory_space<vmem>>, vector<8x8xf32>
    %164 = arith.addf %160, %163 : vector<8x8xf32>
    %165 = arith.minimumf %161, %163 : vector<8x8xf32>
    %166 = arith.maximumf %162, %163 : vector<8x8xf32>
    %c256 = arith.constant 256 : index
    %c0_67 = arith.constant 0 : index
    %167 = vector.load %arg18[%c256, %c0_67] : memref<368x8xf32, #tpu.memory_space<vmem>>, vector<8x8xf32>
    %168 = arith.addf %164, %167 : vector<8x8xf32>
    %169 = arith.minimumf %165, %167 : vector<8x8xf32>
    %170 = arith.maximumf %166, %167 : vector<8x8xf32>
    %c264 = arith.constant 264 : index
    %c0_68 = arith.constant 0 : index
    %171 = vector.load %arg18[%c264, %c0_68] : memref<368x8xf32, #tpu.memory_space<vmem>>, vector<8x8xf32>
    %172 = arith.addf %168, %171 : vector<8x8xf32>
    %173 = arith.minimumf %169, %171 : vector<8x8xf32>
    %174 = arith.maximumf %170, %171 : vector<8x8xf32>
    %c272 = arith.constant 272 : index
    %c0_69 = arith.constant 0 : index
    %175 = vector.load %arg18[%c272, %c0_69] : memref<368x8xf32, #tpu.memory_space<vmem>>, vector<8x8xf32>
    %176 = arith.addf %172, %175 : vector<8x8xf32>
    %177 = arith.minimumf %173, %175 : vector<8x8xf32>
    %178 = arith.maximumf %174, %175 : vector<8x8xf32>
    %c280 = arith.constant 280 : index
    %c0_70 = arith.constant 0 : index
    %179 = vector.load %arg18[%c280, %c0_70] : memref<368x8xf32, #tpu.memory_space<vmem>>, vector<8x8xf32>
    %180 = arith.addf %176, %179 : vector<8x8xf32>
    %181 = arith.minimumf %177, %179 : vector<8x8xf32>
    %182 = arith.maximumf %178, %179 : vector<8x8xf32>
    %c288 = arith.constant 288 : index
    %c0_71 = arith.constant 0 : index
    %183 = vector.load %arg18[%c288, %c0_71] : memref<368x8xf32, #tpu.memory_space<vmem>>, vector<8x8xf32>
    %184 = arith.addf %180, %183 : vector<8x8xf32>
    %185 = arith.minimumf %181, %183 : vector<8x8xf32>
    %186 = arith.maximumf %182, %183 : vector<8x8xf32>
    %c296 = arith.constant 296 : index
    %c0_72 = arith.constant 0 : index
    %187 = vector.load %arg18[%c296, %c0_72] : memref<368x8xf32, #tpu.memory_space<vmem>>, vector<8x8xf32>
    %188 = arith.addf %184, %187 : vector<8x8xf32>
    %189 = arith.minimumf %185, %187 : vector<8x8xf32>
    %190 = arith.maximumf %186, %187 : vector<8x8xf32>
    %c304 = arith.constant 304 : index
    %c0_73 = arith.constant 0 : index
    %191 = vector.load %arg18[%c304, %c0_73] : memref<368x8xf32, #tpu.memory_space<vmem>>, vector<8x8xf32>
    %192 = arith.addf %188, %191 : vector<8x8xf32>
    %193 = arith.minimumf %189, %191 : vector<8x8xf32>
    %194 = arith.maximumf %190, %191 : vector<8x8xf32>
    %c312 = arith.constant 312 : index
    %c0_74 = arith.constant 0 : index
    %195 = vector.load %arg18[%c312, %c0_74] : memref<368x8xf32, #tpu.memory_space<vmem>>, vector<8x8xf32>
    %196 = arith.addf %192, %195 : vector<8x8xf32>
    %197 = arith.minimumf %193, %195 : vector<8x8xf32>
    %198 = arith.maximumf %194, %195 : vector<8x8xf32>
    %c320 = arith.constant 320 : index
    %c0_75 = arith.constant 0 : index
    %199 = vector.load %arg18[%c320, %c0_75] : memref<368x8xf32, #tpu.memory_space<vmem>>, vector<8x8xf32>
    %200 = arith.addf %196, %199 : vector<8x8xf32>
    %201 = arith.minimumf %197, %199 : vector<8x8xf32>
    %202 = arith.maximumf %198, %199 : vector<8x8xf32>
    %c328 = arith.constant 328 : index
    %c0_76 = arith.constant 0 : index
    %203 = vector.load %arg18[%c328, %c0_76] : memref<368x8xf32, #tpu.memory_space<vmem>>, vector<8x8xf32>
    %204 = arith.addf %200, %203 : vector<8x8xf32>
    %205 = arith.minimumf %201, %203 : vector<8x8xf32>
    %206 = arith.maximumf %202, %203 : vector<8x8xf32>
    %c336 = arith.constant 336 : index
    %c0_77 = arith.constant 0 : index
    %207 = vector.load %arg18[%c336, %c0_77] : memref<368x8xf32, #tpu.memory_space<vmem>>, vector<8x8xf32>
    %208 = arith.addf %204, %207 : vector<8x8xf32>
    %209 = arith.minimumf %205, %207 : vector<8x8xf32>
    %210 = arith.maximumf %206, %207 : vector<8x8xf32>
    %c344 = arith.constant 344 : index
    %c0_78 = arith.constant 0 : index
    %211 = vector.load %arg18[%c344, %c0_78] : memref<368x8xf32, #tpu.memory_space<vmem>>, vector<8x8xf32>
    %212 = arith.addf %208, %211 : vector<8x8xf32>
    %213 = arith.minimumf %209, %211 : vector<8x8xf32>
    %214 = arith.maximumf %210, %211 : vector<8x8xf32>
    %c352 = arith.constant 352 : index
    %c0_79 = arith.constant 0 : index
    %215 = vector.load %arg18[%c352, %c0_79] : memref<368x8xf32, #tpu.memory_space<vmem>>, vector<8x8xf32>
    %216 = arith.addf %212, %215 : vector<8x8xf32>
    %217 = arith.minimumf %213, %215 : vector<8x8xf32>
    %218 = arith.maximumf %214, %215 : vector<8x8xf32>
    %cst_80 = arith.constant dense<0.000000e+00> : vector<8xf32>
    %219 = vector.multi_reduction <add>, %216, %cst_80 [0] : vector<8x8xf32> to vector<8xf32>
    %220 = vector.shape_cast %219 : vector<8xf32> to vector<1x8xf32>
    %cst_81 = arith.constant dense<0x7F800000> : vector<8xf32>
    %221 = vector.multi_reduction <minimumf>, %217, %cst_81 [0] : vector<8x8xf32> to vector<8xf32>
    %222 = vector.shape_cast %221 : vector<8xf32> to vector<1x8xf32>
    %cst_82 = arith.constant dense<0xFF800000> : vector<8xf32>
    %223 = vector.multi_reduction <maximumf>, %218, %cst_82 [0] : vector<8x8xf32> to vector<8xf32>
    %224 = vector.shape_cast %223 : vector<8xf32> to vector<1x8xf32>
    %c360 = arith.constant 360 : index
    %c0_83 = arith.constant 0 : index
    %225 = vector.load %arg18[%c360, %c0_83] : memref<368x8xf32, #tpu.memory_space<vmem>>, vector<5x8xf32>
    %cst_84 = arith.constant dense<0.000000e+00> : vector<8xf32>
    %226 = vector.multi_reduction <add>, %225, %cst_84 [0] : vector<5x8xf32> to vector<8xf32>
    %227 = vector.shape_cast %226 : vector<8xf32> to vector<1x8xf32>
    %228 = arith.addf %220, %227 : vector<1x8xf32>
    %cst_85 = arith.constant dense<0x7F800000> : vector<8xf32>
    %229 = vector.multi_reduction <minimumf>, %225, %cst_85 [0] : vector<5x8xf32> to vector<8xf32>
    %230 = vector.shape_cast %229 : vector<8xf32> to vector<1x8xf32>
    %231 = arith.minimumf %222, %230 : vector<1x8xf32>
    %cst_86 = arith.constant dense<0xFF800000> : vector<8xf32>
    %232 = vector.multi_reduction <maximumf>, %225, %cst_86 [0] : vector<5x8xf32> to vector<8xf32>
    %233 = vector.shape_cast %232 : vector<8xf32> to vector<1x8xf32>
    %234 = arith.maximumf %224, %233 : vector<1x8xf32>
    %cst_87 = arith.constant 0.0027397261 : f32
    %235 = vector.broadcast %cst_87 : f32 to vector<1x8xf32>
    %236 = arith.mulf %228, %235 : vector<1x8xf32>
    %cst_88 = arith.constant 0.000000e+00 : f32
    %237 = vector.broadcast %cst_88 : f32 to vector<8x8xf32>
    %cst_89 = arith.constant 0.000000e+00 : f32
    %238 = vector.broadcast %cst_89 : f32 to vector<8x8xf32>
    %cst_90 = arith.constant 0.000000e+00 : f32
    %239 = vector.broadcast %cst_90 : f32 to vector<8x8xf32>
    %c0_91 = arith.constant 0 : index
    %c0_92 = arith.constant 0 : index
    %240 = vector.load %arg18[%c0_91, %c0_92] : memref<368x8xf32, #tpu.memory_space<vmem>>, vector<8x8xf32>
    %241 = vector.broadcast %236 : vector<1x8xf32> to vector<8x8xf32>
    %242 = arith.subf %240, %241 : vector<8x8xf32>
    %243 = arith.mulf %242, %242 : vector<8x8xf32>
    %244 = arith.addf %237, %243 : vector<8x8xf32>
    %245 = arith.mulf %243, %242 : vector<8x8xf32>
    %246 = arith.addf %238, %245 : vector<8x8xf32>
    %247 = arith.mulf %243, %243 : vector<8x8xf32>
    %248 = arith.addf %239, %247 : vector<8x8xf32>
    %c8_93 = arith.constant 8 : index
    %c0_94 = arith.constant 0 : index
    %249 = vector.load %arg18[%c8_93, %c0_94] : memref<368x8xf32, #tpu.memory_space<vmem>>, vector<8x8xf32>
    %250 = vector.broadcast %236 : vector<1x8xf32> to vector<8x8xf32>
    %251 = arith.subf %249, %250 : vector<8x8xf32>
    %252 = arith.mulf %251, %251 : vector<8x8xf32>
    %253 = arith.addf %244, %252 : vector<8x8xf32>
    %254 = arith.mulf %252, %251 : vector<8x8xf32>
    %255 = arith.addf %246, %254 : vector<8x8xf32>
    %256 = arith.mulf %252, %252 : vector<8x8xf32>
    %257 = arith.addf %248, %256 : vector<8x8xf32>
    %c16_95 = arith.constant 16 : index
    %c0_96 = arith.constant 0 : index
    %258 = vector.load %arg18[%c16_95, %c0_96] : memref<368x8xf32, #tpu.memory_space<vmem>>, vector<8x8xf32>
    %259 = vector.broadcast %236 : vector<1x8xf32> to vector<8x8xf32>
    %260 = arith.subf %258, %259 : vector<8x8xf32>
    %261 = arith.mulf %260, %260 : vector<8x8xf32>
    %262 = arith.addf %253, %261 : vector<8x8xf32>
    %263 = arith.mulf %261, %260 : vector<8x8xf32>
    %264 = arith.addf %255, %263 : vector<8x8xf32>
    %265 = arith.mulf %261, %261 : vector<8x8xf32>
    %266 = arith.addf %257, %265 : vector<8x8xf32>
    %c24_97 = arith.constant 24 : index
    %c0_98 = arith.constant 0 : index
    %267 = vector.load %arg18[%c24_97, %c0_98] : memref<368x8xf32, #tpu.memory_space<vmem>>, vector<8x8xf32>
    %268 = vector.broadcast %236 : vector<1x8xf32> to vector<8x8xf32>
    %269 = arith.subf %267, %268 : vector<8x8xf32>
    %270 = arith.mulf %269, %269 : vector<8x8xf32>
    %271 = arith.addf %262, %270 : vector<8x8xf32>
    %272 = arith.mulf %270, %269 : vector<8x8xf32>
    %273 = arith.addf %264, %272 : vector<8x8xf32>
    %274 = arith.mulf %270, %270 : vector<8x8xf32>
    %275 = arith.addf %266, %274 : vector<8x8xf32>
    %c32_99 = arith.constant 32 : index
    %c0_100 = arith.constant 0 : index
    %276 = vector.load %arg18[%c32_99, %c0_100] : memref<368x8xf32, #tpu.memory_space<vmem>>, vector<8x8xf32>
    %277 = vector.broadcast %236 : vector<1x8xf32> to vector<8x8xf32>
    %278 = arith.subf %276, %277 : vector<8x8xf32>
    %279 = arith.mulf %278, %278 : vector<8x8xf32>
    %280 = arith.addf %271, %279 : vector<8x8xf32>
    %281 = arith.mulf %279, %278 : vector<8x8xf32>
    %282 = arith.addf %273, %281 : vector<8x8xf32>
    %283 = arith.mulf %279, %279 : vector<8x8xf32>
    %284 = arith.addf %275, %283 : vector<8x8xf32>
    %c40_101 = arith.constant 40 : index
    %c0_102 = arith.constant 0 : index
    %285 = vector.load %arg18[%c40_101, %c0_102] : memref<368x8xf32, #tpu.memory_space<vmem>>, vector<8x8xf32>
    %286 = vector.broadcast %236 : vector<1x8xf32> to vector<8x8xf32>
    %287 = arith.subf %285, %286 : vector<8x8xf32>
    %288 = arith.mulf %287, %287 : vector<8x8xf32>
    %289 = arith.addf %280, %288 : vector<8x8xf32>
    %290 = arith.mulf %288, %287 : vector<8x8xf32>
    %291 = arith.addf %282, %290 : vector<8x8xf32>
    %292 = arith.mulf %288, %288 : vector<8x8xf32>
    %293 = arith.addf %284, %292 : vector<8x8xf32>
    %c48_103 = arith.constant 48 : index
    %c0_104 = arith.constant 0 : index
    %294 = vector.load %arg18[%c48_103, %c0_104] : memref<368x8xf32, #tpu.memory_space<vmem>>, vector<8x8xf32>
    %295 = vector.broadcast %236 : vector<1x8xf32> to vector<8x8xf32>
    %296 = arith.subf %294, %295 : vector<8x8xf32>
    %297 = arith.mulf %296, %296 : vector<8x8xf32>
    %298 = arith.addf %289, %297 : vector<8x8xf32>
    %299 = arith.mulf %297, %296 : vector<8x8xf32>
    %300 = arith.addf %291, %299 : vector<8x8xf32>
    %301 = arith.mulf %297, %297 : vector<8x8xf32>
    %302 = arith.addf %293, %301 : vector<8x8xf32>
    %c56_105 = arith.constant 56 : index
    %c0_106 = arith.constant 0 : index
    %303 = vector.load %arg18[%c56_105, %c0_106] : memref<368x8xf32, #tpu.memory_space<vmem>>, vector<8x8xf32>
    %304 = vector.broadcast %236 : vector<1x8xf32> to vector<8x8xf32>
    %305 = arith.subf %303, %304 : vector<8x8xf32>
    %306 = arith.mulf %305, %305 : vector<8x8xf32>
    %307 = arith.addf %298, %306 : vector<8x8xf32>
    %308 = arith.mulf %306, %305 : vector<8x8xf32>
    %309 = arith.addf %300, %308 : vector<8x8xf32>
    %310 = arith.mulf %306, %306 : vector<8x8xf32>
    %311 = arith.addf %302, %310 : vector<8x8xf32>
    %c64_107 = arith.constant 64 : index
    %c0_108 = arith.constant 0 : index
    %312 = vector.load %arg18[%c64_107, %c0_108] : memref<368x8xf32, #tpu.memory_space<vmem>>, vector<8x8xf32>
    %313 = vector.broadcast %236 : vector<1x8xf32> to vector<8x8xf32>
    %314 = arith.subf %312, %313 : vector<8x8xf32>
    %315 = arith.mulf %314, %314 : vector<8x8xf32>
    %316 = arith.addf %307, %315 : vector<8x8xf32>
    %317 = arith.mulf %315, %314 : vector<8x8xf32>
    %318 = arith.addf %309, %317 : vector<8x8xf32>
    %319 = arith.mulf %315, %315 : vector<8x8xf32>
    %320 = arith.addf %311, %319 : vector<8x8xf32>
    %c72_109 = arith.constant 72 : index
    %c0_110 = arith.constant 0 : index
    %321 = vector.load %arg18[%c72_109, %c0_110] : memref<368x8xf32, #tpu.memory_space<vmem>>, vector<8x8xf32>
    %322 = vector.broadcast %236 : vector<1x8xf32> to vector<8x8xf32>
    %323 = arith.subf %321, %322 : vector<8x8xf32>
    %324 = arith.mulf %323, %323 : vector<8x8xf32>
    %325 = arith.addf %316, %324 : vector<8x8xf32>
    %326 = arith.mulf %324, %323 : vector<8x8xf32>
    %327 = arith.addf %318, %326 : vector<8x8xf32>
    %328 = arith.mulf %324, %324 : vector<8x8xf32>
    %329 = arith.addf %320, %328 : vector<8x8xf32>
    %c80_111 = arith.constant 80 : index
    %c0_112 = arith.constant 0 : index
    %330 = vector.load %arg18[%c80_111, %c0_112] : memref<368x8xf32, #tpu.memory_space<vmem>>, vector<8x8xf32>
    %331 = vector.broadcast %236 : vector<1x8xf32> to vector<8x8xf32>
    %332 = arith.subf %330, %331 : vector<8x8xf32>
    %333 = arith.mulf %332, %332 : vector<8x8xf32>
    %334 = arith.addf %325, %333 : vector<8x8xf32>
    %335 = arith.mulf %333, %332 : vector<8x8xf32>
    %336 = arith.addf %327, %335 : vector<8x8xf32>
    %337 = arith.mulf %333, %333 : vector<8x8xf32>
    %338 = arith.addf %329, %337 : vector<8x8xf32>
    %c88_113 = arith.constant 88 : index
    %c0_114 = arith.constant 0 : index
    %339 = vector.load %arg18[%c88_113, %c0_114] : memref<368x8xf32, #tpu.memory_space<vmem>>, vector<8x8xf32>
    %340 = vector.broadcast %236 : vector<1x8xf32> to vector<8x8xf32>
    %341 = arith.subf %339, %340 : vector<8x8xf32>
    %342 = arith.mulf %341, %341 : vector<8x8xf32>
    %343 = arith.addf %334, %342 : vector<8x8xf32>
    %344 = arith.mulf %342, %341 : vector<8x8xf32>
    %345 = arith.addf %336, %344 : vector<8x8xf32>
    %346 = arith.mulf %342, %342 : vector<8x8xf32>
    %347 = arith.addf %338, %346 : vector<8x8xf32>
    %c96_115 = arith.constant 96 : index
    %c0_116 = arith.constant 0 : index
    %348 = vector.load %arg18[%c96_115, %c0_116] : memref<368x8xf32, #tpu.memory_space<vmem>>, vector<8x8xf32>
    %349 = vector.broadcast %236 : vector<1x8xf32> to vector<8x8xf32>
    %350 = arith.subf %348, %349 : vector<8x8xf32>
    %351 = arith.mulf %350, %350 : vector<8x8xf32>
    %352 = arith.addf %343, %351 : vector<8x8xf32>
    %353 = arith.mulf %351, %350 : vector<8x8xf32>
    %354 = arith.addf %345, %353 : vector<8x8xf32>
    %355 = arith.mulf %351, %351 : vector<8x8xf32>
    %356 = arith.addf %347, %355 : vector<8x8xf32>
    %c104_117 = arith.constant 104 : index
    %c0_118 = arith.constant 0 : index
    %357 = vector.load %arg18[%c104_117, %c0_118] : memref<368x8xf32, #tpu.memory_space<vmem>>, vector<8x8xf32>
    %358 = vector.broadcast %236 : vector<1x8xf32> to vector<8x8xf32>
    %359 = arith.subf %357, %358 : vector<8x8xf32>
    %360 = arith.mulf %359, %359 : vector<8x8xf32>
    %361 = arith.addf %352, %360 : vector<8x8xf32>
    %362 = arith.mulf %360, %359 : vector<8x8xf32>
    %363 = arith.addf %354, %362 : vector<8x8xf32>
    %364 = arith.mulf %360, %360 : vector<8x8xf32>
    %365 = arith.addf %356, %364 : vector<8x8xf32>
    %c112_119 = arith.constant 112 : index
    %c0_120 = arith.constant 0 : index
    %366 = vector.load %arg18[%c112_119, %c0_120] : memref<368x8xf32, #tpu.memory_space<vmem>>, vector<8x8xf32>
    %367 = vector.broadcast %236 : vector<1x8xf32> to vector<8x8xf32>
    %368 = arith.subf %366, %367 : vector<8x8xf32>
    %369 = arith.mulf %368, %368 : vector<8x8xf32>
    %370 = arith.addf %361, %369 : vector<8x8xf32>
    %371 = arith.mulf %369, %368 : vector<8x8xf32>
    %372 = arith.addf %363, %371 : vector<8x8xf32>
    %373 = arith.mulf %369, %369 : vector<8x8xf32>
    %374 = arith.addf %365, %373 : vector<8x8xf32>
    %c120_121 = arith.constant 120 : index
    %c0_122 = arith.constant 0 : index
    %375 = vector.load %arg18[%c120_121, %c0_122] : memref<368x8xf32, #tpu.memory_space<vmem>>, vector<8x8xf32>
    %376 = vector.broadcast %236 : vector<1x8xf32> to vector<8x8xf32>
    %377 = arith.subf %375, %376 : vector<8x8xf32>
    %378 = arith.mulf %377, %377 : vector<8x8xf32>
    %379 = arith.addf %370, %378 : vector<8x8xf32>
    %380 = arith.mulf %378, %377 : vector<8x8xf32>
    %381 = arith.addf %372, %380 : vector<8x8xf32>
    %382 = arith.mulf %378, %378 : vector<8x8xf32>
    %383 = arith.addf %374, %382 : vector<8x8xf32>
    %c128_123 = arith.constant 128 : index
    %c0_124 = arith.constant 0 : index
    %384 = vector.load %arg18[%c128_123, %c0_124] : memref<368x8xf32, #tpu.memory_space<vmem>>, vector<8x8xf32>
    %385 = vector.broadcast %236 : vector<1x8xf32> to vector<8x8xf32>
    %386 = arith.subf %384, %385 : vector<8x8xf32>
    %387 = arith.mulf %386, %386 : vector<8x8xf32>
    %388 = arith.addf %379, %387 : vector<8x8xf32>
    %389 = arith.mulf %387, %386 : vector<8x8xf32>
    %390 = arith.addf %381, %389 : vector<8x8xf32>
    %391 = arith.mulf %387, %387 : vector<8x8xf32>
    %392 = arith.addf %383, %391 : vector<8x8xf32>
    %c136_125 = arith.constant 136 : index
    %c0_126 = arith.constant 0 : index
    %393 = vector.load %arg18[%c136_125, %c0_126] : memref<368x8xf32, #tpu.memory_space<vmem>>, vector<8x8xf32>
    %394 = vector.broadcast %236 : vector<1x8xf32> to vector<8x8xf32>
    %395 = arith.subf %393, %394 : vector<8x8xf32>
    %396 = arith.mulf %395, %395 : vector<8x8xf32>
    %397 = arith.addf %388, %396 : vector<8x8xf32>
    %398 = arith.mulf %396, %395 : vector<8x8xf32>
    %399 = arith.addf %390, %398 : vector<8x8xf32>
    %400 = arith.mulf %396, %396 : vector<8x8xf32>
    %401 = arith.addf %392, %400 : vector<8x8xf32>
    %c144_127 = arith.constant 144 : index
    %c0_128 = arith.constant 0 : index
    %402 = vector.load %arg18[%c144_127, %c0_128] : memref<368x8xf32, #tpu.memory_space<vmem>>, vector<8x8xf32>
    %403 = vector.broadcast %236 : vector<1x8xf32> to vector<8x8xf32>
    %404 = arith.subf %402, %403 : vector<8x8xf32>
    %405 = arith.mulf %404, %404 : vector<8x8xf32>
    %406 = arith.addf %397, %405 : vector<8x8xf32>
    %407 = arith.mulf %405, %404 : vector<8x8xf32>
    %408 = arith.addf %399, %407 : vector<8x8xf32>
    %409 = arith.mulf %405, %405 : vector<8x8xf32>
    %410 = arith.addf %401, %409 : vector<8x8xf32>
    %c152_129 = arith.constant 152 : index
    %c0_130 = arith.constant 0 : index
    %411 = vector.load %arg18[%c152_129, %c0_130] : memref<368x8xf32, #tpu.memory_space<vmem>>, vector<8x8xf32>
    %412 = vector.broadcast %236 : vector<1x8xf32> to vector<8x8xf32>
    %413 = arith.subf %411, %412 : vector<8x8xf32>
    %414 = arith.mulf %413, %413 : vector<8x8xf32>
    %415 = arith.addf %406, %414 : vector<8x8xf32>
    %416 = arith.mulf %414, %413 : vector<8x8xf32>
    %417 = arith.addf %408, %416 : vector<8x8xf32>
    %418 = arith.mulf %414, %414 : vector<8x8xf32>
    %419 = arith.addf %410, %418 : vector<8x8xf32>
    %c160_131 = arith.constant 160 : index
    %c0_132 = arith.constant 0 : index
    %420 = vector.load %arg18[%c160_131, %c0_132] : memref<368x8xf32, #tpu.memory_space<vmem>>, vector<8x8xf32>
    %421 = vector.broadcast %236 : vector<1x8xf32> to vector<8x8xf32>
    %422 = arith.subf %420, %421 : vector<8x8xf32>
    %423 = arith.mulf %422, %422 : vector<8x8xf32>
    %424 = arith.addf %415, %423 : vector<8x8xf32>
    %425 = arith.mulf %423, %422 : vector<8x8xf32>
    %426 = arith.addf %417, %425 : vector<8x8xf32>
    %427 = arith.mulf %423, %423 : vector<8x8xf32>
    %428 = arith.addf %419, %427 : vector<8x8xf32>
    %c168_133 = arith.constant 168 : index
    %c0_134 = arith.constant 0 : index
    %429 = vector.load %arg18[%c168_133, %c0_134] : memref<368x8xf32, #tpu.memory_space<vmem>>, vector<8x8xf32>
    %430 = vector.broadcast %236 : vector<1x8xf32> to vector<8x8xf32>
    %431 = arith.subf %429, %430 : vector<8x8xf32>
    %432 = arith.mulf %431, %431 : vector<8x8xf32>
    %433 = arith.addf %424, %432 : vector<8x8xf32>
    %434 = arith.mulf %432, %431 : vector<8x8xf32>
    %435 = arith.addf %426, %434 : vector<8x8xf32>
    %436 = arith.mulf %432, %432 : vector<8x8xf32>
    %437 = arith.addf %428, %436 : vector<8x8xf32>
    %c176_135 = arith.constant 176 : index
    %c0_136 = arith.constant 0 : index
    %438 = vector.load %arg18[%c176_135, %c0_136] : memref<368x8xf32, #tpu.memory_space<vmem>>, vector<8x8xf32>
    %439 = vector.broadcast %236 : vector<1x8xf32> to vector<8x8xf32>
    %440 = arith.subf %438, %439 : vector<8x8xf32>
    %441 = arith.mulf %440, %440 : vector<8x8xf32>
    %442 = arith.addf %433, %441 : vector<8x8xf32>
    %443 = arith.mulf %441, %440 : vector<8x8xf32>
    %444 = arith.addf %435, %443 : vector<8x8xf32>
    %445 = arith.mulf %441, %441 : vector<8x8xf32>
    %446 = arith.addf %437, %445 : vector<8x8xf32>
    %c184_137 = arith.constant 184 : index
    %c0_138 = arith.constant 0 : index
    %447 = vector.load %arg18[%c184_137, %c0_138] : memref<368x8xf32, #tpu.memory_space<vmem>>, vector<8x8xf32>
    %448 = vector.broadcast %236 : vector<1x8xf32> to vector<8x8xf32>
    %449 = arith.subf %447, %448 : vector<8x8xf32>
    %450 = arith.mulf %449, %449 : vector<8x8xf32>
    %451 = arith.addf %442, %450 : vector<8x8xf32>
    %452 = arith.mulf %450, %449 : vector<8x8xf32>
    %453 = arith.addf %444, %452 : vector<8x8xf32>
    %454 = arith.mulf %450, %450 : vector<8x8xf32>
    %455 = arith.addf %446, %454 : vector<8x8xf32>
    %c192_139 = arith.constant 192 : index
    %c0_140 = arith.constant 0 : index
    %456 = vector.load %arg18[%c192_139, %c0_140] : memref<368x8xf32, #tpu.memory_space<vmem>>, vector<8x8xf32>
    %457 = vector.broadcast %236 : vector<1x8xf32> to vector<8x8xf32>
    %458 = arith.subf %456, %457 : vector<8x8xf32>
    %459 = arith.mulf %458, %458 : vector<8x8xf32>
    %460 = arith.addf %451, %459 : vector<8x8xf32>
    %461 = arith.mulf %459, %458 : vector<8x8xf32>
    %462 = arith.addf %453, %461 : vector<8x8xf32>
    %463 = arith.mulf %459, %459 : vector<8x8xf32>
    %464 = arith.addf %455, %463 : vector<8x8xf32>
    %c200_141 = arith.constant 200 : index
    %c0_142 = arith.constant 0 : index
    %465 = vector.load %arg18[%c200_141, %c0_142] : memref<368x8xf32, #tpu.memory_space<vmem>>, vector<8x8xf32>
    %466 = vector.broadcast %236 : vector<1x8xf32> to vector<8x8xf32>
    %467 = arith.subf %465, %466 : vector<8x8xf32>
    %468 = arith.mulf %467, %467 : vector<8x8xf32>
    %469 = arith.addf %460, %468 : vector<8x8xf32>
    %470 = arith.mulf %468, %467 : vector<8x8xf32>
    %471 = arith.addf %462, %470 : vector<8x8xf32>
    %472 = arith.mulf %468, %468 : vector<8x8xf32>
    %473 = arith.addf %464, %472 : vector<8x8xf32>
    %c208_143 = arith.constant 208 : index
    %c0_144 = arith.constant 0 : index
    %474 = vector.load %arg18[%c208_143, %c0_144] : memref<368x8xf32, #tpu.memory_space<vmem>>, vector<8x8xf32>
    %475 = vector.broadcast %236 : vector<1x8xf32> to vector<8x8xf32>
    %476 = arith.subf %474, %475 : vector<8x8xf32>
    %477 = arith.mulf %476, %476 : vector<8x8xf32>
    %478 = arith.addf %469, %477 : vector<8x8xf32>
    %479 = arith.mulf %477, %476 : vector<8x8xf32>
    %480 = arith.addf %471, %479 : vector<8x8xf32>
    %481 = arith.mulf %477, %477 : vector<8x8xf32>
    %482 = arith.addf %473, %481 : vector<8x8xf32>
    %c216_145 = arith.constant 216 : index
    %c0_146 = arith.constant 0 : index
    %483 = vector.load %arg18[%c216_145, %c0_146] : memref<368x8xf32, #tpu.memory_space<vmem>>, vector<8x8xf32>
    %484 = vector.broadcast %236 : vector<1x8xf32> to vector<8x8xf32>
    %485 = arith.subf %483, %484 : vector<8x8xf32>
    %486 = arith.mulf %485, %485 : vector<8x8xf32>
    %487 = arith.addf %478, %486 : vector<8x8xf32>
    %488 = arith.mulf %486, %485 : vector<8x8xf32>
    %489 = arith.addf %480, %488 : vector<8x8xf32>
    %490 = arith.mulf %486, %486 : vector<8x8xf32>
    %491 = arith.addf %482, %490 : vector<8x8xf32>
    %c224_147 = arith.constant 224 : index
    %c0_148 = arith.constant 0 : index
    %492 = vector.load %arg18[%c224_147, %c0_148] : memref<368x8xf32, #tpu.memory_space<vmem>>, vector<8x8xf32>
    %493 = vector.broadcast %236 : vector<1x8xf32> to vector<8x8xf32>
    %494 = arith.subf %492, %493 : vector<8x8xf32>
    %495 = arith.mulf %494, %494 : vector<8x8xf32>
    %496 = arith.addf %487, %495 : vector<8x8xf32>
    %497 = arith.mulf %495, %494 : vector<8x8xf32>
    %498 = arith.addf %489, %497 : vector<8x8xf32>
    %499 = arith.mulf %495, %495 : vector<8x8xf32>
    %500 = arith.addf %491, %499 : vector<8x8xf32>
    %c232_149 = arith.constant 232 : index
    %c0_150 = arith.constant 0 : index
    %501 = vector.load %arg18[%c232_149, %c0_150] : memref<368x8xf32, #tpu.memory_space<vmem>>, vector<8x8xf32>
    %502 = vector.broadcast %236 : vector<1x8xf32> to vector<8x8xf32>
    %503 = arith.subf %501, %502 : vector<8x8xf32>
    %504 = arith.mulf %503, %503 : vector<8x8xf32>
    %505 = arith.addf %496, %504 : vector<8x8xf32>
    %506 = arith.mulf %504, %503 : vector<8x8xf32>
    %507 = arith.addf %498, %506 : vector<8x8xf32>
    %508 = arith.mulf %504, %504 : vector<8x8xf32>
    %509 = arith.addf %500, %508 : vector<8x8xf32>
    %c240_151 = arith.constant 240 : index
    %c0_152 = arith.constant 0 : index
    %510 = vector.load %arg18[%c240_151, %c0_152] : memref<368x8xf32, #tpu.memory_space<vmem>>, vector<8x8xf32>
    %511 = vector.broadcast %236 : vector<1x8xf32> to vector<8x8xf32>
    %512 = arith.subf %510, %511 : vector<8x8xf32>
    %513 = arith.mulf %512, %512 : vector<8x8xf32>
    %514 = arith.addf %505, %513 : vector<8x8xf32>
    %515 = arith.mulf %513, %512 : vector<8x8xf32>
    %516 = arith.addf %507, %515 : vector<8x8xf32>
    %517 = arith.mulf %513, %513 : vector<8x8xf32>
    %518 = arith.addf %509, %517 : vector<8x8xf32>
    %c248_153 = arith.constant 248 : index
    %c0_154 = arith.constant 0 : index
    %519 = vector.load %arg18[%c248_153, %c0_154] : memref<368x8xf32, #tpu.memory_space<vmem>>, vector<8x8xf32>
    %520 = vector.broadcast %236 : vector<1x8xf32> to vector<8x8xf32>
    %521 = arith.subf %519, %520 : vector<8x8xf32>
    %522 = arith.mulf %521, %521 : vector<8x8xf32>
    %523 = arith.addf %514, %522 : vector<8x8xf32>
    %524 = arith.mulf %522, %521 : vector<8x8xf32>
    %525 = arith.addf %516, %524 : vector<8x8xf32>
    %526 = arith.mulf %522, %522 : vector<8x8xf32>
    %527 = arith.addf %518, %526 : vector<8x8xf32>
    %c256_155 = arith.constant 256 : index
    %c0_156 = arith.constant 0 : index
    %528 = vector.load %arg18[%c256_155, %c0_156] : memref<368x8xf32, #tpu.memory_space<vmem>>, vector<8x8xf32>
    %529 = vector.broadcast %236 : vector<1x8xf32> to vector<8x8xf32>
    %530 = arith.subf %528, %529 : vector<8x8xf32>
    %531 = arith.mulf %530, %530 : vector<8x8xf32>
    %532 = arith.addf %523, %531 : vector<8x8xf32>
    %533 = arith.mulf %531, %530 : vector<8x8xf32>
    %534 = arith.addf %525, %533 : vector<8x8xf32>
    %535 = arith.mulf %531, %531 : vector<8x8xf32>
    %536 = arith.addf %527, %535 : vector<8x8xf32>
    %c264_157 = arith.constant 264 : index
    %c0_158 = arith.constant 0 : index
    %537 = vector.load %arg18[%c264_157, %c0_158] : memref<368x8xf32, #tpu.memory_space<vmem>>, vector<8x8xf32>
    %538 = vector.broadcast %236 : vector<1x8xf32> to vector<8x8xf32>
    %539 = arith.subf %537, %538 : vector<8x8xf32>
    %540 = arith.mulf %539, %539 : vector<8x8xf32>
    %541 = arith.addf %532, %540 : vector<8x8xf32>
    %542 = arith.mulf %540, %539 : vector<8x8xf32>
    %543 = arith.addf %534, %542 : vector<8x8xf32>
    %544 = arith.mulf %540, %540 : vector<8x8xf32>
    %545 = arith.addf %536, %544 : vector<8x8xf32>
    %c272_159 = arith.constant 272 : index
    %c0_160 = arith.constant 0 : index
    %546 = vector.load %arg18[%c272_159, %c0_160] : memref<368x8xf32, #tpu.memory_space<vmem>>, vector<8x8xf32>
    %547 = vector.broadcast %236 : vector<1x8xf32> to vector<8x8xf32>
    %548 = arith.subf %546, %547 : vector<8x8xf32>
    %549 = arith.mulf %548, %548 : vector<8x8xf32>
    %550 = arith.addf %541, %549 : vector<8x8xf32>
    %551 = arith.mulf %549, %548 : vector<8x8xf32>
    %552 = arith.addf %543, %551 : vector<8x8xf32>
    %553 = arith.mulf %549, %549 : vector<8x8xf32>
    %554 = arith.addf %545, %553 : vector<8x8xf32>
    %c280_161 = arith.constant 280 : index
    %c0_162 = arith.constant 0 : index
    %555 = vector.load %arg18[%c280_161, %c0_162] : memref<368x8xf32, #tpu.memory_space<vmem>>, vector<8x8xf32>
    %556 = vector.broadcast %236 : vector<1x8xf32> to vector<8x8xf32>
    %557 = arith.subf %555, %556 : vector<8x8xf32>
    %558 = arith.mulf %557, %557 : vector<8x8xf32>
    %559 = arith.addf %550, %558 : vector<8x8xf32>
    %560 = arith.mulf %558, %557 : vector<8x8xf32>
    %561 = arith.addf %552, %560 : vector<8x8xf32>
    %562 = arith.mulf %558, %558 : vector<8x8xf32>
    %563 = arith.addf %554, %562 : vector<8x8xf32>
    %c288_163 = arith.constant 288 : index
    %c0_164 = arith.constant 0 : index
    %564 = vector.load %arg18[%c288_163, %c0_164] : memref<368x8xf32, #tpu.memory_space<vmem>>, vector<8x8xf32>
    %565 = vector.broadcast %236 : vector<1x8xf32> to vector<8x8xf32>
    %566 = arith.subf %564, %565 : vector<8x8xf32>
    %567 = arith.mulf %566, %566 : vector<8x8xf32>
    %568 = arith.addf %559, %567 : vector<8x8xf32>
    %569 = arith.mulf %567, %566 : vector<8x8xf32>
    %570 = arith.addf %561, %569 : vector<8x8xf32>
    %571 = arith.mulf %567, %567 : vector<8x8xf32>
    %572 = arith.addf %563, %571 : vector<8x8xf32>
    %c296_165 = arith.constant 296 : index
    %c0_166 = arith.constant 0 : index
    %573 = vector.load %arg18[%c296_165, %c0_166] : memref<368x8xf32, #tpu.memory_space<vmem>>, vector<8x8xf32>
    %574 = vector.broadcast %236 : vector<1x8xf32> to vector<8x8xf32>
    %575 = arith.subf %573, %574 : vector<8x8xf32>
    %576 = arith.mulf %575, %575 : vector<8x8xf32>
    %577 = arith.addf %568, %576 : vector<8x8xf32>
    %578 = arith.mulf %576, %575 : vector<8x8xf32>
    %579 = arith.addf %570, %578 : vector<8x8xf32>
    %580 = arith.mulf %576, %576 : vector<8x8xf32>
    %581 = arith.addf %572, %580 : vector<8x8xf32>
    %c304_167 = arith.constant 304 : index
    %c0_168 = arith.constant 0 : index
    %582 = vector.load %arg18[%c304_167, %c0_168] : memref<368x8xf32, #tpu.memory_space<vmem>>, vector<8x8xf32>
    %583 = vector.broadcast %236 : vector<1x8xf32> to vector<8x8xf32>
    %584 = arith.subf %582, %583 : vector<8x8xf32>
    %585 = arith.mulf %584, %584 : vector<8x8xf32>
    %586 = arith.addf %577, %585 : vector<8x8xf32>
    %587 = arith.mulf %585, %584 : vector<8x8xf32>
    %588 = arith.addf %579, %587 : vector<8x8xf32>
    %589 = arith.mulf %585, %585 : vector<8x8xf32>
    %590 = arith.addf %581, %589 : vector<8x8xf32>
    %c312_169 = arith.constant 312 : index
    %c0_170 = arith.constant 0 : index
    %591 = vector.load %arg18[%c312_169, %c0_170] : memref<368x8xf32, #tpu.memory_space<vmem>>, vector<8x8xf32>
    %592 = vector.broadcast %236 : vector<1x8xf32> to vector<8x8xf32>
    %593 = arith.subf %591, %592 : vector<8x8xf32>
    %594 = arith.mulf %593, %593 : vector<8x8xf32>
    %595 = arith.addf %586, %594 : vector<8x8xf32>
    %596 = arith.mulf %594, %593 : vector<8x8xf32>
    %597 = arith.addf %588, %596 : vector<8x8xf32>
    %598 = arith.mulf %594, %594 : vector<8x8xf32>
    %599 = arith.addf %590, %598 : vector<8x8xf32>
    %c320_171 = arith.constant 320 : index
    %c0_172 = arith.constant 0 : index
    %600 = vector.load %arg18[%c320_171, %c0_172] : memref<368x8xf32, #tpu.memory_space<vmem>>, vector<8x8xf32>
    %601 = vector.broadcast %236 : vector<1x8xf32> to vector<8x8xf32>
    %602 = arith.subf %600, %601 : vector<8x8xf32>
    %603 = arith.mulf %602, %602 : vector<8x8xf32>
    %604 = arith.addf %595, %603 : vector<8x8xf32>
    %605 = arith.mulf %603, %602 : vector<8x8xf32>
    %606 = arith.addf %597, %605 : vector<8x8xf32>
    %607 = arith.mulf %603, %603 : vector<8x8xf32>
    %608 = arith.addf %599, %607 : vector<8x8xf32>
    %c328_173 = arith.constant 328 : index
    %c0_174 = arith.constant 0 : index
    %609 = vector.load %arg18[%c328_173, %c0_174] : memref<368x8xf32, #tpu.memory_space<vmem>>, vector<8x8xf32>
    %610 = vector.broadcast %236 : vector<1x8xf32> to vector<8x8xf32>
    %611 = arith.subf %609, %610 : vector<8x8xf32>
    %612 = arith.mulf %611, %611 : vector<8x8xf32>
    %613 = arith.addf %604, %612 : vector<8x8xf32>
    %614 = arith.mulf %612, %611 : vector<8x8xf32>
    %615 = arith.addf %606, %614 : vector<8x8xf32>
    %616 = arith.mulf %612, %612 : vector<8x8xf32>
    %617 = arith.addf %608, %616 : vector<8x8xf32>
    %c336_175 = arith.constant 336 : index
    %c0_176 = arith.constant 0 : index
    %618 = vector.load %arg18[%c336_175, %c0_176] : memref<368x8xf32, #tpu.memory_space<vmem>>, vector<8x8xf32>
    %619 = vector.broadcast %236 : vector<1x8xf32> to vector<8x8xf32>
    %620 = arith.subf %618, %619 : vector<8x8xf32>
    %621 = arith.mulf %620, %620 : vector<8x8xf32>
    %622 = arith.addf %613, %621 : vector<8x8xf32>
    %623 = arith.mulf %621, %620 : vector<8x8xf32>
    %624 = arith.addf %615, %623 : vector<8x8xf32>
    %625 = arith.mulf %621, %621 : vector<8x8xf32>
    %626 = arith.addf %617, %625 : vector<8x8xf32>
    %c344_177 = arith.constant 344 : index
    %c0_178 = arith.constant 0 : index
    %627 = vector.load %arg18[%c344_177, %c0_178] : memref<368x8xf32, #tpu.memory_space<vmem>>, vector<8x8xf32>
    %628 = vector.broadcast %236 : vector<1x8xf32> to vector<8x8xf32>
    %629 = arith.subf %627, %628 : vector<8x8xf32>
    %630 = arith.mulf %629, %629 : vector<8x8xf32>
    %631 = arith.addf %622, %630 : vector<8x8xf32>
    %632 = arith.mulf %630, %629 : vector<8x8xf32>
    %633 = arith.addf %624, %632 : vector<8x8xf32>
    %634 = arith.mulf %630, %630 : vector<8x8xf32>
    %635 = arith.addf %626, %634 : vector<8x8xf32>
    %c352_179 = arith.constant 352 : index
    %c0_180 = arith.constant 0 : index
    %636 = vector.load %arg18[%c352_179, %c0_180] : memref<368x8xf32, #tpu.memory_space<vmem>>, vector<8x8xf32>
    %637 = vector.broadcast %236 : vector<1x8xf32> to vector<8x8xf32>
    %638 = arith.subf %636, %637 : vector<8x8xf32>
    %639 = arith.mulf %638, %638 : vector<8x8xf32>
    %640 = arith.addf %631, %639 : vector<8x8xf32>
    %641 = arith.mulf %639, %638 : vector<8x8xf32>
    %642 = arith.addf %633, %641 : vector<8x8xf32>
    %643 = arith.mulf %639, %639 : vector<8x8xf32>
    %644 = arith.addf %635, %643 : vector<8x8xf32>
    %cst_181 = arith.constant dense<0.000000e+00> : vector<8xf32>
    %645 = vector.multi_reduction <add>, %640, %cst_181 [0] : vector<8x8xf32> to vector<8xf32>
    %646 = vector.shape_cast %645 : vector<8xf32> to vector<1x8xf32>
    %cst_182 = arith.constant dense<0.000000e+00> : vector<8xf32>
    %647 = vector.multi_reduction <add>, %642, %cst_182 [0] : vector<8x8xf32> to vector<8xf32>
    %648 = vector.shape_cast %647 : vector<8xf32> to vector<1x8xf32>
    %cst_183 = arith.constant dense<0.000000e+00> : vector<8xf32>
    %649 = vector.multi_reduction <add>, %644, %cst_183 [0] : vector<8x8xf32> to vector<8xf32>
    %650 = vector.shape_cast %649 : vector<8xf32> to vector<1x8xf32>
    %c360_184 = arith.constant 360 : index
    %c0_185 = arith.constant 0 : index
    %651 = vector.load %arg18[%c360_184, %c0_185] : memref<368x8xf32, #tpu.memory_space<vmem>>, vector<5x8xf32>
    %652 = vector.broadcast %236 : vector<1x8xf32> to vector<5x8xf32>
    %653 = arith.subf %651, %652 : vector<5x8xf32>
    %654 = arith.mulf %653, %653 : vector<5x8xf32>
    %cst_186 = arith.constant dense<0.000000e+00> : vector<8xf32>
    %655 = vector.multi_reduction <add>, %654, %cst_186 [0] : vector<5x8xf32> to vector<8xf32>
    %656 = vector.shape_cast %655 : vector<8xf32> to vector<1x8xf32>
    %657 = arith.addf %646, %656 : vector<1x8xf32>
    %658 = arith.mulf %654, %653 : vector<5x8xf32>
    %cst_187 = arith.constant dense<0.000000e+00> : vector<8xf32>
    %659 = vector.multi_reduction <add>, %658, %cst_187 [0] : vector<5x8xf32> to vector<8xf32>
    %660 = vector.shape_cast %659 : vector<8xf32> to vector<1x8xf32>
    %661 = arith.addf %648, %660 : vector<1x8xf32>
    %662 = arith.mulf %654, %654 : vector<5x8xf32>
    %cst_188 = arith.constant dense<0.000000e+00> : vector<8xf32>
    %663 = vector.multi_reduction <add>, %662, %cst_188 [0] : vector<5x8xf32> to vector<8xf32>
    %664 = vector.shape_cast %663 : vector<8xf32> to vector<1x8xf32>
    %665 = arith.addf %650, %664 : vector<1x8xf32>
    %cst_189 = arith.constant 0.00274725282 : f32
    %666 = vector.broadcast %cst_189 : f32 to vector<1x8xf32>
    %667 = arith.mulf %657, %666 : vector<1x8xf32>
    %668 = math.sqrt %667 : vector<1x8xf32>
    %cst_190 = arith.constant 0.0027397261 : f32
    %669 = vector.broadcast %cst_190 : f32 to vector<1x8xf32>
    %670 = arith.mulf %661, %669 : vector<1x8xf32>
    %cst_191 = arith.constant 0.0027397261 : f32
    %671 = vector.broadcast %cst_191 : f32 to vector<1x8xf32>
    %672 = arith.mulf %665, %671 : vector<1x8xf32>
    %673 = arith.mulf %668, %667 : vector<1x8xf32>
    %cst_192 = arith.constant 9.99999993E-9 : f32
    %674 = vector.broadcast %cst_192 : f32 to vector<1x8xf32>
    %675 = arith.addf %673, %674 : vector<1x8xf32>
    %676 = arith.divf %670, %675 : vector<1x8xf32>
    %677 = arith.mulf %667, %667 : vector<1x8xf32>
    %cst_193 = arith.constant 9.99999993E-9 : f32
    %678 = vector.broadcast %cst_193 : f32 to vector<1x8xf32>
    %679 = arith.addf %677, %678 : vector<1x8xf32>
    %680 = arith.divf %672, %679 : vector<1x8xf32>
    %c0_194 = arith.constant 0 : index
    %c0_195 = arith.constant 0 : index
    %681 = vector.load %arg19[%c0_194, %c0_195] : memref<6x8xf32, #tpu.memory_space<vmem>>, vector<1x8xf32>
    tpu.vector_store %arg19[%c0_194, %c0_195], %236 {strides = array<i32>} : memref<6x8xf32, #tpu.memory_space<vmem>>, vector<1x8xf32>,
    %c1 = arith.constant 1 : index
    %c0_196 = arith.constant 0 : index
    %682 = vector.load %arg19[%c1, %c0_196] : memref<6x8xf32, #tpu.memory_space<vmem>>, vector<1x8xf32>
    tpu.vector_store %arg19[%c1, %c0_196], %668 {strides = array<i32>} : memref<6x8xf32, #tpu.memory_space<vmem>>, vector<1x8xf32>,
    %c2 = arith.constant 2 : index
    %c0_197 = arith.constant 0 : index
    %683 = vector.load %arg19[%c2, %c0_197] : memref<6x8xf32, #tpu.memory_space<vmem>>, vector<1x8xf32>
    tpu.vector_store %arg19[%c2, %c0_197], %231 {strides = array<i32>} : memref<6x8xf32, #tpu.memory_space<vmem>>, vector<1x8xf32>,
    %c3 = arith.constant 3 : index
    %c0_198 = arith.constant 0 : index
    %684 = vector.load %arg19[%c3, %c0_198] : memref<6x8xf32, #tpu.memory_space<vmem>>, vector<1x8xf32>
    tpu.vector_store %arg19[%c3, %c0_198], %234 {strides = array<i32>} : memref<6x8xf32, #tpu.memory_space<vmem>>, vector<1x8xf32>,
    %c4 = arith.constant 4 : index
    %c0_199 = arith.constant 0 : index
    %685 = vector.load %arg19[%c4, %c0_199] : memref<6x8xf32, #tpu.memory_space<vmem>>, vector<1x8xf32>
    tpu.vector_store %arg19[%c4, %c0_199], %676 {strides = array<i32>} : memref<6x8xf32, #tpu.memory_space<vmem>>, vector<1x8xf32>,
    %c5 = arith.constant 5 : index
    %c0_200 = arith.constant 0 : index
    %686 = vector.load %arg19[%c5, %c0_200] : memref<6x8xf32, #tpu.memory_space<vmem>>, vector<1x8xf32>
    tpu.vector_store %arg19[%c5, %c0_200], %680 {strides = array<i32>} : memref<6x8xf32, #tpu.memory_space<vmem>>, vector<1x8xf32>,
    %c0_201 = arith.constant 0 : index
    %c0_202 = arith.constant 0 : index
    %687 = vector.load %arg8[%c0_201, %c0_202] : memref<32x6xf32, #tpu.memory_space<vmem>>, vector<32x6xf32>
    %688 = vector.extract_strided_slice %687 {offsets = [0, 0], sizes = [32, 1], strides = [1, 1]} : vector<32x6xf32> to vector<32x1xf32>
    %c0_203 = arith.constant 0 : index
    %c0_204 = arith.constant 0 : index
    %689 = vector.load %arg19[%c0_203, %c0_204] : memref<6x8xf32, #tpu.memory_space<vmem>>, vector<1x8xf32>
    %690 = vector.broadcast %688 : vector<32x1xf32> to vector<32x8xf32>
    %691 = vector.broadcast %689 : vector<1x8xf32> to vector<32x8xf32>
    %692 = arith.mulf %690, %691 : vector<32x8xf32>
    %693 = vector.extract_strided_slice %687 {offsets = [0, 1], sizes = [32, 1], strides = [1, 1]} : vector<32x6xf32> to vector<32x1xf32>
    %c1_205 = arith.constant 1 : index
    %c0_206 = arith.constant 0 : index
    %694 = vector.load %arg19[%c1_205, %c0_206] : memref<6x8xf32, #tpu.memory_space<vmem>>, vector<1x8xf32>
    %695 = vector.broadcast %693 : vector<32x1xf32> to vector<32x8xf32>
    %696 = vector.broadcast %694 : vector<1x8xf32> to vector<32x8xf32>
    %697 = arith.mulf %695, %696 : vector<32x8xf32>
    %698 = arith.addf %692, %697 : vector<32x8xf32>
    %699 = vector.extract_strided_slice %687 {offsets = [0, 2], sizes = [32, 1], strides = [1, 1]} : vector<32x6xf32> to vector<32x1xf32>
    %c2_207 = arith.constant 2 : index
    %c0_208 = arith.constant 0 : index
    %700 = vector.load %arg19[%c2_207, %c0_208] : memref<6x8xf32, #tpu.memory_space<vmem>>, vector<1x8xf32>
    %701 = vector.broadcast %699 : vector<32x1xf32> to vector<32x8xf32>
    %702 = vector.broadcast %700 : vector<1x8xf32> to vector<32x8xf32>
    %703 = arith.mulf %701, %702 : vector<32x8xf32>
    %704 = arith.addf %698, %703 : vector<32x8xf32>
    %705 = vector.extract_strided_slice %687 {offsets = [0, 3], sizes = [32, 1], strides = [1, 1]} : vector<32x6xf32> to vector<32x1xf32>
    %c3_209 = arith.constant 3 : index
    %c0_210 = arith.constant 0 : index
    %706 = vector.load %arg19[%c3_209, %c0_210] : memref<6x8xf32, #tpu.memory_space<vmem>>, vector<1x8xf32>
    %707 = vector.broadcast %705 : vector<32x1xf32> to vector<32x8xf32>
    %708 = vector.broadcast %706 : vector<1x8xf32> to vector<32x8xf32>
    %709 = arith.mulf %707, %708 : vector<32x8xf32>
    %710 = arith.addf %704, %709 : vector<32x8xf32>
    %711 = vector.extract_strided_slice %687 {offsets = [0, 4], sizes = [32, 1], strides = [1, 1]} : vector<32x6xf32> to vector<32x1xf32>
    %c4_211 = arith.constant 4 : index
    %c0_212 = arith.constant 0 : index
    %712 = vector.load %arg19[%c4_211, %c0_212] : memref<6x8xf32, #tpu.memory_space<vmem>>, vector<1x8xf32>
    %713 = vector.broadcast %711 : vector<32x1xf32> to vector<32x8xf32>
    %714 = vector.broadcast %712 : vector<1x8xf32> to vector<32x8xf32>
    %715 = arith.mulf %713, %714 : vector<32x8xf32>
    %716 = arith.addf %710, %715 : vector<32x8xf32>
    %717 = vector.extract_strided_slice %687 {offsets = [0, 5], sizes = [32, 1], strides = [1, 1]} : vector<32x6xf32> to vector<32x1xf32>
    %c5_213 = arith.constant 5 : index
    %c0_214 = arith.constant 0 : index
    %718 = vector.load %arg19[%c5_213, %c0_214] : memref<6x8xf32, #tpu.memory_space<vmem>>, vector<1x8xf32>
    %719 = vector.broadcast %717 : vector<32x1xf32> to vector<32x8xf32>
    %720 = vector.broadcast %718 : vector<1x8xf32> to vector<32x8xf32>
    %721 = arith.mulf %719, %720 : vector<32x8xf32>
    %722 = arith.addf %716, %721 : vector<32x8xf32>
    %c0_215 = arith.constant 0 : index
    %c0_216 = arith.constant 0 : index
    %723 = vector.load %arg9[%c0_215, %c0_216] : memref<32x1xf32, #tpu.memory_space<vmem>>, vector<32x1xf32>
    %724 = vector.broadcast %723 : vector<32x1xf32> to vector<32x8xf32>
    %725 = arith.addf %722, %724 : vector<32x8xf32>
    %c0_217 = arith.constant 0 : index
    %c0_218 = arith.constant 0 : index
    %726 = vector.load %arg10[%c0_217, %c0_218] : memref<64x128xf32, #tpu.memory_space<vmem>>, vector<64x128xf32>
    %cst_219 = arith.constant dense<0.000000e+00> : vector<64x8xf32>
    %727 = tpu.matmul %726, %35, %cst_219 {dimension_numbers = #tpu.dot_dimension_numbers<[1], [0], [0], [1], [0, 0, 1, 1], [], []>} : vector<64x128xf32>, vector<128x8xf32>, vector<64x8xf32> -> vector<64x8xf32>
    %c0_220 = arith.constant 0 : index
    %c0_221 = arith.constant 0 : index
    %728 = vector.load %arg11[%c0_220, %c0_221] : memref<64x32xf32, #tpu.memory_space<vmem>>, vector<64x32xf32>
    %cst_222 = arith.constant dense<0.000000e+00> : vector<64x8xf32>
    %729 = tpu.matmul %728, %725, %cst_222 {dimension_numbers = #tpu.dot_dimension_numbers<[1], [0], [0], [1], [0, 0, 1, 1], [], []>} : vector<64x32xf32>, vector<32x8xf32>, vector<64x8xf32> -> vector<64x8xf32>
    %730 = arith.addf %727, %729 : vector<64x8xf32>
    %c0_223 = arith.constant 0 : index
    %c0_224 = arith.constant 0 : index
    %731 = vector.load %arg12[%c0_223, %c0_224] : memref<64x1xf32, #tpu.memory_space<vmem>>, vector<64x1xf32>
    %732 = vector.broadcast %731 : vector<64x1xf32> to vector<64x8xf32>
    %733 = arith.addf %730, %732 : vector<64x8xf32>
    %cst_225 = arith.constant 0.000000e+00 : f32
    %734 = vector.broadcast %cst_225 : f32 to vector<64x8xf32>
    %735 = arith.maximumf %733, %734 : vector<64x8xf32>
    %c0_226 = arith.constant 0 : index
    %c0_227 = arith.constant 0 : index
    %736 = vector.load %arg13[%c0_226, %c0_227] : memref<32x64xf32, #tpu.memory_space<vmem>>, vector<32x64xf32>
    %cst_228 = arith.constant dense<0.000000e+00> : vector<32x8xf32>
    %737 = tpu.matmul %736, %735, %cst_228 {dimension_numbers = #tpu.dot_dimension_numbers<[1], [0], [0], [1], [0, 0, 1, 1], [], []>} : vector<32x64xf32>, vector<64x8xf32>, vector<32x8xf32> -> vector<32x8xf32>
    %c0_229 = arith.constant 0 : index
    %c0_230 = arith.constant 0 : index
    %738 = vector.load %arg14[%c0_229, %c0_230] : memref<32x1xf32, #tpu.memory_space<vmem>>, vector<32x1xf32>
    %739 = vector.broadcast %738 : vector<32x1xf32> to vector<32x8xf32>
    %740 = arith.addf %737, %739 : vector<32x8xf32>
    %cst_231 = arith.constant 0.000000e+00 : f32
    %741 = vector.broadcast %cst_231 : f32 to vector<32x8xf32>
    %742 = arith.maximumf %740, %741 : vector<32x8xf32>
    %c0_232 = arith.constant 0 : index
    %c0_233 = arith.constant 0 : index
    %743 = vector.load %arg15[%c0_232, %c0_233] : memref<32x1xf32, #tpu.memory_space<vmem>>, vector<32x1xf32>
    %744 = vector.broadcast %743 : vector<32x1xf32> to vector<32x8xf32>
    %745 = arith.mulf %744, %742 : vector<32x8xf32>
    %cst_234 = arith.constant dense<0.000000e+00> : vector<8xf32>
    %746 = vector.multi_reduction <add>, %745, %cst_234 [0] : vector<32x8xf32> to vector<8xf32>
    %747 = vector.shape_cast %746 : vector<8xf32> to vector<1x8xf32>
    %c0_235 = arith.constant 0 : index
    %c0_236 = arith.constant 0 : index
    %748 = vector.load %arg16[%c0_235, %c0_236] : memref<1x1xf32, #tpu.memory_space<vmem>>, vector<1x1xf32>
    %749 = vector.broadcast %748 : vector<1x1xf32> to vector<1x8xf32>
    %750 = arith.addf %747, %749 : vector<1x8xf32>
    %751 = arith.negf %750 : vector<1x8xf32>
    %752 = math.exp %751 : vector<1x8xf32>
    %cst_237 = arith.constant 1.000000e+00 : f32
    %753 = vector.broadcast %cst_237 : f32 to vector<1x8xf32>
    %754 = arith.addf %753, %752 : vector<1x8xf32>
    %755 = arith.divf %753, %754 : vector<1x8xf32>
    %cst_238 = arith.constant 4.000000e+00 : f32
    %756 = vector.broadcast %cst_238 : f32 to vector<1x8xf32>
    %757 = arith.mulf %755, %756 : vector<1x8xf32>
    %cst_239 = arith.constant 6.000000e+00 : f32
    %758 = vector.broadcast %cst_239 : f32 to vector<1x8xf32>
    %759 = arith.addf %757, %758 : vector<1x8xf32>
    %c0_240 = arith.constant 0 : index
    %c0_241 = arith.constant 0 : index
    %760 = vector.load %arg17[%c0_240, %c0_241] : memref<1x8xf32, #tpu.memory_space<vmem>>, vector<1x8xf32>
    tpu.vector_store %arg17[%c0_240, %c0_241], %759 {strides = array<i32>} : memref<1x8xf32, #tpu.memory_space<vmem>>, vector<1x8xf32>,
    return
  }
  func.func @transform_0(%arg0: i32) -> (i32, i32) {
    %c0_i32 = arith.constant 0 : i32
    %c0_i32_0 = arith.constant 0 : i32
    return %arg0, %c0_i32 : i32, i32
  }
  func.func @transform_1(%arg0: i32) -> (i32, i32) {
    %c0_i32 = arith.constant 0 : i32
    %c0_i32_0 = arith.constant 0 : i32
    %c0_i32_1 = arith.constant 0 : i32
    return %c0_i32, %c0_i32_0 : i32, i32
  }
  func.func @transform_2(%arg0: i32) -> (i32, i32) {
    %c0_i32 = arith.constant 0 : i32
    %c0_i32_0 = arith.constant 0 : i32
    %c0_i32_1 = arith.constant 0 : i32
    return %c0_i32, %c0_i32_0 : i32, i32
  }
  func.func @transform_3(%arg0: i32) -> (i32, i32) {
    %c0_i32 = arith.constant 0 : i32
    %c0_i32_0 = arith.constant 0 : i32
    %c0_i32_1 = arith.constant 0 : i32
    return %c0_i32, %c0_i32_0 : i32, i32
  }
  func.func @transform_4(%arg0: i32) -> (i32, i32) {
    %c0_i32 = arith.constant 0 : i32
    %c0_i32_0 = arith.constant 0 : i32
    %c0_i32_1 = arith.constant 0 : i32
    return %c0_i32, %c0_i32_0 : i32, i32
  }
  func.func @transform_5(%arg0: i32) -> (i32, i32) {
    %c0_i32 = arith.constant 0 : i32
    %c0_i32_0 = arith.constant 0 : i32
    %c0_i32_1 = arith.constant 0 : i32
    return %c0_i32, %c0_i32_0 : i32, i32
  }
  func.func @transform_6(%arg0: i32) -> (i32, i32) {
    %c0_i32 = arith.constant 0 : i32
    %c0_i32_0 = arith.constant 0 : i32
    %c0_i32_1 = arith.constant 0 : i32
    return %c0_i32, %c0_i32_0 : i32, i32
  }
  func.func @transform_7(%arg0: i32) -> (i32, i32) {
    %c0_i32 = arith.constant 0 : i32
    %c0_i32_0 = arith.constant 0 : i32
    %c0_i32_1 = arith.constant 0 : i32
    return %c0_i32, %c0_i32_0 : i32, i32
  }
  func.func @transform_8(%arg0: i32) -> (i32, i32) {
    %c0_i32 = arith.constant 0 : i32
    %c0_i32_0 = arith.constant 0 : i32
    %c0_i32_1 = arith.constant 0 : i32
    return %c0_i32, %c0_i32_0 : i32, i32
  }
  func.func @transform_9(%arg0: i32) -> (i32, i32) {
    %c0_i32 = arith.constant 0 : i32
    %c0_i32_0 = arith.constant 0 : i32
    %c0_i32_1 = arith.constant 0 : i32
    return %c0_i32, %c0_i32_0 : i32, i32
  }
  func.func @transform_10(%arg0: i32) -> (i32, i32) {
    %c0_i32 = arith.constant 0 : i32
    %c0_i32_0 = arith.constant 0 : i32
    %c0_i32_1 = arith.constant 0 : i32
    return %c0_i32, %c0_i32_0 : i32, i32
  }
  func.func @transform_11(%arg0: i32) -> (i32, i32) {
    %c0_i32 = arith.constant 0 : i32
    %c0_i32_0 = arith.constant 0 : i32
    %c0_i32_1 = arith.constant 0 : i32
    return %c0_i32, %c0_i32_0 : i32, i32
  }
  func.func @transform_12(%arg0: i32) -> (i32, i32) {
    %c0_i32 = arith.constant 0 : i32
    %c0_i32_0 = arith.constant 0 : i32
    %c0_i32_1 = arith.constant 0 : i32
    return %c0_i32, %c0_i32_0 : i32, i32
  }
  func.func @transform_13(%arg0: i32) -> (i32, i32) {
    %c0_i32 = arith.constant 0 : i32
    %c0_i32_0 = arith.constant 0 : i32
    %c0_i32_1 = arith.constant 0 : i32
    return %c0_i32, %c0_i32_0 : i32, i32
  }
  func.func @transform_14(%arg0: i32) -> (i32, i32) {
    %c0_i32 = arith.constant 0 : i32
    %c0_i32_0 = arith.constant 0 : i32
    %c0_i32_1 = arith.constant 0 : i32
    return %c0_i32, %c0_i32_0 : i32, i32
  }
  func.func @transform_15(%arg0: i32) -> (i32, i32) {
    %c0_i32 = arith.constant 0 : i32
    %c0_i32_0 = arith.constant 0 : i32
    %c0_i32_1 = arith.constant 0 : i32
    return %c0_i32, %c0_i32_0 : i32, i32
  }
  func.func @transform_16(%arg0: i32) -> (i32, i32) {
    %c0_i32 = arith.constant 0 : i32
    %c0_i32_0 = arith.constant 0 : i32
    return %c0_i32, %arg0 : i32, i32
  }
}

</mosaic_0001>

<llo_original>
// kernel: tpu_custom_call.1
$region0: #{tpu_custom_call.1}
  #allocation0 [shape = 'u32[]', space=smem, size = 0x4, offset = 0x4, fixed_abs, tag = 'smem constant byte address 0x4 - core index']
  #allocation1 [shape = 'u32[144,128]{1,0:T(1,128)}', space=vmem, size = 0x12000, scoped, tag = 'internal scratch']
  #allocation2 [shape = 'f32[368,8]{1,0:T(8,128)}', space=vmem, size = 0x2e000, scoped, tag = 'scratch operand']
  #allocation3 [shape = 'f32[6,8]{1,0:T(8,128)}', space=vmem, size = 0x1000, scoped, tag = 'scratch operand']
  #allocation4 [shape = 'f32[1,1]{1,0:T(1,128)S(1)}', space=vmem, size = 0x200, scoped, tag = 'scoped memory for tpu_custom_call.1']
  %s0 = inlined_call_operand.vmem [shape: f32[8,365], index: 0, kind: input, shape index: {}]
  %s1 = inlined_call_operand.vmem [shape: bf16[512,368], index: 1, kind: input, shape index: {}]
  %s2 = inlined_call_operand.vmem [shape: f32[512,1], index: 2, kind: input, shape index: {}]
  %s3 = inlined_call_operand.vmem [shape: bf16[256,512], index: 3, kind: input, shape index: {}]
  %s4 = inlined_call_operand.vmem [shape: f32[256,1], index: 4, kind: input, shape index: {}]
  %s5 = inlined_call_operand.vmem [shape: bf16[128,256], index: 5, kind: input, shape index: {}]
  %s6 = inlined_call_operand.vmem [shape: f32[128,1], index: 6, kind: input, shape index: {}]
  %s7 = inlined_call_operand.vmem [shape: f32[32,6], index: 7, kind: input, shape index: {}]
  %s8 = inlined_call_operand.vmem [shape: f32[32,1], index: 8, kind: input, shape index: {}]
  %s9 = inlined_call_operand.vmem [shape: f32[64,128], index: 9, kind: input, shape index: {}]
  %s10 = inlined_call_operand.vmem [shape: f32[64,32], index: 10, kind: input, shape index: {}]
  %s11 = inlined_call_operand.vmem [shape: f32[64,1], index: 11, kind: input, shape index: {}]
  %s12 = inlined_call_operand.vmem [shape: f32[32,64], index: 12, kind: input, shape index: {}]
  %s13 = inlined_call_operand.vmem [shape: f32[32,1], index: 13, kind: input, shape index: {}]
  %s14 = inlined_call_operand.vmem [shape: f32[32,1], index: 14, kind: input, shape index: {}]
  %s15 = inlined_call_operand.<no memory space> [shape: f32[1,1], index: 15, kind: input, shape index: {}]
  %s16 = inlined_call_operand.hbm [shape: f32[1,8], index: 16, kind: output, shape index: {}]
  %s17 = sld [smem:[#allocation0]]
  $region74: #{tpu_custom_call.1} parent=0
    _
  %s19 = ssub.s32 1, %s17
  %s20 = scalar_select 0, %s19, %s17
  %v21 = vstv %s15
  %22 = vst [vmem:[#allocation4] sm:$0x1] %v21
  $region1: #{tpu_custom_call.1} parent=0
    #allocation5 [shape = 'u8[512]{0}', space=vmem, size = 0x400, scoped, tag = 'output window, operand 0, single buffered']
    #allocation6 [shape = 's32[1]{0}', space=sflag, size = 0x4, scoped, tag = 'scoped memory for tpu_custom_call.1']
    %23 = vsyncpa [#allocation6], 0
    // Predicated region
    $region2: #{tpu_custom_call.1} parent=1 // pred_check
      _
    $region3: #{tpu_custom_call.1} parent=1 // pred_check_branch
      %25 = sbr.rel (0) target = $region5
    $region4: #{tpu_custom_call.1} parent=1 // pred_region
      _
    $region5: #{tpu_custom_call.1} parent=1 // pred_fallthru
      _
    // Predicated region
    $region6: #{tpu_custom_call.1} parent=1 // pred_check
      _
    $region7: #{tpu_custom_call.1} parent=1 // pred_check_branch
      %27 = sbr.rel (0) target = $region9
    $region8: #{tpu_custom_call.1} parent=1 // pred_region
      _
    $region9: #{tpu_custom_call.1} parent=1 // pred_fallthru
      _
    // Predicated region
    $region10: #{tpu_custom_call.1} parent=1 // pred_check
      _
    $region11: #{tpu_custom_call.1} parent=1 // pred_check_branch
      %29 = sbr.rel (0) target = $region13
    $region12: #{tpu_custom_call.1} parent=1 // pred_region
      _
    $region13: #{tpu_custom_call.1} parent=1 // pred_fallthru
      _
    // Predicated region
    $region14: #{tpu_custom_call.1} parent=1 // pred_check
      _
    $region15: #{tpu_custom_call.1} parent=1 // pred_check_branch
      %31 = sbr.rel (0) target = $region17
    $region16: #{tpu_custom_call.1} parent=1 // pred_region
      _
    $region17: #{tpu_custom_call.1} parent=1 // pred_fallthru
      _
    // Predicated region
    $region18: #{tpu_custom_call.1} parent=1 // pred_check
      _
    $region19: #{tpu_custom_call.1} parent=1 // pred_check_branch
      %33 = sbr.rel (0) target = $region21
    $region20: #{tpu_custom_call.1} parent=1 // pred_region
      _
    $region21: #{tpu_custom_call.1} parent=1 // pred_fallthru
      _
    // Predicated region
    $region22: #{tpu_custom_call.1} parent=1 // pred_check
      _
    $region23: #{tpu_custom_call.1} parent=1 // pred_check_branch
      %35 = sbr.rel (0) target = $region25
    $region24: #{tpu_custom_call.1} parent=1 // pred_region
      _
    $region25: #{tpu_custom_call.1} parent=1 // pred_fallthru
      _
    // Predicated region
    $region26: #{tpu_custom_call.1} parent=1 // pred_check
      _
    $region27: #{tpu_custom_call.1} parent=1 // pred_check_branch
      %37 = sbr.rel (0) target = $region29
    $region28: #{tpu_custom_call.1} parent=1 // pred_region
      _
    $region29: #{tpu_custom_call.1} parent=1 // pred_fallthru
      _
    // Predicated region
    $region30: #{tpu_custom_call.1} parent=1 // pred_check
      _
    $region31: #{tpu_custom_call.1} parent=1 // pred_check_branch
      %39 = sbr.rel (0) target = $region33
    $region32: #{tpu_custom_call.1} parent=1 // pred_region
      _
    $region33: #{tpu_custom_call.1} parent=1 // pred_fallthru
      _
    // Predicated region
    $region34: #{tpu_custom_call.1} parent=1 // pred_check
      _
    $region35: #{tpu_custom_call.1} parent=1 // pred_check_branch
      %41 = sbr.rel (0) target = $region37
    $region36: #{tpu_custom_call.1} parent=1 // pred_region
      _
    $region37: #{tpu_custom_call.1} parent=1 // pred_fallthru
      _
    // Predicated region
    $region38: #{tpu_custom_call.1} parent=1 // pred_check
      _
    $region39: #{tpu_custom_call.1} parent=1 // pred_check_branch
      %43 = sbr.rel (0) target = $region41
    $region40: #{tpu_custom_call.1} parent=1 // pred_region
      _
    $region41: #{tpu_custom_call.1} parent=1 // pred_fallthru
      _
    // Predicated region
    $region42: #{tpu_custom_call.1} parent=1 // pred_check
      _
    $region43: #{tpu_custom_call.1} parent=1 // pred_check_branch
      %45 = sbr.rel (0) target = $region45
    $region44: #{tpu_custom_call.1} parent=1 // pred_region
      _
    $region45: #{tpu_custom_call.1} parent=1 // pred_fallthru
      _
    // Predicated region
    $region46: #{tpu_custom_call.1} parent=1 // pred_check
      _
    $region47: #{tpu_custom_call.1} parent=1 // pred_check_branch
      %47 = sbr.rel (0) target = $region49
    $region48: #{tpu_custom_call.1} parent=1 // pred_region
      _
    $region49: #{tpu_custom_call.1} parent=1 // pred_fallthru
      _
    // Predicated region
    $region50: #{tpu_custom_call.1} parent=1 // pred_check
      _
    $region51: #{tpu_custom_call.1} parent=1 // pred_check_branch
      %49 = sbr.rel (0) target = $region53
    $region52: #{tpu_custom_call.1} parent=1 // pred_region
      _
    $region53: #{tpu_custom_call.1} parent=1 // pred_fallthru
      _
    // Predicated region
    $region54: #{tpu_custom_call.1} parent=1 // pred_check
      _
    $region55: #{tpu_custom_call.1} parent=1 // pred_check_branch
      %51 = sbr.rel (0) target = $region57
    $region56: #{tpu_custom_call.1} parent=1 // pred_region
      _
    $region57: #{tpu_custom_call.1} parent=1 // pred_fallthru
      _
    // Predicated region
    $region58: #{tpu_custom_call.1} parent=1 // pred_check
      _
    $region59: #{tpu_custom_call.1} parent=1 // pred_check_branch
      %53 = sbr.rel (0) target = $region61
    $region60: #{tpu_custom_call.1} parent=1 // pred_region
      _
    $region61: #{tpu_custom_call.1} parent=1 // pred_fallthru
      _
    // Predicated region
    $region62: #{tpu_custom_call.1} parent=1 // pred_check
      _
    $region63: #{tpu_custom_call.1} parent=1 // pred_check_branch
      %55 = sbr.rel (0) target = $region65
    $region64: #{tpu_custom_call.1} parent=1 // pred_region
      _
    $region65: #{tpu_custom_call.1} parent=1 // pred_fallthru
      _
    %v57 = vld [vmem:[%s0] sm:$0xff]
    %58 = vxpose.xlu0.b32.start [1/16] %v57, 128
    %59 = vxpose.xlu0.b32.cont [2/16] 0.0, 128
    %60 = vxpose.xlu0.b32.cont [3/16] 0.0, 128
    %61 = vxpose.xlu0.b32.cont [4/16] 0.0, 128
    %62 = vxpose.xlu0.b32.cont [5/16] 0.0, 128
    %63 = vxpose.xlu0.b32.cont [6/16] 0.0, 128
    %64 = vxpose.xlu0.b32.cont [7/16] 0.0, 128
    %65 = vxpose.xlu0.b32.cont [8/16] 0.0, 128
    %66 = vxpose.xlu0.b32.cont [9/16] 0.0, 128
    %67 = vxpose.xlu0.b32.cont [10/16] 0.0, 128
    %68 = vxpose.xlu0.b32.cont [11/16] 0.0, 128
    %69 = vxpose.xlu0.b32.cont [12/16] 0.0, 128
    %70 = vxpose.xlu0.b32.cont [13/16] 0.0, 128
    %71 = vxpose.xlu0.b32.cont [14/16] 0.0, 128
    %72 = vxpose.xlu0.b32.cont [15/16] 0.0, 128
    %73 = vxpose.xlu0.b32.end [16/16] 0.0, 128
    %v74 = vpop.trf.xlu0
    %v75 = vpop.trf.xlu0
    %v76 = vpop.trf.xlu0
    %v77 = vpop.trf.xlu0
    %v78 = vpop.trf.xlu0
    %v79 = vpop.trf.xlu0
    %v80 = vpop.trf.xlu0
    %v81 = vpop.trf.xlu0
    %v82 = vpop.trf.xlu0
    %v83 = vpop.trf.xlu0
    %v84 = vpop.trf.xlu0
    %v85 = vpop.trf.xlu0
    %v86 = vpop.trf.xlu0
    %v87 = vpop.trf.xlu0
    %v88 = vpop.trf.xlu0
    %v89 = vpop.trf.xlu0
    %vm90 = vcmask 64512
    %91 = vst.msk [vmem:[#allocation2] sm:$0xff] %vm90, %v74
    %92 = vst.msk [vmem:[#allocation2 + $0x8] sm:$0xff] %vm90, %v75
    %93 = vst.msk [vmem:[#allocation2 + $0x10] sm:$0xff] %vm90, %v76
    %94 = vst.msk [vmem:[#allocation2 + $0x18] sm:$0xff] %vm90, %v77
    %95 = vst.msk [vmem:[#allocation2 + $0x20] sm:$0xff] %vm90, %v78
    %96 = vst.msk [vmem:[#allocation2 + $0x28] sm:$0xff] %vm90, %v79
    %97 = vst.msk [vmem:[#allocation2 + $0x30] sm:$0xff] %vm90, %v80
    %98 = vst.msk [vmem:[#allocation2 + $0x38] sm:$0xff] %vm90, %v81
    %99 = vst.msk [vmem:[#allocation2 + $0x40] sm:$0xff] %vm90, %v82
    %100 = vst.msk [vmem:[#allocation2 + $0x48] sm:$0xff] %vm90, %v83
    %101 = vst.msk [vmem:[#allocation2 + $0x50] sm:$0xff] %vm90, %v84
    %102 = vst.msk [vmem:[#allocation2 + $0x58] sm:$0xff] %vm90, %v85
    %103 = vst.msk [vmem:[#allocation2 + $0x60] sm:$0xff] %vm90, %v86
    %104 = vst.msk [vmem:[#allocation2 + $0x68] sm:$0xff] %vm90, %v87
    %105 = vst.msk [vmem:[#allocation2 + $0x70] sm:$0xff] %vm90, %v88
    %106 = vst.msk [vmem:[#allocation2 + $0x78] sm:$0xff] %vm90, %v89
    %v107 = vld [vmem:[%s0 + $0x8] sm:$0xff]
    %108 = vxpose.xlu0.b32.start [1/16] %v107, 128
    %109 = vxpose.xlu0.b32.cont [2/16] 0.0, 128
    %110 = vxpose.xlu0.b32.cont [3/16] 0.0, 128
    %111 = vxpose.xlu0.b32.cont [4/16] 0.0, 128
    %112 = vxpose.xlu0.b32.cont [5/16] 0.0, 128
    %113 = vxpose.xlu0.b32.cont [6/16] 0.0, 128
    %114 = vxpose.xlu0.b32.cont [7/16] 0.0, 128
    %115 = vxpose.xlu0.b32.cont [8/16] 0.0, 128
    %116 = vxpose.xlu0.b32.cont [9/16] 0.0, 128
    %117 = vxpose.xlu0.b32.cont [10/16] 0.0, 128
    %118 = vxpose.xlu0.b32.cont [11/16] 0.0, 128
    %119 = vxpose.xlu0.b32.cont [12/16] 0.0, 128
    %120 = vxpose.xlu0.b32.cont [13/16] 0.0, 128
    %121 = vxpose.xlu0.b32.cont [14/16] 0.0, 128
    %122 = vxpose.xlu0.b32.cont [15/16] 0.0, 128
    %123 = vxpose.xlu0.b32.end [16/16] 0.0, 128
    %v124 = vpop.trf.xlu0
    %v125 = vpop.trf.xlu0
    %v126 = vpop.trf.xlu0
    %v127 = vpop.trf.xlu0
    %v128 = vpop.trf.xlu0
    %v129 = vpop.trf.xlu0
    %v130 = vpop.trf.xlu0
    %v131 = vpop.trf.xlu0
    %v132 = vpop.trf.xlu0
    %v133 = vpop.trf.xlu0
    %v134 = vpop.trf.xlu0
    %v135 = vpop.trf.xlu0
    %v136 = vpop.trf.xlu0
    %v137 = vpop.trf.xlu0
    %v138 = vpop.trf.xlu0
    %v139 = vpop.trf.xlu0
    %140 = vst.msk [vmem:[#allocation2 + $0x80] sm:$0xff] %vm90, %v124
    %141 = vst.msk [vmem:[#allocation2 + $0x88] sm:$0xff] %vm90, %v125
    %142 = vst.msk [vmem:[#allocation2 + $0x90] sm:$0xff] %vm90, %v126
    %143 = vst.msk [vmem:[#allocation2 + $0x98] sm:$0xff] %vm90, %v127
    %144 = vst.msk [vmem:[#allocation2 + $0xa0] sm:$0xff] %vm90, %v128
    %145 = vst.msk [vmem:[#allocation2 + $0xa8] sm:$0xff] %vm90, %v129
    %146 = vst.msk [vmem:[#allocation2 + $0xb0] sm:$0xff] %vm90, %v130
    %147 = vst.msk [vmem:[#allocation2 + $0xb8] sm:$0xff] %vm90, %v131
    %148 = vst.msk [vmem:[#allocation2 + $0xc0] sm:$0xff] %vm90, %v132
    %149 = vst.msk [vmem:[#allocation2 + $0xc8] sm:$0xff] %vm90, %v133
    %150 = vst.msk [vmem:[#allocation2 + $0xd0] sm:$0xff] %vm90, %v134
    %151 = vst.msk [vmem:[#allocation2 + $0xd8] sm:$0xff] %vm90, %v135
    %152 = vst.msk [vmem:[#allocation2 + $0xe0] sm:$0xff] %vm90, %v136
    %153 = vst.msk [vmem:[#allocation2 + $0xe8] sm:$0xff] %vm90, %v137
    %154 = vst.msk [vmem:[#allocation2 + $0xf0] sm:$0xff] %vm90, %v138
    %155 = vst.msk [vmem:[#allocation2 + $0xf8] sm:$0xff] %vm90, %v139
    %v156 = vld [vmem:[%s0 + $0x8] sm:$0xff]
    %v157 = vld [vmem:[%s0 + $0x10] sm:$0xff]
    %160 = vrot.lane.b32.xlu0 %v156, 19
    %v161 = vpop.permute.xlu0 %160
    %162 = vrot.lane.b32.xlu0 %v157, 19
    %v163 = vpop.permute.xlu0 %162
    %vm164 = vcmask 154624
    %v165 = vsel %vm164, %v161, %v163
    %167 = vxpose.xlu0.b32.start [1/16] %v165, 128
    %168 = vxpose.xlu0.b32.cont [2/16] 0.0, 128
    %169 = vxpose.xlu0.b32.cont [3/16] 0.0, 128
    %170 = vxpose.xlu0.b32.cont [4/16] 0.0, 128
    %171 = vxpose.xlu0.b32.cont [5/16] 0.0, 128
    %172 = vxpose.xlu0.b32.cont [6/16] 0.0, 128
    %173 = vxpose.xlu0.b32.cont [7/16] 0.0, 128
    %174 = vxpose.xlu0.b32.cont [8/16] 0.0, 128
    %175 = vxpose.xlu0.b32.cont [9/16] 0.0, 128
    %176 = vxpose.xlu0.b32.cont [10/16] 0.0, 128
    %177 = vxpose.xlu0.b32.cont [11/16] 0.0, 128
    %178 = vxpose.xlu0.b32.cont [12/16] 0.0, 128
    %179 = vxpose.xlu0.b32.cont [13/16] 0.0, 128
    %180 = vxpose.xlu0.b32.cont [14/16] 0.0, 128
    %181 = vxpose.xlu0.b32.cont [15/16] 0.0, 128
    %182 = vxpose.xlu0.b32.end [16/16] 0.0, 128
    %v183 = vpop.trf.xlu0
    %v184 = vpop.trf.xlu0
    %v185 = vpop.trf.xlu0
    %v186 = vpop.trf.xlu0
    %v187 = vpop.trf.xlu0
    %v188 = vpop.trf.xlu0
    %v189 = vpop.trf.xlu0
    %v190 = vpop.trf.xlu0
    %v191 = vpop.trf.xlu0
    %v192 = vpop.trf.xlu0
    %v193 = vpop.trf.xlu0
    %v194 = vpop.trf.xlu0
    %v195 = vpop.trf.xlu0
    %v196 = vpop.trf.xlu0
    %v197 = vpop.trf.xlu0
    %v198 = vpop.trf.xlu0
    %199 = vst.msk [vmem:[#allocation2 + $0xed] sm:$0xff] %vm90, %v183
    %200 = vst.msk [vmem:[#allocation2 + $0xf5] sm:$0xff] %vm90, %v184
    %201 = vst.msk [vmem:[#allocation2 + $0xfd] sm:$0xff] %vm90, %v185
    %202 = vst.msk [vmem:[#allocation2 + $0x105] sm:$0xff] %vm90, %v186
    %203 = vst.msk [vmem:[#allocation2 + $0x10d] sm:$0xff] %vm90, %v187
    %204 = vst.msk [vmem:[#allocation2 + $0x115] sm:$0xff] %vm90, %v188
    %205 = vst.msk [vmem:[#allocation2 + $0x11d] sm:$0xff] %vm90, %v189
    %206 = vst.msk [vmem:[#allocation2 + $0x125] sm:$0xff] %vm90, %v190
    %207 = vst.msk [vmem:[#allocation2 + $0x12d] sm:$0xff] %vm90, %v191
    %208 = vst.msk [vmem:[#allocation2 + $0x135] sm:$0xff] %vm90, %v192
    %209 = vst.msk [vmem:[#allocation2 + $0x13d] sm:$0xff] %vm90, %v193
    %210 = vst.msk [vmem:[#allocation2 + $0x145] sm:$0xff] %vm90, %v194
    %211 = vst.msk [vmem:[#allocation2 + $0x14d] sm:$0xff] %vm90, %v195
    %212 = vst.msk [vmem:[#allocation2 + $0x155] sm:$0xff] %vm90, %v196
    %213 = vst.msk [vmem:[#allocation2 + $0x15d] sm:$0xff] %vm90, %v197
    %214 = vst.msk [vmem:[#allocation2 + $0x165] sm:$0xff] %vm90, %v198
    %vm215 = vcmask 59392
    %216 = vst.msk [vmem:[#allocation2 + $0x16d] sm:$0x7] %vm215, 0.0
    %v217 = vld [vmem:[#allocation2] sm:$0xff]
    %v218 = vld [vmem:[#allocation2 + $0x8] sm:$0xff]
    %v219 = vld [vmem:[#allocation2 + $0x10] sm:$0xff]
    %v220 = vld [vmem:[#allocation2 + $0x18] sm:$0xff]
    %v221 = vld [vmem:[#allocation2 + $0x20] sm:$0xff]
    %v222 = vld [vmem:[#allocation2 + $0x28] sm:$0xff]
    %v223 = vld [vmem:[#allocation2 + $0x30] sm:$0xff]
    %v224 = vld [vmem:[#allocation2 + $0x38] sm:$0xff]
    %v225 = vld [vmem:[#allocation2 + $0x40] sm:$0xff]
    %v226 = vld [vmem:[#allocation2 + $0x48] sm:$0xff]
    %v227 = vld [vmem:[#allocation2 + $0x50] sm:$0xff]
    %v228 = vld [vmem:[#allocation2 + $0x58] sm:$0xff]
    %v229 = vld [vmem:[#allocation2 + $0x60] sm:$0xff]
    %v230 = vld [vmem:[#allocation2 + $0x68] sm:$0xff]
    %v231 = vld [vmem:[#allocation2 + $0x70] sm:$0xff]
    %v232 = vld [vmem:[#allocation2 + $0x78] sm:$0xff]
    %v233 = vld [vmem:[#allocation2 + $0x80] sm:$0xff]
    %v234 = vld [vmem:[#allocation2 + $0x88] sm:$0xff]
    %v235 = vld [vmem:[#allocation2 + $0x90] sm:$0xff]
    %v236 = vld [vmem:[#allocation2 + $0x98] sm:$0xff]
    %v237 = vld [vmem:[#allocation2 + $0xa0] sm:$0xff]
    %v238 = vld [vmem:[#allocation2 + $0xa8] sm:$0xff]
    %v239 = vld [vmem:[#allocation2 + $0xb0] sm:$0xff]
    %v240 = vld [vmem:[#allocation2 + $0xb8] sm:$0xff]
    %v241 = vld [vmem:[#allocation2 + $0xc0] sm:$0xff]
    %v242 = vld [vmem:[#allocation2 + $0xc8] sm:$0xff]
    %v243 = vld [vmem:[#allocation2 + $0xd0] sm:$0xff]
    %v244 = vld [vmem:[#allocation2 + $0xd8] sm:$0xff]
    %v245 = vld [vmem:[#allocation2 + $0xe0] sm:$0xff]
    %v246 = vld [vmem:[#allocation2 + $0xe8] sm:$0xff]
    %v247 = vld [vmem:[#allocation2 + $0xf0] sm:$0xff]
    %v248 = vld [vmem:[#allocation2 + $0xf8] sm:$0xff]
    %v249 = vld [vmem:[#allocation2 + $0x100] sm:$0xff]
    %v250 = vld [vmem:[#allocation2 + $0x108] sm:$0xff]
    %v251 = vld [vmem:[#allocation2 + $0x110] sm:$0xff]
    %v252 = vld [vmem:[#allocation2 + $0x118] sm:$0xff]
    %v253 = vld [vmem:[#allocation2 + $0x120] sm:$0xff]
    %v254 = vld [vmem:[#allocation2 + $0x128] sm:$0xff]
    %v255 = vld [vmem:[#allocation2 + $0x130] sm:$0xff]
    %v256 = vld [vmem:[#allocation2 + $0x138] sm:$0xff]
    %v257 = vld [vmem:[#allocation2 + $0x140] sm:$0xff]
    %v258 = vld [vmem:[#allocation2 + $0x148] sm:$0xff]
    %v259 = vld [vmem:[#allocation2 + $0x150] sm:$0xff]
    %v260 = vld [vmem:[#allocation2 + $0x158] sm:$0xff]
    %v261 = vld [vmem:[#allocation2 + $0x160] sm:$0xff]
    %v262 = vld [vmem:[#allocation2 + $0x168] sm:$0xff]
    %v263 = vpack.c.bf16 %v218, %v217
    %v264 = vpack.c.bf16 %v220, %v219
    %v265 = vpack.c.bf16 %v222, %v221
    %v266 = vpack.c.bf16 %v224, %v223
    %v267 = vpack.c.bf16 %v226, %v225
    %v268 = vpack.c.bf16 %v228, %v227
    %v269 = vpack.c.bf16 %v230, %v229
    %v270 = vpack.c.bf16 %v232, %v231
    %v271 = vpack.c.bf16 %v234, %v233
    %v272 = vpack.c.bf16 %v236, %v235
    %v273 = vpack.c.bf16 %v238, %v237
    %v274 = vpack.c.bf16 %v240, %v239
    %v275 = vpack.c.bf16 %v242, %v241
    %v276 = vpack.c.bf16 %v244, %v243
    %v277 = vpack.c.bf16 %v246, %v245
    %v278 = vpack.c.bf16 %v248, %v247
    %v279 = vpack.c.bf16 %v250, %v249
    %v280 = vpack.c.bf16 %v252, %v251
    %v281 = vpack.c.bf16 %v254, %v253
    %v282 = vpack.c.bf16 %v256, %v255
    %v283 = vpack.c.bf16 %v258, %v257
    %v284 = vpack.c.bf16 %v260, %v259
    %v285 = vpack.c.bf16 %v262, %v261
    %v286 = vld [vmem:[%s1] sm:$0xff]
    %v287 = vld [vmem:[%s1 + $0x8] sm:$0xf]
    %v288 = vld [vmem:[%s1 + $0xc] sm:$0xff]
    %v289 = vld [vmem:[%s1 + $0x14] sm:$0xf]
    %v290 = vld [vmem:[%s1 + $0x18] sm:$0xff]
    %v291 = vld [vmem:[%s1 + $0x20] sm:$0xf]
    %v292 = vld [vmem:[%s1 + $0x24] sm:$0xff]
    %v293 = vld [vmem:[%s1 + $0x2c] sm:$0xf]
    %v294 = vld [vmem:[%s1 + $0x30] sm:$0xff]
    %v295 = vld [vmem:[%s1 + $0x38] sm:$0xf]
    %v296 = vld [vmem:[%s1 + $0x3c] sm:$0xff]
    %v297 = vld [vmem:[%s1 + $0x44] sm:$0xf]
    %v298 = vld [vmem:[%s1 + $0x48] sm:$0xff]
    %v299 = vld [vmem:[%s1 + $0x50] sm:$0xf]
    %v300 = vld [vmem:[%s1 + $0x54] sm:$0xff]
    %v301 = vld [vmem:[%s1 + $0x5c] sm:$0xf]
    %v302 = vld [vmem:[%s1 + $0x60] sm:$0xff]
    %v303 = vld [vmem:[%s1 + $0x68] sm:$0xf]
    %v304 = vld [vmem:[%s1 + $0x6c] sm:$0xff]
    %v305 = vld [vmem:[%s1 + $0x74] sm:$0xf]
    %v306 = vld [vmem:[%s1 + $0x78] sm:$0xff]
    %v307 = vld [vmem:[%s1 + $0x80] sm:$0xf]
    %v308 = vld [vmem:[%s1 + $0x84] sm:$0xff]
    %v309 = vld [vmem:[%s1 + $0x8c] sm:$0xf]
    %v310 = vld [vmem:[%s1 + $0x90] sm:$0xff]
    %v311 = vld [vmem:[%s1 + $0x98] sm:$0xf]
    %v312 = vld [vmem:[%s1 + $0x9c] sm:$0xff]
    %v313 = vld [vmem:[%s1 + $0xa4] sm:$0xf]
    %v314 = vld [vmem:[%s1 + $0xa8] sm:$0xff]
    %v315 = vld [vmem:[%s1 + $0xb0] sm:$0xf]
    %v316 = vld [vmem:[%s1 + $0xb4] sm:$0xff]
    %v317 = vld [vmem:[%s1 + $0xbc] sm:$0xf]
    %v318 = vld [vmem:[%s1 + $0xc0] sm:$0xff]
    %v319 = vld [vmem:[%s1 + $0xc8] sm:$0xf]
    %v320 = vld [vmem:[%s1 + $0xcc] sm:$0xff]
    %v321 = vld [vmem:[%s1 + $0xd4] sm:$0xf]
    %v322 = vld [vmem:[%s1 + $0xd8] sm:$0xff]
    %v323 = vld [vmem:[%s1 + $0xe0] sm:$0xf]
    %v324 = vld [vmem:[%s1 + $0xe4] sm:$0xff]
    %v325 = vld [vmem:[%s1 + $0xec] sm:$0xf]
    %v326 = vld [vmem:[%s1 + $0xf0] sm:$0xff]
    %v327 = vld [vmem:[%s1 + $0xf8] sm:$0xf]
    %v328 = vld [vmem:[%s1 + $0xfc] sm:$0xff]
    %v329 = vld [vmem:[%s1 + $0x104] sm:$0xf]
    %v330 = vld [vmem:[%s1 + $0x108] sm:$0xff]
    %v331 = vld [vmem:[%s1 + $0x110] sm:$0xf]
    %v332 = vld [vmem:[%s1 + $0x114] sm:$0xff]
    %v333 = vld [vmem:[%s1 + $0x11c] sm:$0xf]
    %v334 = vld [vmem:[%s1 + $0x120] sm:$0xff]
    %v335 = vld [vmem:[%s1 + $0x128] sm:$0xf]
    %v336 = vld [vmem:[%s1 + $0x12c] sm:$0xff]
    %v337 = vld [vmem:[%s1 + $0x134] sm:$0xf]
    %v338 = vld [vmem:[%s1 + $0x138] sm:$0xff]
    %v339 = vld [vmem:[%s1 + $0x140] sm:$0xf]
    %v340 = vld [vmem:[%s1 + $0x144] sm:$0xff]
    %v341 = vld [vmem:[%s1 + $0x14c] sm:$0xf]
    %v342 = vld [vmem:[%s1 + $0x150] sm:$0xff]
    %v343 = vld [vmem:[%s1 + $0x158] sm:$0xf]
    %v344 = vld [vmem:[%s1 + $0x15c] sm:$0xff]
    %v345 = vld [vmem:[%s1 + $0x164] sm:$0xf]
    %v346 = vld [vmem:[%s1 + $0x168] sm:$0xff]
    %v347 = vld [vmem:[%s1 + $0x170] sm:$0xf]
    %v348 = vld [vmem:[%s1 + $0x174] sm:$0xff]
    %v349 = vld [vmem:[%s1 + $0x17c] sm:$0xf]
    %v350 = vld [vmem:[%s1 + $0x180] sm:$0xff]
    %v351 = vld [vmem:[%s1 + $0x188] sm:$0xf]
    %v352 = vld [vmem:[%s1 + $0x18c] sm:$0xff]
    %v353 = vld [vmem:[%s1 + $0x194] sm:$0xf]
    %v354 = vld [vmem:[%s1 + $0x198] sm:$0xff]
    %v355 = vld [vmem:[%s1 + $0x1a0] sm:$0xf]
    %v356 = vld [vmem:[%s1 + $0x1a4] sm:$0xff]
    %v357 = vld [vmem:[%s1 + $0x1ac] sm:$0xf]
    %v358 = vld [vmem:[%s1 + $0x1b0] sm:$0xff]
    %v359 = vld [vmem:[%s1 + $0x1b8] sm:$0xf]
    %v360 = vld [vmem:[%s1 + $0x1bc] sm:$0xff]
    %v361 = vld [vmem:[%s1 + $0x1c4] sm:$0xf]
    %v362 = vld [vmem:[%s1 + $0x1c8] sm:$0xff]
    %v363 = vld [vmem:[%s1 + $0x1d0] sm:$0xf]
    %v364 = vld [vmem:[%s1 + $0x1d4] sm:$0xff]
    %v365 = vld [vmem:[%s1 + $0x1dc] sm:$0xf]
    %v366 = vld [vmem:[%s1 + $0x1e0] sm:$0xff]
    %v367 = vld [vmem:[%s1 + $0x1e8] sm:$0xf]
    %v368 = vld [vmem:[%s1 + $0x1ec] sm:$0xff]
    %v369 = vld [vmem:[%s1 + $0x1f4] sm:$0xf]
    %v370 = vld [vmem:[%s1 + $0x1f8] sm:$0xff]
    %v371 = vld [vmem:[%s1 + $0x200] sm:$0xf]
    %v372 = vld [vmem:[%s1 + $0x204] sm:$0xff]
    %v373 = vld [vmem:[%s1 + $0x20c] sm:$0xf]
    %v374 = vld [vmem:[%s1 + $0x210] sm:$0xff]
    %v375 = vld [vmem:[%s1 + $0x218] sm:$0xf]
    %v376 = vld [vmem:[%s1 + $0x21c] sm:$0xff]
    %v377 = vld [vmem:[%s1 + $0x224] sm:$0xf]
    %v378 = vld [vmem:[%s1 + $0x228] sm:$0xff]
    %v379 = vld [vmem:[%s1 + $0x230] sm:$0xf]
    %v380 = vld [vmem:[%s1 + $0x234] sm:$0xff]
    %v381 = vld [vmem:[%s1 + $0x23c] sm:$0xf]
    %v382 = vld [vmem:[%s1 + $0x240] sm:$0xff]
    %v383 = vld [vmem:[%s1 + $0x248] sm:$0xf]
    %v384 = vld [vmem:[%s1 + $0x24c] sm:$0xff]
    %v385 = vld [vmem:[%s1 + $0x254] sm:$0xf]
    %v386 = vld [vmem:[%s1 + $0x258] sm:$0xff]
    %v387 = vld [vmem:[%s1 + $0x260] sm:$0xf]
    %v388 = vld [vmem:[%s1 + $0x264] sm:$0xff]
    %v389 = vld [vmem:[%s1 + $0x26c] sm:$0xf]
    %v390 = vld [vmem:[%s1 + $0x270] sm:$0xff]
    %v391 = vld [vmem:[%s1 + $0x278] sm:$0xf]
    %v392 = vld [vmem:[%s1 + $0x27c] sm:$0xff]
    %v393 = vld [vmem:[%s1 + $0x284] sm:$0xf]
    %v394 = vld [vmem:[%s1 + $0x288] sm:$0xff]
    %v395 = vld [vmem:[%s1 + $0x290] sm:$0xf]
    %v396 = vld [vmem:[%s1 + $0x294] sm:$0xff]
    %v397 = vld [vmem:[%s1 + $0x29c] sm:$0xf]
    %v398 = vld [vmem:[%s1 + $0x2a0] sm:$0xff]
    %v399 = vld [vmem:[%s1 + $0x2a8] sm:$0xf]
    %v400 = vld [vmem:[%s1 + $0x2ac] sm:$0xff]
    %v401 = vld [vmem:[%s1 + $0x2b4] sm:$0xf]
    %v402 = vld [vmem:[%s1 + $0x2b8] sm:$0xff]
    %v403 = vld [vmem:[%s1 + $0x2c0] sm:$0xf]
    %v404 = vld [vmem:[%s1 + $0x2c4] sm:$0xff]
    %v405 = vld [vmem:[%s1 + $0x2cc] sm:$0xf]
    %v406 = vld [vmem:[%s1 + $0x2d0] sm:$0xff]
    %v407 = vld [vmem:[%s1 + $0x2d8] sm:$0xf]
    %v408 = vld [vmem:[%s1 + $0x2dc] sm:$0xff]
    %v409 = vld [vmem:[%s1 + $0x2e4] sm:$0xf]
    %v410 = vld [vmem:[%s1 + $0x2e8] sm:$0xff]
    %v411 = vld [vmem:[%s1 + $0x2f0] sm:$0xf]
    %v412 = vld [vmem:[%s1 + $0x2f4] sm:$0xff]
    %v413 = vld [vmem:[%s1 + $0x2fc] sm:$0xf]
    %v414 = vld [vmem:[%s2] sm:$0xff]
    %v415 = vld [vmem:[%s2 + $0x8] sm:$0xff]
    %v416 = vld [vmem:[%s2 + $0x10] sm:$0xff]
    %v417 = vld [vmem:[%s2 + $0x18] sm:$0xff]
    %v418 = vld [vmem:[%s2 + $0x20] sm:$0xff]
    %v419 = vld [vmem:[%s2 + $0x28] sm:$0xff]
    %v420 = vld [vmem:[%s2 + $0x30] sm:$0xff]
    %v421 = vld [vmem:[%s2 + $0x38] sm:$0xff]
    %v422 = vld [vmem:[%s2 + $0x40] sm:$0xff]
    %v423 = vld [vmem:[%s2 + $0x48] sm:$0xff]
    %v424 = vld [vmem:[%s2 + $0x50] sm:$0xff]
    %v425 = vld [vmem:[%s2 + $0x58] sm:$0xff]
    %v426 = vld [vmem:[%s2 + $0x60] sm:$0xff]
    %v427 = vld [vmem:[%s2 + $0x68] sm:$0xff]
    %v428 = vld [vmem:[%s2 + $0x70] sm:$0xff]
    %v429 = vld [vmem:[%s2 + $0x78] sm:$0xff]
    %v430 = vld [vmem:[%s2 + $0x80] sm:$0xff]
    %v431 = vld [vmem:[%s2 + $0x88] sm:$0xff]
    %v432 = vld [vmem:[%s2 + $0x90] sm:$0xff]
    %v433 = vld [vmem:[%s2 + $0x98] sm:$0xff]
    %v434 = vld [vmem:[%s2 + $0xa0] sm:$0xff]
    %v435 = vld [vmem:[%s2 + $0xa8] sm:$0xff]
    %v436 = vld [vmem:[%s2 + $0xb0] sm:$0xff]
    %v437 = vld [vmem:[%s2 + $0xb8] sm:$0xff]
    %v438 = vld [vmem:[%s2 + $0xc0] sm:$0xff]
    %v439 = vld [vmem:[%s2 + $0xc8] sm:$0xff]
    %v440 = vld [vmem:[%s2 + $0xd0] sm:$0xff]
    %v441 = vld [vmem:[%s2 + $0xd8] sm:$0xff]
    %v442 = vld [vmem:[%s2 + $0xe0] sm:$0xff]
    %v443 = vld [vmem:[%s2 + $0xe8] sm:$0xff]
    %v444 = vld [vmem:[%s2 + $0xf0] sm:$0xff]
    %v445 = vld [vmem:[%s2 + $0xf8] sm:$0xff]
    %v446 = vld [vmem:[%s2 + $0x100] sm:$0xff]
    %v447 = vld [vmem:[%s2 + $0x108] sm:$0xff]
    %v448 = vld [vmem:[%s2 + $0x110] sm:$0xff]
    %v449 = vld [vmem:[%s2 + $0x118] sm:$0xff]
    %v450 = vld [vmem:[%s2 + $0x120] sm:$0xff]
    %v451 = vld [vmem:[%s2 + $0x128] sm:$0xff]
    %v452 = vld [vmem:[%s2 + $0x130] sm:$0xff]
    %v453 = vld [vmem:[%s2 + $0x138] sm:$0xff]
    %v454 = vld [vmem:[%s2 + $0x140] sm:$0xff]
    %v455 = vld [vmem:[%s2 + $0x148] sm:$0xff]
    %v456 = vld [vmem:[%s2 + $0x150] sm:$0xff]
    %v457 = vld [vmem:[%s2 + $0x158] sm:$0xff]
    %v458 = vld [vmem:[%s2 + $0x160] sm:$0xff]
    %v459 = vld [vmem:[%s2 + $0x168] sm:$0xff]
    %v460 = vld [vmem:[%s2 + $0x170] sm:$0xff]
    %v461 = vld [vmem:[%s2 + $0x178] sm:$0xff]
    %v462 = vld [vmem:[%s2 + $0x180] sm:$0xff]
    %v463 = vld [vmem:[%s2 + $0x188] sm:$0xff]
    %v464 = vld [vmem:[%s2 + $0x190] sm:$0xff]
    %v465 = vld [vmem:[%s2 + $0x198] sm:$0xff]
    %v466 = vld [vmem:[%s2 + $0x1a0] sm:$0xff]
    %v467 = vld [vmem:[%s2 + $0x1a8] sm:$0xff]
    %v468 = vld [vmem:[%s2 + $0x1b0] sm:$0xff]
    %v469 = vld [vmem:[%s2 + $0x1b8] sm:$0xff]
    %v470 = vld [vmem:[%s2 + $0x1c0] sm:$0xff]
    %v471 = vld [vmem:[%s2 + $0x1c8] sm:$0xff]
    %v472 = vld [vmem:[%s2 + $0x1d0] sm:$0xff]
    %v473 = vld [vmem:[%s2 + $0x1d8] sm:$0xff]
    %v474 = vld [vmem:[%s2 + $0x1e0] sm:$0xff]
    %v475 = vld [vmem:[%s2 + $0x1e8] sm:$0xff]
    %v476 = vld [vmem:[%s2 + $0x1f0] sm:$0xff]
    %v477 = vld [vmem:[%s2 + $0x1f8] sm:$0xff]
    %479 = vset.pattern.permute.xlu0 0
    %480 = vperm.xlu0 %479, %v414
    %v481 = vpop.permute.xlu0 %480
    %484 = vset.pattern.permute.xlu0 0
    %485 = vperm.xlu0 %484, %v415
    %v486 = vpop.permute.xlu0 %485
    %489 = vset.pattern.permute.xlu0 0
    %490 = vperm.xlu0 %489, %v416
    %v491 = vpop.permute.xlu0 %490
    %494 = vset.pattern.permute.xlu0 0
    %495 = vperm.xlu0 %494, %v417
    %v496 = vpop.permute.xlu0 %495
    %499 = vset.pattern.permute.xlu0 0
    %500 = vperm.xlu0 %499, %v418
    %v501 = vpop.permute.xlu0 %500
    %504 = vset.pattern.permute.xlu0 0
    %505 = vperm.xlu0 %504, %v419
    %v506 = vpop.permute.xlu0 %505
    %509 = vset.pattern.permute.xlu0 0
    %510 = vperm.xlu0 %509, %v420
    %v511 = vpop.permute.xlu0 %510
    %514 = vset.pattern.permute.xlu0 0
    %515 = vperm.xlu0 %514, %v421
    %v516 = vpop.permute.xlu0 %515
    %519 = vset.pattern.permute.xlu0 0
    %520 = vperm.xlu0 %519, %v422
    %v521 = vpop.permute.xlu0 %520
    %524 = vset.pattern.permute.xlu0 0
    %525 = vperm.xlu0 %524, %v423
    %v526 = vpop.permute.xlu0 %525
    %529 = vset.pattern.permute.xlu0 0
    %530 = vperm.xlu0 %529, %v424
    %v531 = vpop.permute.xlu0 %530
    %534 = vset.pattern.permute.xlu0 0
    %535 = vperm.xlu0 %534, %v425
    %v536 = vpop.permute.xlu0 %535
    %539 = vset.pattern.permute.xlu0 0
    %540 = vperm.xlu0 %539, %v426
    %v541 = vpop.permute.xlu0 %540
    %544 = vset.pattern.permute.xlu0 0
    %545 = vperm.xlu0 %544, %v427
    %v546 = vpop.permute.xlu0 %545
    %549 = vset.pattern.permute.xlu0 0
    %550 = vperm.xlu0 %549, %v428
    %v551 = vpop.permute.xlu0 %550
    %554 = vset.pattern.permute.xlu0 0
    %555 = vperm.xlu0 %554, %v429
    %v556 = vpop.permute.xlu0 %555
    %559 = vset.pattern.permute.xlu0 0
    %560 = vperm.xlu0 %559, %v430
    %v561 = vpop.permute.xlu0 %560
    %564 = vset.pattern.permute.xlu0 0
    %565 = vperm.xlu0 %564, %v431
    %v566 = vpop.permute.xlu0 %565
    %569 = vset.pattern.permute.xlu0 0
    %570 = vperm.xlu0 %569, %v432
    %v571 = vpop.permute.xlu0 %570
    %574 = vset.pattern.permute.xlu0 0
    %575 = vperm.xlu0 %574, %v433
    %v576 = vpop.permute.xlu0 %575
    %579 = vset.pattern.permute.xlu0 0
    %580 = vperm.xlu0 %579, %v434
    %v581 = vpop.permute.xlu0 %580
    %584 = vset.pattern.permute.xlu0 0
    %585 = vperm.xlu0 %584, %v435
    %v586 = vpop.permute.xlu0 %585
    %589 = vset.pattern.permute.xlu0 0
    %590 = vperm.xlu0 %589, %v436
    %v591 = vpop.permute.xlu0 %590
    %594 = vset.pattern.permute.xlu0 0
    %595 = vperm.xlu0 %594, %v437
    %v596 = vpop.permute.xlu0 %595
    %599 = vset.pattern.permute.xlu0 0
    %600 = vperm.xlu0 %599, %v438
    %v601 = vpop.permute.xlu0 %600
    %604 = vset.pattern.permute.xlu0 0
    %605 = vperm.xlu0 %604, %v439
    %v606 = vpop.permute.xlu0 %605
    %609 = vset.pattern.permute.xlu0 0
    %610 = vperm.xlu0 %609, %v440
    %v611 = vpop.permute.xlu0 %610
    %614 = vset.pattern.permute.xlu0 0
    %615 = vperm.xlu0 %614, %v441
    %v616 = vpop.permute.xlu0 %615
    %619 = vset.pattern.permute.xlu0 0
    %620 = vperm.xlu0 %619, %v442
    %v621 = vpop.permute.xlu0 %620
    %624 = vset.pattern.permute.xlu0 0
    %625 = vperm.xlu0 %624, %v443
    %v626 = vpop.permute.xlu0 %625
    %629 = vset.pattern.permute.xlu0 0
    %630 = vperm.xlu0 %629, %v444
    %v631 = vpop.permute.xlu0 %630
    %634 = vset.pattern.permute.xlu0 0
    %635 = vperm.xlu0 %634, %v445
    %v636 = vpop.permute.xlu0 %635
    %639 = vset.pattern.permute.xlu0 0
    %640 = vperm.xlu0 %639, %v446
    %v641 = vpop.permute.xlu0 %640
    %644 = vset.pattern.permute.xlu0 0
    %645 = vperm.xlu0 %644, %v447
    %v646 = vpop.permute.xlu0 %645
    %649 = vset.pattern.permute.xlu0 0
    %650 = vperm.xlu0 %649, %v448
    %v651 = vpop.permute.xlu0 %650
    %654 = vset.pattern.permute.xlu0 0
    %655 = vperm.xlu0 %654, %v449
    %v656 = vpop.permute.xlu0 %655
    %659 = vset.pattern.permute.xlu0 0
    %660 = vperm.xlu0 %659, %v450
    %v661 = vpop.permute.xlu0 %660
    %664 = vset.pattern.permute.xlu0 0
    %665 = vperm.xlu0 %664, %v451
    %v666 = vpop.permute.xlu0 %665
    %669 = vset.pattern.permute.xlu0 0
    %670 = vperm.xlu0 %669, %v452
    %v671 = vpop.permute.xlu0 %670
    %674 = vset.pattern.permute.xlu0 0
    %675 = vperm.xlu0 %674, %v453
    %v676 = vpop.permute.xlu0 %675
    %679 = vset.pattern.permute.xlu0 0
    %680 = vperm.xlu0 %679, %v454
    %v681 = vpop.permute.xlu0 %680
    %684 = vset.pattern.permute.xlu0 0
    %685 = vperm.xlu0 %684, %v455
    %v686 = vpop.permute.xlu0 %685
    %689 = vset.pattern.permute.xlu0 0
    %690 = vperm.xlu0 %689, %v456
    %v691 = vpop.permute.xlu0 %690
    %694 = vset.pattern.permute.xlu0 0
    %695 = vperm.xlu0 %694, %v457
    %v696 = vpop.permute.xlu0 %695
    %699 = vset.pattern.permute.xlu0 0
    %700 = vperm.xlu0 %699, %v458
    %v701 = vpop.permute.xlu0 %700
    %704 = vset.pattern.permute.xlu0 0
    %705 = vperm.xlu0 %704, %v459
    %v706 = vpop.permute.xlu0 %705
    %709 = vset.pattern.permute.xlu0 0
    %710 = vperm.xlu0 %709, %v460
    %v711 = vpop.permute.xlu0 %710
    %714 = vset.pattern.permute.xlu0 0
    %715 = vperm.xlu0 %714, %v461
    %v716 = vpop.permute.xlu0 %715
    %719 = vset.pattern.permute.xlu0 0
    %720 = vperm.xlu0 %719, %v462
    %v721 = vpop.permute.xlu0 %720
    %724 = vset.pattern.permute.xlu0 0
    %725 = vperm.xlu0 %724, %v463
    %v726 = vpop.permute.xlu0 %725
    %729 = vset.pattern.permute.xlu0 0
    %730 = vperm.xlu0 %729, %v464
    %v731 = vpop.permute.xlu0 %730
    %734 = vset.pattern.permute.xlu0 0
    %735 = vperm.xlu0 %734, %v465
    %v736 = vpop.permute.xlu0 %735
    %739 = vset.pattern.permute.xlu0 0
    %740 = vperm.xlu0 %739, %v466
    %v741 = vpop.permute.xlu0 %740
    %744 = vset.pattern.permute.xlu0 0
    %745 = vperm.xlu0 %744, %v467
    %v746 = vpop.permute.xlu0 %745
    %749 = vset.pattern.permute.xlu0 0
    %750 = vperm.xlu0 %749, %v468
    %v751 = vpop.permute.xlu0 %750
    %754 = vset.pattern.permute.xlu0 0
    %755 = vperm.xlu0 %754, %v469
    %v756 = vpop.permute.xlu0 %755
    %759 = vset.pattern.permute.xlu0 0
    %760 = vperm.xlu0 %759, %v470
    %v761 = vpop.permute.xlu0 %760
    %764 = vset.pattern.permute.xlu0 0
    %765 = vperm.xlu0 %764, %v471
    %v766 = vpop.permute.xlu0 %765
    %769 = vset.pattern.permute.xlu0 0
    %770 = vperm.xlu0 %769, %v472
    %v771 = vpop.permute.xlu0 %770
    %774 = vset.pattern.permute.xlu0 0
    %775 = vperm.xlu0 %774, %v473
    %v776 = vpop.permute.xlu0 %775
    %779 = vset.pattern.permute.xlu0 0
    %780 = vperm.xlu0 %779, %v474
    %v781 = vpop.permute.xlu0 %780
    %784 = vset.pattern.permute.xlu0 0
    %785 = vperm.xlu0 %784, %v475
    %v786 = vpop.permute.xlu0 %785
    %789 = vset.pattern.permute.xlu0 0
    %790 = vperm.xlu0 %789, %v476
    %v791 = vpop.permute.xlu0 %790
    %794 = vset.pattern.permute.xlu0 0
    %795 = vperm.xlu0 %794, %v477
    %v796 = vpop.permute.xlu0 %795
    %v926 = vunpack.c.l.b16 %v286
    %v927 = vunpack.c.h.b16 %v286
    %v928 = vunpack.c.l.b16 %v287
    %v929 = vunpack.c.l.b16 %v288
    %v930 = vunpack.c.h.b16 %v288
    %v931 = vunpack.c.l.b16 %v289
    %v932 = vunpack.c.l.b16 %v290
    %v933 = vunpack.c.h.b16 %v290
    %v934 = vunpack.c.l.b16 %v291
    %v935 = vunpack.c.l.b16 %v292
    %v936 = vunpack.c.h.b16 %v292
    %v937 = vunpack.c.l.b16 %v293
    %v938 = vunpack.c.l.b16 %v294
    %v939 = vunpack.c.h.b16 %v294
    %v940 = vunpack.c.l.b16 %v295
    %v941 = vunpack.c.l.b16 %v296
    %v942 = vunpack.c.h.b16 %v296
    %v943 = vunpack.c.l.b16 %v297
    %v944 = vunpack.c.l.b16 %v298
    %v945 = vunpack.c.h.b16 %v298
    %v946 = vunpack.c.l.b16 %v299
    %v947 = vunpack.c.l.b16 %v300
    %v948 = vunpack.c.h.b16 %v300
    %v949 = vunpack.c.l.b16 %v301
    %v950 = vunpack.c.l.b16 %v302
    %v951 = vunpack.c.h.b16 %v302
    %v952 = vunpack.c.l.b16 %v303
    %v953 = vunpack.c.l.b16 %v304
    %v954 = vunpack.c.h.b16 %v304
    %v955 = vunpack.c.l.b16 %v305
    %v956 = vunpack.c.l.b16 %v306
    %v957 = vunpack.c.h.b16 %v306
    %v958 = vunpack.c.l.b16 %v307
    %v959 = vunpack.c.l.b16 %v308
    %v960 = vunpack.c.h.b16 %v308
    %v961 = vunpack.c.l.b16 %v309
    %v962 = vunpack.c.l.b16 %v310
    %v963 = vunpack.c.h.b16 %v310
    %v964 = vunpack.c.l.b16 %v311
    %v965 = vunpack.c.l.b16 %v312
    %v966 = vunpack.c.h.b16 %v312
    %v967 = vunpack.c.l.b16 %v313
    %v968 = vunpack.c.l.b16 %v314
    %v969 = vunpack.c.h.b16 %v314
    %v970 = vunpack.c.l.b16 %v315
    %v971 = vunpack.c.l.b16 %v316
    %v972 = vunpack.c.h.b16 %v316
    %v973 = vunpack.c.l.b16 %v317
    %v974 = vunpack.c.l.b16 %v318
    %v975 = vunpack.c.h.b16 %v318
    %v976 = vunpack.c.l.b16 %v319
    %v977 = vunpack.c.l.b16 %v320
    %v978 = vunpack.c.h.b16 %v320
    %v979 = vunpack.c.l.b16 %v321
    %v980 = vunpack.c.l.b16 %v322
    %v981 = vunpack.c.h.b16 %v322
    %v982 = vunpack.c.l.b16 %v323
    %v983 = vunpack.c.l.b16 %v324
    %v984 = vunpack.c.h.b16 %v324
    %v985 = vunpack.c.l.b16 %v325
    %v986 = vunpack.c.l.b16 %v326
    %v987 = vunpack.c.h.b16 %v326
    %v988 = vunpack.c.l.b16 %v327
    %v989 = vunpack.c.l.b16 %v328
    %v990 = vunpack.c.h.b16 %v328
    %v991 = vunpack.c.l.b16 %v329
    %v992 = vunpack.c.l.b16 %v330
    %v993 = vunpack.c.h.b16 %v330
    %v994 = vunpack.c.l.b16 %v331
    %v995 = vunpack.c.l.b16 %v332
    %v996 = vunpack.c.h.b16 %v332
    %v997 = vunpack.c.l.b16 %v333
    %v998 = vunpack.c.l.b16 %v334
    %v999 = vunpack.c.h.b16 %v334
    %v1000 = vunpack.c.l.b16 %v335
    %v1001 = vunpack.c.l.b16 %v336
    %v1002 = vunpack.c.h.b16 %v336
    %v1003 = vunpack.c.l.b16 %v337
    %v1004 = vunpack.c.l.b16 %v338
    %v1005 = vunpack.c.h.b16 %v338
    %v1006 = vunpack.c.l.b16 %v339
    %v1007 = vunpack.c.l.b16 %v340
    %v1008 = vunpack.c.h.b16 %v340
    %v1009 = vunpack.c.l.b16 %v341
    %v1010 = vunpack.c.l.b16 %v342
    %v1011 = vunpack.c.h.b16 %v342
    %v1012 = vunpack.c.l.b16 %v343
    %v1013 = vunpack.c.l.b16 %v344
    %v1014 = vunpack.c.h.b16 %v344
    %v1015 = vunpack.c.l.b16 %v345
    %v1016 = vunpack.c.l.b16 %v346
    %v1017 = vunpack.c.h.b16 %v346
    %v1018 = vunpack.c.l.b16 %v347
    %v1019 = vunpack.c.l.b16 %v348
    %v1020 = vunpack.c.h.b16 %v348
    %v1021 = vunpack.c.l.b16 %v349
    %v1022 = vunpack.c.l.b16 %v350
    %v1023 = vunpack.c.h.b16 %v350
    %v1024 = vunpack.c.l.b16 %v351
    %v1025 = vunpack.c.l.b16 %v352
    %v1026 = vunpack.c.h.b16 %v352
    %v1027 = vunpack.c.l.b16 %v353
    %v1028 = vunpack.c.l.b16 %v354
    %v1029 = vunpack.c.h.b16 %v354
    %v1030 = vunpack.c.l.b16 %v355
    %v1031 = vunpack.c.l.b16 %v356
    %v1032 = vunpack.c.h.b16 %v356
    %v1033 = vunpack.c.l.b16 %v357
    %v1034 = vunpack.c.l.b16 %v358
    %v1035 = vunpack.c.h.b16 %v358
    %v1036 = vunpack.c.l.b16 %v359
    %v1037 = vunpack.c.l.b16 %v360
    %v1038 = vunpack.c.h.b16 %v360
    %v1039 = vunpack.c.l.b16 %v361
    %v1040 = vunpack.c.l.b16 %v362
    %v1041 = vunpack.c.h.b16 %v362
    %v1042 = vunpack.c.l.b16 %v363
    %v1043 = vunpack.c.l.b16 %v364
    %v1044 = vunpack.c.h.b16 %v364
    %v1045 = vunpack.c.l.b16 %v365
    %v1046 = vunpack.c.l.b16 %v366
    %v1047 = vunpack.c.h.b16 %v366
    %v1048 = vunpack.c.l.b16 %v367
    %v1049 = vunpack.c.l.b16 %v368
    %v1050 = vunpack.c.h.b16 %v368
    %v1051 = vunpack.c.l.b16 %v369
    %v1052 = vunpack.c.l.b16 %v370
    %v1053 = vunpack.c.h.b16 %v370
    %v1054 = vunpack.c.l.b16 %v371
    %v1055 = vunpack.c.l.b16 %v372
    %v1056 = vunpack.c.h.b16 %v372
    %v1057 = vunpack.c.l.b16 %v373
    %v1058 = vunpack.c.l.b16 %v374
    %v1059 = vunpack.c.h.b16 %v374
    %v1060 = vunpack.c.l.b16 %v375
    %v1061 = vunpack.c.l.b16 %v376
    %v1062 = vunpack.c.h.b16 %v376
    %v1063 = vunpack.c.l.b16 %v377
    %v1064 = vunpack.c.l.b16 %v378
    %v1065 = vunpack.c.h.b16 %v378
    %v1066 = vunpack.c.l.b16 %v379
    %v1067 = vunpack.c.l.b16 %v380
    %v1068 = vunpack.c.h.b16 %v380
    %v1069 = vunpack.c.l.b16 %v381
    %v1070 = vunpack.c.l.b16 %v382
    %v1071 = vunpack.c.h.b16 %v382
    %v1072 = vunpack.c.l.b16 %v383
    %v1073 = vunpack.c.l.b16 %v384
    %v1074 = vunpack.c.h.b16 %v384
    %v1075 = vunpack.c.l.b16 %v385
    %v1076 = vunpack.c.l.b16 %v386
    %v1077 = vunpack.c.h.b16 %v386
    %v1078 = vunpack.c.l.b16 %v387
    %v1079 = vunpack.c.l.b16 %v388
    %v1080 = vunpack.c.h.b16 %v388
    %v1081 = vunpack.c.l.b16 %v389
    %v1082 = vunpack.c.l.b16 %v390
    %v1083 = vunpack.c.h.b16 %v390
    %v1084 = vunpack.c.l.b16 %v391
    %v1085 = vunpack.c.l.b16 %v392
    %v1086 = vunpack.c.h.b16 %v392
    %v1087 = vunpack.c.l.b16 %v393
    %v1088 = vunpack.c.l.b16 %v394
    %v1089 = vunpack.c.h.b16 %v394
    %v1090 = vunpack.c.l.b16 %v395
    %v1091 = vunpack.c.l.b16 %v396
    %v1092 = vunpack.c.h.b16 %v396
    %v1093 = vunpack.c.l.b16 %v397
    %v1094 = vunpack.c.l.b16 %v398
    %v1095 = vunpack.c.h.b16 %v398
    %v1096 = vunpack.c.l.b16 %v399
    %v1097 = vunpack.c.l.b16 %v400
    %v1098 = vunpack.c.h.b16 %v400
    %v1099 = vunpack.c.l.b16 %v401
    %v1100 = vunpack.c.l.b16 %v402
    %v1101 = vunpack.c.h.b16 %v402
    %v1102 = vunpack.c.l.b16 %v403
    %v1103 = vunpack.c.l.b16 %v404
    %v1104 = vunpack.c.h.b16 %v404
    %v1105 = vunpack.c.l.b16 %v405
    %v1106 = vunpack.c.l.b16 %v406
    %v1107 = vunpack.c.h.b16 %v406
    %v1108 = vunpack.c.l.b16 %v407
    %v1109 = vunpack.c.l.b16 %v408
    %v1110 = vunpack.c.h.b16 %v408
    %v1111 = vunpack.c.l.b16 %v409
    %v1112 = vunpack.c.l.b16 %v410
    %v1113 = vunpack.c.h.b16 %v410
    %v1114 = vunpack.c.l.b16 %v411
    %v1115 = vunpack.c.l.b16 %v412
    %v1116 = vunpack.c.h.b16 %v412
    %v1117 = vunpack.c.l.b16 %v413
    %v1118 = vpack.c.b16 %v929, %v926
    %v1119 = vpack.c.b16 %v930, %v927
    %v1120 = vpack.c.b16 %v931, %v928
    %v1121 = vpack.c.b16 %v935, %v932
    %v1122 = vpack.c.b16 %v936, %v933
    %v1123 = vpack.c.b16 %v937, %v934
    %v1124 = vpack.c.b16 %v941, %v938
    %v1125 = vpack.c.b16 %v942, %v939
    %v1126 = vpack.c.b16 %v943, %v940
    %v1127 = vpack.c.b16 %v947, %v944
    %v1128 = vpack.c.b16 %v948, %v945
    %v1129 = vpack.c.b16 %v949, %v946
    %v1130 = vpack.c.b16 %v953, %v950
    %v1131 = vpack.c.b16 %v954, %v951
    %v1132 = vpack.c.b16 %v955, %v952
    %v1133 = vpack.c.b16 %v959, %v956
    %v1134 = vpack.c.b16 %v960, %v957
    %v1135 = vpack.c.b16 %v961, %v958
    %v1136 = vpack.c.b16 %v965, %v962
    %v1137 = vpack.c.b16 %v966, %v963
    %v1138 = vpack.c.b16 %v967, %v964
    %v1139 = vpack.c.b16 %v971, %v968
    %v1140 = vpack.c.b16 %v972, %v969
    %v1141 = vpack.c.b16 %v973, %v970
    %v1142 = vpack.c.b16 %v977, %v974
    %v1143 = vpack.c.b16 %v978, %v975
    %v1144 = vpack.c.b16 %v979, %v976
    %v1145 = vpack.c.b16 %v983, %v980
    %v1146 = vpack.c.b16 %v984, %v981
    %v1147 = vpack.c.b16 %v985, %v982
    %v1148 = vpack.c.b16 %v989, %v986
    %v1149 = vpack.c.b16 %v990, %v987
    %v1150 = vpack.c.b16 %v991, %v988
    %v1151 = vpack.c.b16 %v995, %v992
    %v1152 = vpack.c.b16 %v996, %v993
    %v1153 = vpack.c.b16 %v997, %v994
    %v1154 = vpack.c.b16 %v1001, %v998
    %v1155 = vpack.c.b16 %v1002, %v999
    %v1156 = vpack.c.b16 %v1003, %v1000
    %v1157 = vpack.c.b16 %v1007, %v1004
    %v1158 = vpack.c.b16 %v1008, %v1005
    %v1159 = vpack.c.b16 %v1009, %v1006
    %v1160 = vpack.c.b16 %v1013, %v1010
    %v1161 = vpack.c.b16 %v1014, %v1011
    %v1162 = vpack.c.b16 %v1015, %v1012
    %v1163 = vpack.c.b16 %v1019, %v1016
    %v1164 = vpack.c.b16 %v1020, %v1017
    %v1165 = vpack.c.b16 %v1021, %v1018
    %v1166 = vpack.c.b16 %v1025, %v1022
    %v1167 = vpack.c.b16 %v1026, %v1023
    %v1168 = vpack.c.b16 %v1027, %v1024
    %v1169 = vpack.c.b16 %v1031, %v1028
    %v1170 = vpack.c.b16 %v1032, %v1029
    %v1171 = vpack.c.b16 %v1033, %v1030
    %v1172 = vpack.c.b16 %v1037, %v1034
    %v1173 = vpack.c.b16 %v1038, %v1035
    %v1174 = vpack.c.b16 %v1039, %v1036
    %v1175 = vpack.c.b16 %v1043, %v1040
    %v1176 = vpack.c.b16 %v1044, %v1041
    %v1177 = vpack.c.b16 %v1045, %v1042
    %v1178 = vpack.c.b16 %v1049, %v1046
    %v1179 = vpack.c.b16 %v1050, %v1047
    %v1180 = vpack.c.b16 %v1051, %v1048
    %v1181 = vpack.c.b16 %v1055, %v1052
    %v1182 = vpack.c.b16 %v1056, %v1053
    %v1183 = vpack.c.b16 %v1057, %v1054
    %v1184 = vpack.c.b16 %v1061, %v1058
    %v1185 = vpack.c.b16 %v1062, %v1059
    %v1186 = vpack.c.b16 %v1063, %v1060
    %v1187 = vpack.c.b16 %v1067, %v1064
    %v1188 = vpack.c.b16 %v1068, %v1065
    %v1189 = vpack.c.b16 %v1069, %v1066
    %v1190 = vpack.c.b16 %v1073, %v1070
    %v1191 = vpack.c.b16 %v1074, %v1071
    %v1192 = vpack.c.b16 %v1075, %v1072
    %v1193 = vpack.c.b16 %v1079, %v1076
    %v1194 = vpack.c.b16 %v1080, %v1077
    %v1195 = vpack.c.b16 %v1081, %v1078
    %v1196 = vpack.c.b16 %v1085, %v1082
    %v1197 = vpack.c.b16 %v1086, %v1083
    %v1198 = vpack.c.b16 %v1087, %v1084
    %v1199 = vpack.c.b16 %v1091, %v1088
    %v1200 = vpack.c.b16 %v1092, %v1089
    %v1201 = vpack.c.b16 %v1093, %v1090
    %v1202 = vpack.c.b16 %v1097, %v1094
    %v1203 = vpack.c.b16 %v1098, %v1095
    %v1204 = vpack.c.b16 %v1099, %v1096
    %v1205 = vpack.c.b16 %v1103, %v1100
    %v1206 = vpack.c.b16 %v1104, %v1101
    %v1207 = vpack.c.b16 %v1105, %v1102
    %v1208 = vpack.c.b16 %v1109, %v1106
    %v1209 = vpack.c.b16 %v1110, %v1107
    %v1210 = vpack.c.b16 %v1111, %v1108
    %v1211 = vpack.c.b16 %v1115, %v1112
    %v1212 = vpack.c.b16 %v1116, %v1113
    %v1213 = vpack.c.b16 %v1117, %v1114
    %vm1278 = vcmask 916480
    %v1280 = vsel %vm1278, %v1120, 0
    %v1283 = vsel %vm1278, %v1123, 0
    %v1286 = vsel %vm1278, %v1126, 0
    %v1289 = vsel %vm1278, %v1129, 0
    %v1292 = vsel %vm1278, %v1132, 0
    %v1295 = vsel %vm1278, %v1135, 0
    %v1298 = vsel %vm1278, %v1138, 0
    %v1301 = vsel %vm1278, %v1141, 0
    %v1304 = vsel %vm1278, %v1144, 0
    %v1307 = vsel %vm1278, %v1147, 0
    %v1310 = vsel %vm1278, %v1150, 0
    %v1313 = vsel %vm1278, %v1153, 0
    %v1316 = vsel %vm1278, %v1156, 0
    %v1319 = vsel %vm1278, %v1159, 0
    %v1322 = vsel %vm1278, %v1162, 0
    %v1325 = vsel %vm1278, %v1165, 0
    %v1328 = vsel %vm1278, %v1168, 0
    %v1331 = vsel %vm1278, %v1171, 0
    %v1334 = vsel %vm1278, %v1174, 0
    %v1337 = vsel %vm1278, %v1177, 0
    %v1340 = vsel %vm1278, %v1180, 0
    %v1343 = vsel %vm1278, %v1183, 0
    %v1346 = vsel %vm1278, %v1186, 0
    %v1349 = vsel %vm1278, %v1189, 0
    %v1352 = vsel %vm1278, %v1192, 0
    %v1355 = vsel %vm1278, %v1195, 0
    %v1358 = vsel %vm1278, %v1198, 0
    %v1361 = vsel %vm1278, %v1201, 0
    %v1364 = vsel %vm1278, %v1204, 0
    %v1367 = vsel %vm1278, %v1207, 0
    %v1370 = vsel %vm1278, %v1210, 0
    %v1373 = vsel %vm1278, %v1213, 0
    %1375 = vmatprep.subr.bf16.mxu0 0
    %1376 = vmatpush1.bf16.msra.mxu0 %v270
    %1377 = vmatprep.subr.bf16.mxu0 0
    %1378 = vmatpush1.bf16.msra.mxu0 %v269
    %1379 = vmatprep.subr.bf16.mxu0 0
    %1380 = vmatpush1.bf16.msra.mxu0 %v268
    %1381 = vmatprep.subr.bf16.mxu0 0
    %1382 = vmatpush1.bf16.msra.mxu0 %v267
    %1383 = vmatprep.subr.bf16.mxu0 0
    %1384 = vmatpush1.bf16.msra.mxu0 %v266
    %1385 = vmatprep.subr.bf16.mxu0 0
    %1386 = vmatpush1.bf16.msra.mxu0 %v265
    %1387 = vmatprep.subr.bf16.mxu0 0
    %1388 = vmatpush1.bf16.msra.mxu0 %v264
    %1389 = vmatprep.subr.bf16.mxu0 0
    %1390 = vmatpush1.bf16.msra.mxu0 %v263
    %1391 = vmatprep.subr.bf16.mxu0 0
    %1392 = vmatpush2.bf16.msra.mxu0 %v278
    %1393 = vmatprep.subr.bf16.mxu0 0
    %1394 = vmatpush2.bf16.msra.mxu0 %v277
    %1395 = vmatprep.subr.bf16.mxu0 0
    %1396 = vmatpush2.bf16.msra.mxu0 %v276
    %1397 = vmatprep.subr.bf16.mxu0 0
    %1398 = vmatpush2.bf16.msra.mxu0 %v275
    %1399 = vmatprep.subr.bf16.mxu0 0
    %1400 = vmatpush2.bf16.msra.mxu0 %v274
    %1401 = vmatprep.subr.bf16.mxu0 0
    %1402 = vmatpush2.bf16.msra.mxu0 %v273
    %1403 = vmatprep.subr.bf16.mxu0 0
    %1404 = vmatpush2.bf16.msra.mxu0 %v272
    %1405 = vmatprep.subr.bf16.mxu0 0
    %1406 = vmatpush2.bf16.msra.mxu0 %v271
    %1407 = vmatprep.mubr.bf16.mxu0 %v1119
    %1408 = vmatmul.mubr.bf16.gmra.mxu0 %v1118
    %v1409 = vpop.f32.mrf.mxu0
    %v1410 = vadd.f32 %v481, %v1409
    %v1411 = vpop.f32.mrf.mxu0
    %v1412 = vpop.f32.mrf.mxu0
    %v1413 = vadd.f32 %v486, %v1412
    %v1414 = vpop.f32.mrf.mxu0
    %1415 = vmatprep.mubr.bf16.mxu0 %v1122
    %1416 = vmatmul.mubr.bf16.gmra.mxu0 %v1121
    %v1417 = vpop.f32.mrf.mxu0
    %v1418 = vadd.f32 %v491, %v1417
    %v1419 = vpop.f32.mrf.mxu0
    %v1420 = vpop.f32.mrf.mxu0
    %v1421 = vadd.f32 %v496, %v1420
    %v1422 = vpop.f32.mrf.mxu0
    %1423 = vmatprep.mubr.bf16.mxu0 %v1125
    %1424 = vmatmul.mubr.bf16.gmra.mxu0 %v1124
    %v1425 = vpop.f32.mrf.mxu0
    %v1426 = vadd.f32 %v501, %v1425
    %v1427 = vpop.f32.mrf.mxu0
    %v1428 = vpop.f32.mrf.mxu0
    %v1429 = vadd.f32 %v506, %v1428
    %v1430 = vpop.f32.mrf.mxu0
    %1431 = vmatprep.mubr.bf16.mxu0 %v1128
    %1432 = vmatmul.mubr.bf16.gmra.mxu0 %v1127
    %v1433 = vpop.f32.mrf.mxu0
    %v1434 = vadd.f32 %v511, %v1433
    %v1435 = vpop.f32.mrf.mxu0
    %v1436 = vpop.f32.mrf.mxu0
    %v1437 = vadd.f32 %v516, %v1436
    %v1438 = vpop.f32.mrf.mxu0
    %1439 = vmatprep.mubr.bf16.mxu0 %v1131
    %1440 = vmatmul.mubr.bf16.gmra.mxu0 %v1130
    %v1441 = vpop.f32.mrf.mxu0
    %v1442 = vadd.f32 %v521, %v1441
    %v1443 = vpop.f32.mrf.mxu0
    %v1444 = vpop.f32.mrf.mxu0
    %v1445 = vadd.f32 %v526, %v1444
    %v1446 = vpop.f32.mrf.mxu0
    %1447 = vmatprep.mubr.bf16.mxu0 %v1134
    %1448 = vmatmul.mubr.bf16.gmra.mxu0 %v1133
    %v1449 = vpop.f32.mrf.mxu0
    %v1450 = vadd.f32 %v531, %v1449
    %v1451 = vpop.f32.mrf.mxu0
    %v1452 = vpop.f32.mrf.mxu0
    %v1453 = vadd.f32 %v536, %v1452
    %v1454 = vpop.f32.mrf.mxu0
    %1455 = vmatprep.mubr.bf16.mxu0 %v1137
    %1456 = vmatmul.mubr.bf16.gmra.mxu0 %v1136
    %v1457 = vpop.f32.mrf.mxu0
    %v1458 = vadd.f32 %v541, %v1457
    %v1459 = vpop.f32.mrf.mxu0
    %v1460 = vpop.f32.mrf.mxu0
    %v1461 = vadd.f32 %v546, %v1460
    %v1462 = vpop.f32.mrf.mxu0
    %1463 = vmatprep.mubr.bf16.mxu0 %v1140
    %1464 = vmatmul.mubr.bf16.gmra.mxu0 %v1139
    %v1465 = vpop.f32.mrf.mxu0
    %v1466 = vadd.f32 %v551, %v1465
    %v1467 = vpop.f32.mrf.mxu0
    %v1468 = vpop.f32.mrf.mxu0
    %v1469 = vadd.f32 %v556, %v1468
    %v1470 = vpop.f32.mrf.mxu0
    %1471 = vmatprep.mubr.bf16.mxu0 %v1143
    %1472 = vmatmul.mubr.bf16.gmra.mxu0 %v1142
    %v1473 = vpop.f32.mrf.mxu0
    %v1474 = vadd.f32 %v561, %v1473
    %v1475 = vpop.f32.mrf.mxu0
    %v1476 = vpop.f32.mrf.mxu0
    %v1477 = vadd.f32 %v566, %v1476
    %v1478 = vpop.f32.mrf.mxu0
    %1479 = vmatprep.mubr.bf16.mxu0 %v1146
    %1480 = vmatmul.mubr.bf16.gmra.mxu0 %v1145
    %v1481 = vpop.f32.mrf.mxu0
    %v1482 = vadd.f32 %v571, %v1481
    %v1483 = vpop.f32.mrf.mxu0
    %v1484 = vpop.f32.mrf.mxu0
    %v1485 = vadd.f32 %v576, %v1484
    %v1486 = vpop.f32.mrf.mxu0
    %1487 = vmatprep.mubr.bf16.mxu0 %v1149
    %1488 = vmatmul.mubr.bf16.gmra.mxu0 %v1148
    %v1489 = vpop.f32.mrf.mxu0
    %v1490 = vadd.f32 %v581, %v1489
    %v1491 = vpop.f32.mrf.mxu0
    %v1492 = vpop.f32.mrf.mxu0
    %v1493 = vadd.f32 %v586, %v1492
    %v1494 = vpop.f32.mrf.mxu0
    %1495 = vmatprep.mubr.bf16.mxu0 %v1152
    %1496 = vmatmul.mubr.bf16.gmra.mxu0 %v1151
    %v1497 = vpop.f32.mrf.mxu0
    %v1498 = vadd.f32 %v591, %v1497
    %v1499 = vpop.f32.mrf.mxu0
    %v1500 = vpop.f32.mrf.mxu0
    %v1501 = vadd.f32 %v596, %v1500
    %v1502 = vpop.f32.mrf.mxu0
    %1503 = vmatprep.mubr.bf16.mxu0 %v1155
    %1504 = vmatmul.mubr.bf16.gmra.mxu0 %v1154
    %v1505 = vpop.f32.mrf.mxu0
    %v1506 = vadd.f32 %v601, %v1505
    %v1507 = vpop.f32.mrf.mxu0
    %v1508 = vpop.f32.mrf.mxu0
    %v1509 = vadd.f32 %v606, %v1508
    %v1510 = vpop.f32.mrf.mxu0
    %1511 = vmatprep.mubr.bf16.mxu0 %v1158
    %1512 = vmatmul.mubr.bf16.gmra.mxu0 %v1157
    %v1513 = vpop.f32.mrf.mxu0
    %v1514 = vadd.f32 %v611, %v1513
    %v1515 = vpop.f32.mrf.mxu0
    %v1516 = vpop.f32.mrf.mxu0
    %v1517 = vadd.f32 %v616, %v1516
    %v1518 = vpop.f32.mrf.mxu0
    %1519 = vmatprep.mubr.bf16.mxu0 %v1161
    %1520 = vmatmul.mubr.bf16.gmra.mxu0 %v1160
    %v1521 = vpop.f32.mrf.mxu0
    %v1522 = vadd.f32 %v621, %v1521
    %v1523 = vpop.f32.mrf.mxu0
    %v1524 = vpop.f32.mrf.mxu0
    %v1525 = vadd.f32 %v626, %v1524
    %v1526 = vpop.f32.mrf.mxu0
    %1527 = vmatprep.mubr.bf16.mxu0 %v1164
    %1528 = vmatmul.mubr.bf16.gmra.mxu0 %v1163
    %v1529 = vpop.f32.mrf.mxu0
    %v1530 = vadd.f32 %v631, %v1529
    %v1531 = vpop.f32.mrf.mxu0
    %v1532 = vpop.f32.mrf.mxu0
    %v1533 = vadd.f32 %v636, %v1532
    %v1534 = vpop.f32.mrf.mxu0
    %1535 = vmatprep.mubr.bf16.mxu0 %v1167
    %1536 = vmatmul.mubr.bf16.gmra.mxu0 %v1166
    %v1537 = vpop.f32.mrf.mxu0
    %v1538 = vadd.f32 %v641, %v1537
    %v1539 = vpop.f32.mrf.mxu0
    %v1540 = vpop.f32.mrf.mxu0
    %v1541 = vadd.f32 %v646, %v1540
    %v1542 = vpop.f32.mrf.mxu0
    %1543 = vmatprep.mubr.bf16.mxu0 %v1170
    %1544 = vmatmul.mubr.bf16.gmra.mxu0 %v1169
    %v1545 = vpop.f32.mrf.mxu0
    %v1546 = vadd.f32 %v651, %v1545
    %v1547 = vpop.f32.mrf.mxu0
    %v1548 = vpop.f32.mrf.mxu0
    %v1549 = vadd.f32 %v656, %v1548
    %v1550 = vpop.f32.mrf.mxu0
    %1551 = vmatprep.mubr.bf16.mxu0 %v1173
    %1552 = vmatmul.mubr.bf16.gmra.mxu0 %v1172
    %v1553 = vpop.f32.mrf.mxu0
    %v1554 = vadd.f32 %v661, %v1553
    %v1555 = vpop.f32.mrf.mxu0
    %v1556 = vpop.f32.mrf.mxu0
    %v1557 = vadd.f32 %v666, %v1556
    %v1558 = vpop.f32.mrf.mxu0
    %1559 = vmatprep.mubr.bf16.mxu0 %v1176
    %1560 = vmatmul.mubr.bf16.gmra.mxu0 %v1175
    %v1561 = vpop.f32.mrf.mxu0
    %v1562 = vadd.f32 %v671, %v1561
    %v1563 = vpop.f32.mrf.mxu0
    %v1564 = vpop.f32.mrf.mxu0
    %v1565 = vadd.f32 %v676, %v1564
    %v1566 = vpop.f32.mrf.mxu0
    %1567 = vmatprep.mubr.bf16.mxu0 %v1179
    %1568 = vmatmul.mubr.bf16.gmra.mxu0 %v1178
    %v1569 = vpop.f32.mrf.mxu0
    %v1570 = vadd.f32 %v681, %v1569
    %v1571 = vpop.f32.mrf.mxu0
    %v1572 = vpop.f32.mrf.mxu0
    %v1573 = vadd.f32 %v686, %v1572
    %v1574 = vpop.f32.mrf.mxu0
    %1575 = vmatprep.mubr.bf16.mxu0 %v1182
    %1576 = vmatmul.mubr.bf16.gmra.mxu0 %v1181
    %v1577 = vpop.f32.mrf.mxu0
    %v1578 = vadd.f32 %v691, %v1577
    %v1579 = vpop.f32.mrf.mxu0
    %v1580 = vpop.f32.mrf.mxu0
    %v1581 = vadd.f32 %v696, %v1580
    %v1582 = vpop.f32.mrf.mxu0
    %1583 = vmatprep.mubr.bf16.mxu0 %v1185
    %1584 = vmatmul.mubr.bf16.gmra.mxu0 %v1184
    %v1585 = vpop.f32.mrf.mxu0
    %v1586 = vadd.f32 %v701, %v1585
    %v1587 = vpop.f32.mrf.mxu0
    %v1588 = vpop.f32.mrf.mxu0
    %v1589 = vadd.f32 %v706, %v1588
    %v1590 = vpop.f32.mrf.mxu0
    %1591 = vmatprep.mubr.bf16.mxu0 %v1188
    %1592 = vmatmul.mubr.bf16.gmra.mxu0 %v1187
    %v1593 = vpop.f32.mrf.mxu0
    %v1594 = vadd.f32 %v711, %v1593
    %v1595 = vpop.f32.mrf.mxu0
    %v1596 = vpop.f32.mrf.mxu0
    %v1597 = vadd.f32 %v716, %v1596
    %v1598 = vpop.f32.mrf.mxu0
    %1599 = vmatprep.mubr.bf16.mxu0 %v1191
    %1600 = vmatmul.mubr.bf16.gmra.mxu0 %v1190
    %v1601 = vpop.f32.mrf.mxu0
    %v1602 = vadd.f32 %v721, %v1601
    %v1603 = vpop.f32.mrf.mxu0
    %v1604 = vpop.f32.mrf.mxu0
    %v1605 = vadd.f32 %v726, %v1604
    %v1606 = vpop.f32.mrf.mxu0
    %1607 = vmatprep.mubr.bf16.mxu0 %v1194
    %1608 = vmatmul.mubr.bf16.gmra.mxu0 %v1193
    %v1609 = vpop.f32.mrf.mxu0
    %v1610 = vadd.f32 %v731, %v1609
    %v1611 = vpop.f32.mrf.mxu0
    %v1612 = vpop.f32.mrf.mxu0
    %v1613 = vadd.f32 %v736, %v1612
    %v1614 = vpop.f32.mrf.mxu0
    %1615 = vmatprep.mubr.bf16.mxu0 %v1197
    %1616 = vmatmul.mubr.bf16.gmra.mxu0 %v1196
    %v1617 = vpop.f32.mrf.mxu0
    %v1618 = vadd.f32 %v741, %v1617
    %v1619 = vpop.f32.mrf.mxu0
    %v1620 = vpop.f32.mrf.mxu0
    %v1621 = vadd.f32 %v746, %v1620
    %v1622 = vpop.f32.mrf.mxu0
    %1623 = vmatprep.mubr.bf16.mxu0 %v1200
    %1624 = vmatmul.mubr.bf16.gmra.mxu0 %v1199
    %v1625 = vpop.f32.mrf.mxu0
    %v1626 = vadd.f32 %v751, %v1625
    %v1627 = vpop.f32.mrf.mxu0
    %v1628 = vpop.f32.mrf.mxu0
    %v1629 = vadd.f32 %v756, %v1628
    %v1630 = vpop.f32.mrf.mxu0
    %1631 = vmatprep.mubr.bf16.mxu0 %v1203
    %1632 = vmatmul.mubr.bf16.gmra.mxu0 %v1202
    %v1633 = vpop.f32.mrf.mxu0
    %v1634 = vadd.f32 %v761, %v1633
    %v1635 = vpop.f32.mrf.mxu0
    %v1636 = vpop.f32.mrf.mxu0
    %v1637 = vadd.f32 %v766, %v1636
    %v1638 = vpop.f32.mrf.mxu0
    %1639 = vmatprep.mubr.bf16.mxu0 %v1206
    %1640 = vmatmul.mubr.bf16.gmra.mxu0 %v1205
    %v1641 = vpop.f32.mrf.mxu0
    %v1642 = vadd.f32 %v771, %v1641
    %v1643 = vpop.f32.mrf.mxu0
    %v1644 = vpop.f32.mrf.mxu0
    %v1645 = vadd.f32 %v776, %v1644
    %v1646 = vpop.f32.mrf.mxu0
    %1647 = vmatprep.mubr.bf16.mxu0 %v1209
    %1648 = vmatmul.mubr.bf16.gmra.mxu0 %v1208
    %v1649 = vpop.f32.mrf.mxu0
    %v1650 = vadd.f32 %v781, %v1649
    %v1651 = vpop.f32.mrf.mxu0
    %v1652 = vpop.f32.mrf.mxu0
    %v1653 = vadd.f32 %v786, %v1652
    %v1654 = vpop.f32.mrf.mxu0
    %1655 = vmatprep.mubr.bf16.mxu0 %v1212
    %1656 = vmatmul.mubr.bf16.gmra.mxu0 %v1211
    %v1657 = vpop.f32.mrf.mxu0
    %v1658 = vadd.f32 %v791, %v1657
    %v1659 = vpop.f32.mrf.mxu0
    %v1660 = vpop.f32.mrf.mxu0
    %v1661 = vadd.f32 %v796, %v1660
    %v1662 = vpop.f32.mrf.mxu0
    %1663 = vdwg.mxu0
    %1664 = vmatprep.subr.bf16.mxu0 0
    %1665 = vmatpush1.bf16.msra.mxu0 0
    %1666 = vmatprep.subr.bf16.mxu0 0
    %1667 = vmatpush1.bf16.msra.mxu0 %v285
    %1668 = vmatprep.subr.bf16.mxu0 0
    %1669 = vmatpush1.bf16.msra.mxu0 %v284
    %1670 = vmatprep.subr.bf16.mxu0 0
    %1671 = vmatpush1.bf16.msra.mxu0 %v283
    %1672 = vmatprep.subr.bf16.mxu0 0
    %1673 = vmatpush1.bf16.msra.mxu0 %v282
    %1674 = vmatprep.subr.bf16.mxu0 0
    %1675 = vmatpush1.bf16.msra.mxu0 %v281
    %1676 = vmatprep.subr.bf16.mxu0 0
    %1677 = vmatpush1.bf16.msra.mxu0 %v280
    %1678 = vmatprep.subr.bf16.mxu0 0
    %1679 = vmatpush1.bf16.msra.mxu0 %v279
    %1680 = vmatprep.subr.bf16.mxu0 0
    %1681 = vmatpush2.bf16.msra.mxu0 0
    %1682 = vmatprep.subr.bf16.mxu0 0
    %1683 = vmatpush2.bf16.msra.mxu0 0
    %1684 = vmatprep.subr.bf16.mxu0 0
    %1685 = vmatpush2.bf16.msra.mxu0 0
    %1686 = vmatprep.subr.bf16.mxu0 0
    %1687 = vmatpush2.bf16.msra.mxu0 0
    %1688 = vmatprep.subr.bf16.mxu0 0
    %1689 = vmatpush2.bf16.msra.mxu0 0
    %1690 = vmatprep.subr.bf16.mxu0 0
    %1691 = vmatpush2.bf16.msra.mxu0 0
    %1692 = vmatprep.subr.bf16.mxu0 0
    %1693 = vmatpush2.bf16.msra.mxu0 0
    %1694 = vmatprep.subr.bf16.mxu0 0
    %1695 = vmatpush2.bf16.msra.mxu0 0
    %1696 = vmatprep.mubr.bf16.mxu0 0
    %1697 = vmatmul.mubr.bf16.gmra.mxu0 %v1280
    %v1698 = vpop.f32.mrf.mxu0
    %v1699 = vadd.f32 %v1410, %v1698
    %v1700 = vpop.f32.mrf.mxu0
    %v1701 = vpop.f32.mrf.mxu0
    %v1702 = vadd.f32 %v1413, %v1701
    %v1703 = vpop.f32.mrf.mxu0
    %1704 = vmatprep.mubr.bf16.mxu0 0
    %1705 = vmatmul.mubr.bf16.gmra.mxu0 %v1283
    %v1706 = vpop.f32.mrf.mxu0
    %v1707 = vadd.f32 %v1418, %v1706
    %v1708 = vpop.f32.mrf.mxu0
    %v1709 = vpop.f32.mrf.mxu0
    %v1710 = vadd.f32 %v1421, %v1709
    %v1711 = vpop.f32.mrf.mxu0
    %1712 = vmatprep.mubr.bf16.mxu0 0
    %1713 = vmatmul.mubr.bf16.gmra.mxu0 %v1286
    %v1714 = vpop.f32.mrf.mxu0
    %v1715 = vadd.f32 %v1426, %v1714
    %v1716 = vpop.f32.mrf.mxu0
    %v1717 = vpop.f32.mrf.mxu0
    %v1718 = vadd.f32 %v1429, %v1717
    %v1719 = vpop.f32.mrf.mxu0
    %1720 = vmatprep.mubr.bf16.mxu0 0
    %1721 = vmatmul.mubr.bf16.gmra.mxu0 %v1289
    %v1722 = vpop.f32.mrf.mxu0
    %v1723 = vadd.f32 %v1434, %v1722
    %v1724 = vpop.f32.mrf.mxu0
    %v1725 = vpop.f32.mrf.mxu0
    %v1726 = vadd.f32 %v1437, %v1725
    %v1727 = vpop.f32.mrf.mxu0
    %1728 = vmatprep.mubr.bf16.mxu0 0
    %1729 = vmatmul.mubr.bf16.gmra.mxu0 %v1292
    %v1730 = vpop.f32.mrf.mxu0
    %v1731 = vadd.f32 %v1442, %v1730
    %v1732 = vpop.f32.mrf.mxu0
    %v1733 = vpop.f32.mrf.mxu0
    %v1734 = vadd.f32 %v1445, %v1733
    %v1735 = vpop.f32.mrf.mxu0
    %1736 = vmatprep.mubr.bf16.mxu0 0
    %1737 = vmatmul.mubr.bf16.gmra.mxu0 %v1295
    %v1738 = vpop.f32.mrf.mxu0
    %v1739 = vadd.f32 %v1450, %v1738
    %v1740 = vpop.f32.mrf.mxu0
    %v1741 = vpop.f32.mrf.mxu0
    %v1742 = vadd.f32 %v1453, %v1741
    %v1743 = vpop.f32.mrf.mxu0
    %1744 = vmatprep.mubr.bf16.mxu0 0
    %1745 = vmatmul.mubr.bf16.gmra.mxu0 %v1298
    %v1746 = vpop.f32.mrf.mxu0
    %v1747 = vadd.f32 %v1458, %v1746
    %v1748 = vpop.f32.mrf.mxu0
    %v1749 = vpop.f32.mrf.mxu0
    %v1750 = vadd.f32 %v1461, %v1749
    %v1751 = vpop.f32.mrf.mxu0
    %1752 = vmatprep.mubr.bf16.mxu0 0
    %1753 = vmatmul.mubr.bf16.gmra.mxu0 %v1301
    %v1754 = vpop.f32.mrf.mxu0
    %v1755 = vadd.f32 %v1466, %v1754
    %v1756 = vpop.f32.mrf.mxu0
    %v1757 = vpop.f32.mrf.mxu0
    %v1758 = vadd.f32 %v1469, %v1757
    %v1759 = vpop.f32.mrf.mxu0
    %1760 = vmatprep.mubr.bf16.mxu0 0
    %1761 = vmatmul.mubr.bf16.gmra.mxu0 %v1304
    %v1762 = vpop.f32.mrf.mxu0
    %v1763 = vadd.f32 %v1474, %v1762
    %v1764 = vpop.f32.mrf.mxu0
    %v1765 = vpop.f32.mrf.mxu0
    %v1766 = vadd.f32 %v1477, %v1765
    %v1767 = vpop.f32.mrf.mxu0
    %1768 = vmatprep.mubr.bf16.mxu0 0
    %1769 = vmatmul.mubr.bf16.gmra.mxu0 %v1307
    %v1770 = vpop.f32.mrf.mxu0
    %v1771 = vadd.f32 %v1482, %v1770
    %v1772 = vpop.f32.mrf.mxu0
    %v1773 = vpop.f32.mrf.mxu0
    %v1774 = vadd.f32 %v1485, %v1773
    %v1775 = vpop.f32.mrf.mxu0
    %1776 = vmatprep.mubr.bf16.mxu0 0
    %1777 = vmatmul.mubr.bf16.gmra.mxu0 %v1310
    %v1778 = vpop.f32.mrf.mxu0
    %v1779 = vadd.f32 %v1490, %v1778
    %v1780 = vpop.f32.mrf.mxu0
    %v1781 = vpop.f32.mrf.mxu0
    %v1782 = vadd.f32 %v1493, %v1781
    %v1783 = vpop.f32.mrf.mxu0
    %1784 = vmatprep.mubr.bf16.mxu0 0
    %1785 = vmatmul.mubr.bf16.gmra.mxu0 %v1313
    %v1786 = vpop.f32.mrf.mxu0
    %v1787 = vadd.f32 %v1498, %v1786
    %v1788 = vpop.f32.mrf.mxu0
    %v1789 = vpop.f32.mrf.mxu0
    %v1790 = vadd.f32 %v1501, %v1789
    %v1791 = vpop.f32.mrf.mxu0
    %1792 = vmatprep.mubr.bf16.mxu0 0
    %1793 = vmatmul.mubr.bf16.gmra.mxu0 %v1316
    %v1794 = vpop.f32.mrf.mxu0
    %v1795 = vadd.f32 %v1506, %v1794
    %v1796 = vpop.f32.mrf.mxu0
    %v1797 = vpop.f32.mrf.mxu0
    %v1798 = vadd.f32 %v1509, %v1797
    %v1799 = vpop.f32.mrf.mxu0
    %1800 = vmatprep.mubr.bf16.mxu0 0
    %1801 = vmatmul.mubr.bf16.gmra.mxu0 %v1319
    %v1802 = vpop.f32.mrf.mxu0
    %v1803 = vadd.f32 %v1514, %v1802
    %v1804 = vpop.f32.mrf.mxu0
    %v1805 = vpop.f32.mrf.mxu0
    %v1806 = vadd.f32 %v1517, %v1805
    %v1807 = vpop.f32.mrf.mxu0
    %1808 = vmatprep.mubr.bf16.mxu0 0
    %1809 = vmatmul.mubr.bf16.gmra.mxu0 %v1322
    %v1810 = vpop.f32.mrf.mxu0
    %v1811 = vadd.f32 %v1522, %v1810
    %v1812 = vpop.f32.mrf.mxu0
    %v1813 = vpop.f32.mrf.mxu0
    %v1814 = vadd.f32 %v1525, %v1813
    %v1815 = vpop.f32.mrf.mxu0
    %1816 = vmatprep.mubr.bf16.mxu0 0
    %1817 = vmatmul.mubr.bf16.gmra.mxu0 %v1325
    %v1818 = vpop.f32.mrf.mxu0
    %v1819 = vadd.f32 %v1530, %v1818
    %v1820 = vpop.f32.mrf.mxu0
    %v1821 = vpop.f32.mrf.mxu0
    %v1822 = vadd.f32 %v1533, %v1821
    %v1823 = vpop.f32.mrf.mxu0
    %1824 = vmatprep.mubr.bf16.mxu0 0
    %1825 = vmatmul.mubr.bf16.gmra.mxu0 %v1328
    %v1826 = vpop.f32.mrf.mxu0
    %v1827 = vadd.f32 %v1538, %v1826
    %v1828 = vpop.f32.mrf.mxu0
    %v1829 = vpop.f32.mrf.mxu0
    %v1830 = vadd.f32 %v1541, %v1829
    %v1831 = vpop.f32.mrf.mxu0
    %1832 = vmatprep.mubr.bf16.mxu0 0
    %1833 = vmatmul.mubr.bf16.gmra.mxu0 %v1331
    %v1834 = vpop.f32.mrf.mxu0
    %v1835 = vadd.f32 %v1546, %v1834
    %v1836 = vpop.f32.mrf.mxu0
    %v1837 = vpop.f32.mrf.mxu0
    %v1838 = vadd.f32 %v1549, %v1837
    %v1839 = vpop.f32.mrf.mxu0
    %1840 = vmatprep.mubr.bf16.mxu0 0
    %1841 = vmatmul.mubr.bf16.gmra.mxu0 %v1334
    %v1842 = vpop.f32.mrf.mxu0
    %v1843 = vadd.f32 %v1554, %v1842
    %v1844 = vpop.f32.mrf.mxu0
    %v1845 = vpop.f32.mrf.mxu0
    %v1846 = vadd.f32 %v1557, %v1845
    %v1847 = vpop.f32.mrf.mxu0
    %1848 = vmatprep.mubr.bf16.mxu0 0
    %1849 = vmatmul.mubr.bf16.gmra.mxu0 %v1337
    %v1850 = vpop.f32.mrf.mxu0
    %v1851 = vadd.f32 %v1562, %v1850
    %v1852 = vpop.f32.mrf.mxu0
    %v1853 = vpop.f32.mrf.mxu0
    %v1854 = vadd.f32 %v1565, %v1853
    %v1855 = vpop.f32.mrf.mxu0
    %1856 = vmatprep.mubr.bf16.mxu0 0
    %1857 = vmatmul.mubr.bf16.gmra.mxu0 %v1340
    %v1858 = vpop.f32.mrf.mxu0
    %v1859 = vadd.f32 %v1570, %v1858
    %v1860 = vpop.f32.mrf.mxu0
    %v1861 = vpop.f32.mrf.mxu0
    %v1862 = vadd.f32 %v1573, %v1861
    %v1863 = vpop.f32.mrf.mxu0
    %1864 = vmatprep.mubr.bf16.mxu0 0
    %1865 = vmatmul.mubr.bf16.gmra.mxu0 %v1343
    %v1866 = vpop.f32.mrf.mxu0
    %v1867 = vadd.f32 %v1578, %v1866
    %v1868 = vpop.f32.mrf.mxu0
    %v1869 = vpop.f32.mrf.mxu0
    %v1870 = vadd.f32 %v1581, %v1869
    %v1871 = vpop.f32.mrf.mxu0
    %1872 = vmatprep.mubr.bf16.mxu0 0
    %1873 = vmatmul.mubr.bf16.gmra.mxu0 %v1346
    %v1874 = vpop.f32.mrf.mxu0
    %v1875 = vadd.f32 %v1586, %v1874
    %v1876 = vpop.f32.mrf.mxu0
    %v1877 = vpop.f32.mrf.mxu0
    %v1878 = vadd.f32 %v1589, %v1877
    %v1879 = vpop.f32.mrf.mxu0
    %1880 = vmatprep.mubr.bf16.mxu0 0
    %1881 = vmatmul.mubr.bf16.gmra.mxu0 %v1349
    %v1882 = vpop.f32.mrf.mxu0
    %v1883 = vadd.f32 %v1594, %v1882
    %v1884 = vpop.f32.mrf.mxu0
    %v1885 = vpop.f32.mrf.mxu0
    %v1886 = vadd.f32 %v1597, %v1885
    %v1887 = vpop.f32.mrf.mxu0
    %1888 = vmatprep.mubr.bf16.mxu0 0
    %1889 = vmatmul.mubr.bf16.gmra.mxu0 %v1352
    %v1890 = vpop.f32.mrf.mxu0
    %v1891 = vadd.f32 %v1602, %v1890
    %v1892 = vpop.f32.mrf.mxu0
    %v1893 = vpop.f32.mrf.mxu0
    %v1894 = vadd.f32 %v1605, %v1893
    %v1895 = vpop.f32.mrf.mxu0
    %1896 = vmatprep.mubr.bf16.mxu0 0
    %1897 = vmatmul.mubr.bf16.gmra.mxu0 %v1355
    %v1898 = vpop.f32.mrf.mxu0
    %v1899 = vadd.f32 %v1610, %v1898
    %v1900 = vpop.f32.mrf.mxu0
    %v1901 = vpop.f32.mrf.mxu0
    %v1902 = vadd.f32 %v1613, %v1901
    %v1903 = vpop.f32.mrf.mxu0
    %1904 = vmatprep.mubr.bf16.mxu0 0
    %1905 = vmatmul.mubr.bf16.gmra.mxu0 %v1358
    %v1906 = vpop.f32.mrf.mxu0
    %v1907 = vadd.f32 %v1618, %v1906
    %v1908 = vpop.f32.mrf.mxu0
    %v1909 = vpop.f32.mrf.mxu0
    %v1910 = vadd.f32 %v1621, %v1909
    %v1911 = vpop.f32.mrf.mxu0
    %1912 = vmatprep.mubr.bf16.mxu0 0
    %1913 = vmatmul.mubr.bf16.gmra.mxu0 %v1361
    %v1914 = vpop.f32.mrf.mxu0
    %v1915 = vadd.f32 %v1626, %v1914
    %v1916 = vpop.f32.mrf.mxu0
    %v1917 = vpop.f32.mrf.mxu0
    %v1918 = vadd.f32 %v1629, %v1917
    %v1919 = vpop.f32.mrf.mxu0
    %1920 = vmatprep.mubr.bf16.mxu0 0
    %1921 = vmatmul.mubr.bf16.gmra.mxu0 %v1364
    %v1922 = vpop.f32.mrf.mxu0
    %v1923 = vadd.f32 %v1634, %v1922
    %v1924 = vpop.f32.mrf.mxu0
    %v1925 = vpop.f32.mrf.mxu0
    %v1926 = vadd.f32 %v1637, %v1925
    %v1927 = vpop.f32.mrf.mxu0
    %1928 = vmatprep.mubr.bf16.mxu0 0
    %1929 = vmatmul.mubr.bf16.gmra.mxu0 %v1367
    %v1930 = vpop.f32.mrf.mxu0
    %v1931 = vadd.f32 %v1642, %v1930
    %v1932 = vpop.f32.mrf.mxu0
    %v1933 = vpop.f32.mrf.mxu0
    %v1934 = vadd.f32 %v1645, %v1933
    %v1935 = vpop.f32.mrf.mxu0
    %1936 = vmatprep.mubr.bf16.mxu0 0
    %1937 = vmatmul.mubr.bf16.gmra.mxu0 %v1370
    %v1938 = vpop.f32.mrf.mxu0
    %v1939 = vadd.f32 %v1650, %v1938
    %v1940 = vpop.f32.mrf.mxu0
    %v1941 = vpop.f32.mrf.mxu0
    %v1942 = vadd.f32 %v1653, %v1941
    %v1943 = vpop.f32.mrf.mxu0
    %1944 = vmatprep.mubr.bf16.mxu0 0
    %1945 = vmatmul.mubr.bf16.gmra.mxu0 %v1373
    %v1946 = vpop.f32.mrf.mxu0
    %v1947 = vadd.f32 %v1658, %v1946
    %v1948 = vpop.f32.mrf.mxu0
    %v1949 = vpop.f32.mrf.mxu0
    %v1950 = vadd.f32 %v1661, %v1949
    %v1951 = vpop.f32.mrf.mxu0
    %1952 = vdwg.mxu0
    %v1953 = vmax.f32 %v1699, 0.0
    %v1954 = vmax.f32 %v1702, 0.0
    %v1955 = vmax.f32 %v1707, 0.0
    %v1956 = vmax.f32 %v1710, 0.0
    %v1957 = vmax.f32 %v1715, 0.0
    %v1958 = vmax.f32 %v1718, 0.0
    %v1959 = vmax.f32 %v1723, 0.0
    %v1960 = vmax.f32 %v1726, 0.0
    %v1961 = vmax.f32 %v1731, 0.0
    %v1962 = vmax.f32 %v1734, 0.0
    %v1963 = vmax.f32 %v1739, 0.0
    %v1964 = vmax.f32 %v1742, 0.0
    %v1965 = vmax.f32 %v1747, 0.0
    %v1966 = vmax.f32 %v1750, 0.0
    %v1967 = vmax.f32 %v1755, 0.0
    %v1968 = vmax.f32 %v1758, 0.0
    %v1969 = vmax.f32 %v1763, 0.0
    %v1970 = vmax.f32 %v1766, 0.0
    %v1971 = vmax.f32 %v1771, 0.0
    %v1972 = vmax.f32 %v1774, 0.0
    %v1973 = vmax.f32 %v1779, 0.0
    %v1974 = vmax.f32 %v1782, 0.0
    %v1975 = vmax.f32 %v1787, 0.0
    %v1976 = vmax.f32 %v1790, 0.0
    %v1977 = vmax.f32 %v1795, 0.0
    %v1978 = vmax.f32 %v1798, 0.0
    %v1979 = vmax.f32 %v1803, 0.0
    %v1980 = vmax.f32 %v1806, 0.0
    %v1981 = vmax.f32 %v1811, 0.0
    %v1982 = vmax.f32 %v1814, 0.0
    %v1983 = vmax.f32 %v1819, 0.0
    %v1984 = vmax.f32 %v1822, 0.0
    %v1985 = vmax.f32 %v1827, 0.0
    %v1986 = vmax.f32 %v1830, 0.0
    %v1987 = vmax.f32 %v1835, 0.0
    %v1988 = vmax.f32 %v1838, 0.0
    %v1989 = vmax.f32 %v1843, 0.0
    %v1990 = vmax.f32 %v1846, 0.0
    %v1991 = vmax.f32 %v1851, 0.0
    %v1992 = vmax.f32 %v1854, 0.0
    %v1993 = vmax.f32 %v1859, 0.0
    %v1994 = vmax.f32 %v1862, 0.0
    %v1995 = vmax.f32 %v1867, 0.0
    %v1996 = vmax.f32 %v1870, 0.0
    %v1997 = vmax.f32 %v1875, 0.0
    %v1998 = vmax.f32 %v1878, 0.0
    %v1999 = vmax.f32 %v1883, 0.0
    %v2000 = vmax.f32 %v1886, 0.0
    %v2001 = vmax.f32 %v1891, 0.0
    %v2002 = vmax.f32 %v1894, 0.0
    %v2003 = vmax.f32 %v1899, 0.0
    %v2004 = vmax.f32 %v1902, 0.0
    %v2005 = vmax.f32 %v1907, 0.0
    %v2006 = vmax.f32 %v1910, 0.0
    %v2007 = vmax.f32 %v1915, 0.0
    %v2008 = vmax.f32 %v1918, 0.0
    %v2009 = vmax.f32 %v1923, 0.0
    %v2010 = vmax.f32 %v1926, 0.0
    %v2011 = vmax.f32 %v1931, 0.0
    %v2012 = vmax.f32 %v1934, 0.0
    %v2013 = vmax.f32 %v1939, 0.0
    %v2014 = vmax.f32 %v1942, 0.0
    %v2015 = vmax.f32 %v1947, 0.0
    %v2016 = vmax.f32 %v1950, 0.0
    %v2017 = vld [vmem:[%s3] sm:$0xff]
    %v2018 = vld [vmem:[%s3 + $0x8] sm:$0xff]
    %v2019 = vld [vmem:[%s3 + $0x10] sm:$0xff]
    %v2020 = vld [vmem:[%s3 + $0x18] sm:$0xff]
    %v2021 = vld [vmem:[%s3 + $0x20] sm:$0xff]
    %v2022 = vld [vmem:[%s3 + $0x28] sm:$0xff]
    %v2023 = vld [vmem:[%s3 + $0x30] sm:$0xff]
    %v2024 = vld [vmem:[%s3 + $0x38] sm:$0xff]
    %v2025 = vld [vmem:[%s3 + $0x40] sm:$0xff]
    %v2026 = vld [vmem:[%s3 + $0x48] sm:$0xff]
    %v2027 = vld [vmem:[%s3 + $0x50] sm:$0xff]
    %v2028 = vld [vmem:[%s3 + $0x58] sm:$0xff]
    %v2029 = vld [vmem:[%s3 + $0x60] sm:$0xff]
    %v2030 = vld [vmem:[%s3 + $0x68] sm:$0xff]
    %v2031 = vld [vmem:[%s3 + $0x70] sm:$0xff]
    %v2032 = vld [vmem:[%s3 + $0x78] sm:$0xff]
    %v2033 = vld [vmem:[%s3 + $0x80] sm:$0xff]
    %v2034 = vld [vmem:[%s3 + $0x88] sm:$0xff]
    %v2035 = vld [vmem:[%s3 + $0x90] sm:$0xff]
    %v2036 = vld [vmem:[%s3 + $0x98] sm:$0xff]
    %v2037 = vld [vmem:[%s3 + $0xa0] sm:$0xff]
    %v2038 = vld [vmem:[%s3 + $0xa8] sm:$0xff]
    %v2039 = vld [vmem:[%s3 + $0xb0] sm:$0xff]
    %v2040 = vld [vmem:[%s3 + $0xb8] sm:$0xff]
    %v2041 = vld [vmem:[%s3 + $0xc0] sm:$0xff]
    %v2042 = vld [vmem:[%s3 + $0xc8] sm:$0xff]
    %v2043 = vld [vmem:[%s3 + $0xd0] sm:$0xff]
    %v2044 = vld [vmem:[%s3 + $0xd8] sm:$0xff]
    %v2045 = vld [vmem:[%s3 + $0xe0] sm:$0xff]
    %v2046 = vld [vmem:[%s3 + $0xe8] sm:$0xff]
    %v2047 = vld [vmem:[%s3 + $0xf0] sm:$0xff]
    %v2048 = vld [vmem:[%s3 + $0xf8] sm:$0xff]
    %v2049 = vld [vmem:[%s3 + $0x100] sm:$0xff]
    %v2050 = vld [vmem:[%s3 + $0x108] sm:$0xff]
    %v2051 = vld [vmem:[%s3 + $0x110] sm:$0xff]
    %v2052 = vld [vmem:[%s3 + $0x118] sm:$0xff]
    %v2053 = vld [vmem:[%s3 + $0x120] sm:$0xff]
    %v2054 = vld [vmem:[%s3 + $0x128] sm:$0xff]
    %v2055 = vld [vmem:[%s3 + $0x130] sm:$0xff]
    %v2056 = vld [vmem:[%s3 + $0x138] sm:$0xff]
    %v2057 = vld [vmem:[%s3 + $0x140] sm:$0xff]
    %v2058 = vld [vmem:[%s3 + $0x148] sm:$0xff]
    %v2059 = vld [vmem:[%s3 + $0x150] sm:$0xff]
    %v2060 = vld [vmem:[%s3 + $0x158] sm:$0xff]
    %v2061 = vld [vmem:[%s3 + $0x160] sm:$0xff]
    %v2062 = vld [vmem:[%s3 + $0x168] sm:$0xff]
    %v2063 = vld [vmem:[%s3 + $0x170] sm:$0xff]
    %v2064 = vld [vmem:[%s3 + $0x178] sm:$0xff]
    %v2065 = vld [vmem:[%s3 + $0x180] sm:$0xff]
    %v2066 = vld [vmem:[%s3 + $0x188] sm:$0xff]
    %v2067 = vld [vmem:[%s3 + $0x190] sm:$0xff]
    %v2068 = vld [vmem:[%s3 + $0x198] sm:$0xff]
    %v2069 = vld [vmem:[%s3 + $0x1a0] sm:$0xff]
    %v2070 = vld [vmem:[%s3 + $0x1a8] sm:$0xff]
    %v2071 = vld [vmem:[%s3 + $0x1b0] sm:$0xff]
    %v2072 = vld [vmem:[%s3 + $0x1b8] sm:$0xff]
    %v2073 = vld [vmem:[%s3 + $0x1c0] sm:$0xff]
    %v2074 = vld [vmem:[%s3 + $0x1c8] sm:$0xff]
    %v2075 = vld [vmem:[%s3 + $0x1d0] sm:$0xff]
    %v2076 = vld [vmem:[%s3 + $0x1d8] sm:$0xff]
    %v2077 = vld [vmem:[%s3 + $0x1e0] sm:$0xff]
    %v2078 = vld [vmem:[%s3 + $0x1e8] sm:$0xff]
    %v2079 = vld [vmem:[%s3 + $0x1f0] sm:$0xff]
    %v2080 = vld [vmem:[%s3 + $0x1f8] sm:$0xff]
    %v2081 = vpack.c.bf16 %v1954, %v1953
    %v2082 = vpack.c.bf16 %v1956, %v1955
    %v2083 = vpack.c.bf16 %v1958, %v1957
    %v2084 = vpack.c.bf16 %v1960, %v1959
    %v2085 = vpack.c.bf16 %v1962, %v1961
    %v2086 = vpack.c.bf16 %v1964, %v1963
    %v2087 = vpack.c.bf16 %v1966, %v1965
    %v2088 = vpack.c.bf16 %v1968, %v1967
    %v2089 = vpack.c.bf16 %v1970, %v1969
    %v2090 = vpack.c.bf16 %v1972, %v1971
    %v2091 = vpack.c.bf16 %v1974, %v1973
    %v2092 = vpack.c.bf16 %v1976, %v1975
    %v2093 = vpack.c.bf16 %v1978, %v1977
    %v2094 = vpack.c.bf16 %v1980, %v1979
    %v2095 = vpack.c.bf16 %v1982, %v1981
    %v2096 = vpack.c.bf16 %v1984, %v1983
    %v2097 = vpack.c.bf16 %v1986, %v1985
    %v2098 = vpack.c.bf16 %v1988, %v1987
    %v2099 = vpack.c.bf16 %v1990, %v1989
    %v2100 = vpack.c.bf16 %v1992, %v1991
    %v2101 = vpack.c.bf16 %v1994, %v1993
    %v2102 = vpack.c.bf16 %v1996, %v1995
    %v2103 = vpack.c.bf16 %v1998, %v1997
    %v2104 = vpack.c.bf16 %v2000, %v1999
    %v2105 = vpack.c.bf16 %v2002, %v2001
    %v2106 = vpack.c.bf16 %v2004, %v2003
    %v2107 = vpack.c.bf16 %v2006, %v2005
    %v2108 = vpack.c.bf16 %v2008, %v2007
    %v2109 = vpack.c.bf16 %v2010, %v2009
    %v2110 = vpack.c.bf16 %v2012, %v2011
    %v2111 = vpack.c.bf16 %v2014, %v2013
    %v2112 = vpack.c.bf16 %v2016, %v2015
    %v2113 = vld [vmem:[%s4] sm:$0xff]
    %v2114 = vld [vmem:[%s4 + $0x8] sm:$0xff]
    %v2115 = vld [vmem:[%s4 + $0x10] sm:$0xff]
    %v2116 = vld [vmem:[%s4 + $0x18] sm:$0xff]
    %v2117 = vld [vmem:[%s4 + $0x20] sm:$0xff]
    %v2118 = vld [vmem:[%s4 + $0x28] sm:$0xff]
    %v2119 = vld [vmem:[%s4 + $0x30] sm:$0xff]
    %v2120 = vld [vmem:[%s4 + $0x38] sm:$0xff]
    %v2121 = vld [vmem:[%s4 + $0x40] sm:$0xff]
    %v2122 = vld [vmem:[%s4 + $0x48] sm:$0xff]
    %v2123 = vld [vmem:[%s4 + $0x50] sm:$0xff]
    %v2124 = vld [vmem:[%s4 + $0x58] sm:$0xff]
    %v2125 = vld [vmem:[%s4 + $0x60] sm:$0xff]
    %v2126 = vld [vmem:[%s4 + $0x68] sm:$0xff]
    %v2127 = vld [vmem:[%s4 + $0x70] sm:$0xff]
    %v2128 = vld [vmem:[%s4 + $0x78] sm:$0xff]
    %v2129 = vld [vmem:[%s4 + $0x80] sm:$0xff]
    %v2130 = vld [vmem:[%s4 + $0x88] sm:$0xff]
    %v2131 = vld [vmem:[%s4 + $0x90] sm:$0xff]
    %v2132 = vld [vmem:[%s4 + $0x98] sm:$0xff]
    %v2133 = vld [vmem:[%s4 + $0xa0] sm:$0xff]
    %v2134 = vld [vmem:[%s4 + $0xa8] sm:$0xff]
    %v2135 = vld [vmem:[%s4 + $0xb0] sm:$0xff]
    %v2136 = vld [vmem:[%s4 + $0xb8] sm:$0xff]
    %v2137 = vld [vmem:[%s4 + $0xc0] sm:$0xff]
    %v2138 = vld [vmem:[%s4 + $0xc8] sm:$0xff]
    %v2139 = vld [vmem:[%s4 + $0xd0] sm:$0xff]
    %v2140 = vld [vmem:[%s4 + $0xd8] sm:$0xff]
    %v2141 = vld [vmem:[%s4 + $0xe0] sm:$0xff]
    %v2142 = vld [vmem:[%s4 + $0xe8] sm:$0xff]
    %v2143 = vld [vmem:[%s4 + $0xf0] sm:$0xff]
    %v2144 = vld [vmem:[%s4 + $0xf8] sm:$0xff]
    %2146 = vset.pattern.permute.xlu0 0
    %2147 = vperm.xlu0 %2146, %v2113
    %v2148 = vpop.permute.xlu0 %2147
    %2151 = vset.pattern.permute.xlu0 0
    %2152 = vperm.xlu0 %2151, %v2114
    %v2153 = vpop.permute.xlu0 %2152
    %2156 = vset.pattern.permute.xlu0 0
    %2157 = vperm.xlu0 %2156, %v2115
    %v2158 = vpop.permute.xlu0 %2157
    %2161 = vset.pattern.permute.xlu0 0
    %2162 = vperm.xlu0 %2161, %v2116
    %v2163 = vpop.permute.xlu0 %2162
    %2166 = vset.pattern.permute.xlu0 0
    %2167 = vperm.xlu0 %2166, %v2117
    %v2168 = vpop.permute.xlu0 %2167
    %2171 = vset.pattern.permute.xlu0 0
    %2172 = vperm.xlu0 %2171, %v2118
    %v2173 = vpop.permute.xlu0 %2172
    %2176 = vset.pattern.permute.xlu0 0
    %2177 = vperm.xlu0 %2176, %v2119
    %v2178 = vpop.permute.xlu0 %2177
    %2181 = vset.pattern.permute.xlu0 0
    %2182 = vperm.xlu0 %2181, %v2120
    %v2183 = vpop.permute.xlu0 %2182
    %2186 = vset.pattern.permute.xlu0 0
    %2187 = vperm.xlu0 %2186, %v2121
    %v2188 = vpop.permute.xlu0 %2187
    %2191 = vset.pattern.permute.xlu0 0
    %2192 = vperm.xlu0 %2191, %v2122
    %v2193 = vpop.permute.xlu0 %2192
    %2196 = vset.pattern.permute.xlu0 0
    %2197 = vperm.xlu0 %2196, %v2123
    %v2198 = vpop.permute.xlu0 %2197
    %2201 = vset.pattern.permute.xlu0 0
    %2202 = vperm.xlu0 %2201, %v2124
    %v2203 = vpop.permute.xlu0 %2202
    %2206 = vset.pattern.permute.xlu0 0
    %2207 = vperm.xlu0 %2206, %v2125
    %v2208 = vpop.permute.xlu0 %2207
    %2211 = vset.pattern.permute.xlu0 0
    %2212 = vperm.xlu0 %2211, %v2126
    %v2213 = vpop.permute.xlu0 %2212
    %2216 = vset.pattern.permute.xlu0 0
    %2217 = vperm.xlu0 %2216, %v2127
    %v2218 = vpop.permute.xlu0 %2217
    %2221 = vset.pattern.permute.xlu0 0
    %2222 = vperm.xlu0 %2221, %v2128
    %v2223 = vpop.permute.xlu0 %2222
    %2226 = vset.pattern.permute.xlu0 0
    %2227 = vperm.xlu0 %2226, %v2129
    %v2228 = vpop.permute.xlu0 %2227
    %2231 = vset.pattern.permute.xlu0 0
    %2232 = vperm.xlu0 %2231, %v2130
    %v2233 = vpop.permute.xlu0 %2232
    %2236 = vset.pattern.permute.xlu0 0
    %2237 = vperm.xlu0 %2236, %v2131
    %v2238 = vpop.permute.xlu0 %2237
    %2241 = vset.pattern.permute.xlu0 0
    %2242 = vperm.xlu0 %2241, %v2132
    %v2243 = vpop.permute.xlu0 %2242
    %2246 = vset.pattern.permute.xlu0 0
    %2247 = vperm.xlu0 %2246, %v2133
    %v2248 = vpop.permute.xlu0 %2247
    %2251 = vset.pattern.permute.xlu0 0
    %2252 = vperm.xlu0 %2251, %v2134
    %v2253 = vpop.permute.xlu0 %2252
    %2256 = vset.pattern.permute.xlu0 0
    %2257 = vperm.xlu0 %2256, %v2135
    %v2258 = vpop.permute.xlu0 %2257
    %2261 = vset.pattern.permute.xlu0 0
    %2262 = vperm.xlu0 %2261, %v2136
    %v2263 = vpop.permute.xlu0 %2262
    %2266 = vset.pattern.permute.xlu0 0
    %2267 = vperm.xlu0 %2266, %v2137
    %v2268 = vpop.permute.xlu0 %2267
    %2271 = vset.pattern.permute.xlu0 0
    %2272 = vperm.xlu0 %2271, %v2138
    %v2273 = vpop.permute.xlu0 %2272
    %2276 = vset.pattern.permute.xlu0 0
    %2277 = vperm.xlu0 %2276, %v2139
    %v2278 = vpop.permute.xlu0 %2277
    %2281 = vset.pattern.permute.xlu0 0
    %2282 = vperm.xlu0 %2281, %v2140
    %v2283 = vpop.permute.xlu0 %2282
    %2286 = vset.pattern.permute.xlu0 0
    %2287 = vperm.xlu0 %2286, %v2141
    %v2288 = vpop.permute.xlu0 %2287
    %2291 = vset.pattern.permute.xlu0 0
    %2292 = vperm.xlu0 %2291, %v2142
    %v2293 = vpop.permute.xlu0 %2292
    %2296 = vset.pattern.permute.xlu0 0
    %2297 = vperm.xlu0 %2296, %v2143
    %v2298 = vpop.permute.xlu0 %2297
    %2301 = vset.pattern.permute.xlu0 0
    %2302 = vperm.xlu0 %2301, %v2144
    %v2303 = vpop.permute.xlu0 %2302
    %v2369 = vunpack.c.l.b16 %v2017
    %v2370 = vunpack.c.h.b16 %v2017
    %v2371 = vunpack.c.l.b16 %v2018
    %v2372 = vunpack.c.h.b16 %v2018
    %v2373 = vunpack.c.l.b16 %v2019
    %v2374 = vunpack.c.h.b16 %v2019
    %v2375 = vunpack.c.l.b16 %v2020
    %v2376 = vunpack.c.h.b16 %v2020
    %v2377 = vunpack.c.l.b16 %v2021
    %v2378 = vunpack.c.h.b16 %v2021
    %v2379 = vunpack.c.l.b16 %v2022
    %v2380 = vunpack.c.h.b16 %v2022
    %v2381 = vunpack.c.l.b16 %v2023
    %v2382 = vunpack.c.h.b16 %v2023
    %v2383 = vunpack.c.l.b16 %v2024
    %v2384 = vunpack.c.h.b16 %v2024
    %v2385 = vunpack.c.l.b16 %v2025
    %v2386 = vunpack.c.h.b16 %v2025
    %v2387 = vunpack.c.l.b16 %v2026
    %v2388 = vunpack.c.h.b16 %v2026
    %v2389 = vunpack.c.l.b16 %v2027
    %v2390 = vunpack.c.h.b16 %v2027
    %v2391 = vunpack.c.l.b16 %v2028
    %v2392 = vunpack.c.h.b16 %v2028
    %v2393 = vunpack.c.l.b16 %v2029
    %v2394 = vunpack.c.h.b16 %v2029
    %v2395 = vunpack.c.l.b16 %v2030
    %v2396 = vunpack.c.h.b16 %v2030
    %v2397 = vunpack.c.l.b16 %v2031
    %v2398 = vunpack.c.h.b16 %v2031
    %v2399 = vunpack.c.l.b16 %v2032
    %v2400 = vunpack.c.h.b16 %v2032
    %v2401 = vunpack.c.l.b16 %v2033
    %v2402 = vunpack.c.h.b16 %v2033
    %v2403 = vunpack.c.l.b16 %v2034
    %v2404 = vunpack.c.h.b16 %v2034
    %v2405 = vunpack.c.l.b16 %v2035
    %v2406 = vunpack.c.h.b16 %v2035
    %v2407 = vunpack.c.l.b16 %v2036
    %v2408 = vunpack.c.h.b16 %v2036
    %v2409 = vunpack.c.l.b16 %v2037
    %v2410 = vunpack.c.h.b16 %v2037
    %v2411 = vunpack.c.l.b16 %v2038
    %v2412 = vunpack.c.h.b16 %v2038
    %v2413 = vunpack.c.l.b16 %v2039
    %v2414 = vunpack.c.h.b16 %v2039
    %v2415 = vunpack.c.l.b16 %v2040
    %v2416 = vunpack.c.h.b16 %v2040
    %v2417 = vunpack.c.l.b16 %v2041
    %v2418 = vunpack.c.h.b16 %v2041
    %v2419 = vunpack.c.l.b16 %v2042
    %v2420 = vunpack.c.h.b16 %v2042
    %v2421 = vunpack.c.l.b16 %v2043
    %v2422 = vunpack.c.h.b16 %v2043
    %v2423 = vunpack.c.l.b16 %v2044
    %v2424 = vunpack.c.h.b16 %v2044
    %v2425 = vunpack.c.l.b16 %v2045
    %v2426 = vunpack.c.h.b16 %v2045
    %v2427 = vunpack.c.l.b16 %v2046
    %v2428 = vunpack.c.h.b16 %v2046
    %v2429 = vunpack.c.l.b16 %v2047
    %v2430 = vunpack.c.h.b16 %v2047
    %v2431 = vunpack.c.l.b16 %v2048
    %v2432 = vunpack.c.h.b16 %v2048
    %v2433 = vunpack.c.l.b16 %v2049
    %v2434 = vunpack.c.h.b16 %v2049
    %v2435 = vunpack.c.l.b16 %v2050
    %v2436 = vunpack.c.h.b16 %v2050
    %v2437 = vunpack.c.l.b16 %v2051
    %v2438 = vunpack.c.h.b16 %v2051
    %v2439 = vunpack.c.l.b16 %v2052
    %v2440 = vunpack.c.h.b16 %v2052
    %v2441 = vunpack.c.l.b16 %v2053
    %v2442 = vunpack.c.h.b16 %v2053
    %v2443 = vunpack.c.l.b16 %v2054
    %v2444 = vunpack.c.h.b16 %v2054
    %v2445 = vunpack.c.l.b16 %v2055
    %v2446 = vunpack.c.h.b16 %v2055
    %v2447 = vunpack.c.l.b16 %v2056
    %v2448 = vunpack.c.h.b16 %v2056
    %v2449 = vunpack.c.l.b16 %v2057
    %v2450 = vunpack.c.h.b16 %v2057
    %v2451 = vunpack.c.l.b16 %v2058
    %v2452 = vunpack.c.h.b16 %v2058
    %v2453 = vunpack.c.l.b16 %v2059
    %v2454 = vunpack.c.h.b16 %v2059
    %v2455 = vunpack.c.l.b16 %v2060
    %v2456 = vunpack.c.h.b16 %v2060
    %v2457 = vunpack.c.l.b16 %v2061
    %v2458 = vunpack.c.h.b16 %v2061
    %v2459 = vunpack.c.l.b16 %v2062
    %v2460 = vunpack.c.h.b16 %v2062
    %v2461 = vunpack.c.l.b16 %v2063
    %v2462 = vunpack.c.h.b16 %v2063
    %v2463 = vunpack.c.l.b16 %v2064
    %v2464 = vunpack.c.h.b16 %v2064
    %v2465 = vunpack.c.l.b16 %v2065
    %v2466 = vunpack.c.h.b16 %v2065
    %v2467 = vunpack.c.l.b16 %v2066
    %v2468 = vunpack.c.h.b16 %v2066
    %v2469 = vunpack.c.l.b16 %v2067
    %v2470 = vunpack.c.h.b16 %v2067
    %v2471 = vunpack.c.l.b16 %v2068
    %v2472 = vunpack.c.h.b16 %v2068
    %v2473 = vunpack.c.l.b16 %v2069
    %v2474 = vunpack.c.h.b16 %v2069
    %v2475 = vunpack.c.l.b16 %v2070
    %v2476 = vunpack.c.h.b16 %v2070
    %v2477 = vunpack.c.l.b16 %v2071
    %v2478 = vunpack.c.h.b16 %v2071
    %v2479 = vunpack.c.l.b16 %v2072
    %v2480 = vunpack.c.h.b16 %v2072
    %v2481 = vunpack.c.l.b16 %v2073
    %v2482 = vunpack.c.h.b16 %v2073
    %v2483 = vunpack.c.l.b16 %v2074
    %v2484 = vunpack.c.h.b16 %v2074
    %v2485 = vunpack.c.l.b16 %v2075
    %v2486 = vunpack.c.h.b16 %v2075
    %v2487 = vunpack.c.l.b16 %v2076
    %v2488 = vunpack.c.h.b16 %v2076
    %v2489 = vunpack.c.l.b16 %v2077
    %v2490 = vunpack.c.h.b16 %v2077
    %v2491 = vunpack.c.l.b16 %v2078
    %v2492 = vunpack.c.h.b16 %v2078
    %v2493 = vunpack.c.l.b16 %v2079
    %v2494 = vunpack.c.h.b16 %v2079
    %v2495 = vunpack.c.l.b16 %v2080
    %v2496 = vunpack.c.h.b16 %v2080
    %v2497 = vpack.c.b16 %v2373, %v2369
    %v2498 = vpack.c.b16 %v2374, %v2370
    %v2499 = vpack.c.b16 %v2375, %v2371
    %v2500 = vpack.c.b16 %v2376, %v2372
    %v2501 = vpack.c.b16 %v2381, %v2377
    %v2502 = vpack.c.b16 %v2382, %v2378
    %v2503 = vpack.c.b16 %v2383, %v2379
    %v2504 = vpack.c.b16 %v2384, %v2380
    %v2505 = vpack.c.b16 %v2389, %v2385
    %v2506 = vpack.c.b16 %v2390, %v2386
    %v2507 = vpack.c.b16 %v2391, %v2387
    %v2508 = vpack.c.b16 %v2392, %v2388
    %v2509 = vpack.c.b16 %v2397, %v2393
    %v2510 = vpack.c.b16 %v2398, %v2394
    %v2511 = vpack.c.b16 %v2399, %v2395
    %v2512 = vpack.c.b16 %v2400, %v2396
    %v2513 = vpack.c.b16 %v2405, %v2401
    %v2514 = vpack.c.b16 %v2406, %v2402
    %v2515 = vpack.c.b16 %v2407, %v2403
    %v2516 = vpack.c.b16 %v2408, %v2404
    %v2517 = vpack.c.b16 %v2413, %v2409
    %v2518 = vpack.c.b16 %v2414, %v2410
    %v2519 = vpack.c.b16 %v2415, %v2411
    %v2520 = vpack.c.b16 %v2416, %v2412
    %v2521 = vpack.c.b16 %v2421, %v2417
    %v2522 = vpack.c.b16 %v2422, %v2418
    %v2523 = vpack.c.b16 %v2423, %v2419
    %v2524 = vpack.c.b16 %v2424, %v2420
    %v2525 = vpack.c.b16 %v2429, %v2425
    %v2526 = vpack.c.b16 %v2430, %v2426
    %v2527 = vpack.c.b16 %v2431, %v2427
    %v2528 = vpack.c.b16 %v2432, %v2428
    %v2529 = vpack.c.b16 %v2437, %v2433
    %v2530 = vpack.c.b16 %v2438, %v2434
    %v2531 = vpack.c.b16 %v2439, %v2435
    %v2532 = vpack.c.b16 %v2440, %v2436
    %v2533 = vpack.c.b16 %v2445, %v2441
    %v2534 = vpack.c.b16 %v2446, %v2442
    %v2535 = vpack.c.b16 %v2447, %v2443
    %v2536 = vpack.c.b16 %v2448, %v2444
    %v2537 = vpack.c.b16 %v2453, %v2449
    %v2538 = vpack.c.b16 %v2454, %v2450
    %v2539 = vpack.c.b16 %v2455, %v2451
    %v2540 = vpack.c.b16 %v2456, %v2452
    %v2541 = vpack.c.b16 %v2461, %v2457
    %v2542 = vpack.c.b16 %v2462, %v2458
    %v2543 = vpack.c.b16 %v2463, %v2459
    %v2544 = vpack.c.b16 %v2464, %v2460
    %v2545 = vpack.c.b16 %v2469, %v2465
    %v2546 = vpack.c.b16 %v2470, %v2466
    %v2547 = vpack.c.b16 %v2471, %v2467
    %v2548 = vpack.c.b16 %v2472, %v2468
    %v2549 = vpack.c.b16 %v2477, %v2473
    %v2550 = vpack.c.b16 %v2478, %v2474
    %v2551 = vpack.c.b16 %v2479, %v2475
    %v2552 = vpack.c.b16 %v2480, %v2476
    %v2553 = vpack.c.b16 %v2485, %v2481
    %v2554 = vpack.c.b16 %v2486, %v2482
    %v2555 = vpack.c.b16 %v2487, %v2483
    %v2556 = vpack.c.b16 %v2488, %v2484
    %v2557 = vpack.c.b16 %v2493, %v2489
    %v2558 = vpack.c.b16 %v2494, %v2490
    %v2559 = vpack.c.b16 %v2495, %v2491
    %v2560 = vpack.c.b16 %v2496, %v2492
    %2625 = vmatprep.subr.bf16.mxu0 0
    %2626 = vmatpush1.bf16.msra.mxu0 %v2088
    %2627 = vmatprep.subr.bf16.mxu0 0
    %2628 = vmatpush1.bf16.msra.mxu0 %v2087
    %2629 = vmatprep.subr.bf16.mxu0 0
    %2630 = vmatpush1.bf16.msra.mxu0 %v2086
    %2631 = vmatprep.subr.bf16.mxu0 0
    %2632 = vmatpush1.bf16.msra.mxu0 %v2085
    %2633 = vmatprep.subr.bf16.mxu0 0
    %2634 = vmatpush1.bf16.msra.mxu0 %v2084
    %2635 = vmatprep.subr.bf16.mxu0 0
    %2636 = vmatpush1.bf16.msra.mxu0 %v2083
    %2637 = vmatprep.subr.bf16.mxu0 0
    %2638 = vmatpush1.bf16.msra.mxu0 %v2082
    %2639 = vmatprep.subr.bf16.mxu0 0
    %2640 = vmatpush1.bf16.msra.mxu0 %v2081
    %2641 = vmatprep.subr.bf16.mxu0 0
    %2642 = vmatpush2.bf16.msra.mxu0 %v2096
    %2643 = vmatprep.subr.bf16.mxu0 0
    %2644 = vmatpush2.bf16.msra.mxu0 %v2095
    %2645 = vmatprep.subr.bf16.mxu0 0
    %2646 = vmatpush2.bf16.msra.mxu0 %v2094
    %2647 = vmatprep.subr.bf16.mxu0 0
    %2648 = vmatpush2.bf16.msra.mxu0 %v2093
    %2649 = vmatprep.subr.bf16.mxu0 0
    %2650 = vmatpush2.bf16.msra.mxu0 %v2092
    %2651 = vmatprep.subr.bf16.mxu0 0
    %2652 = vmatpush2.bf16.msra.mxu0 %v2091
    %2653 = vmatprep.subr.bf16.mxu0 0
    %2654 = vmatpush2.bf16.msra.mxu0 %v2090
    %2655 = vmatprep.subr.bf16.mxu0 0
    %2656 = vmatpush2.bf16.msra.mxu0 %v2089
    %2657 = vmatprep.mubr.bf16.mxu0 %v2498
    %2658 = vmatmul.mubr.bf16.gmra.mxu0 %v2497
    %v2659 = vpop.f32.mrf.mxu0
    %v2660 = vadd.f32 %v2148, %v2659
    %v2661 = vpop.f32.mrf.mxu0
    %v2662 = vpop.f32.mrf.mxu0
    %v2663 = vadd.f32 %v2153, %v2662
    %v2664 = vpop.f32.mrf.mxu0
    %2665 = vmatprep.mubr.bf16.mxu0 %v2502
    %2666 = vmatmul.mubr.bf16.gmra.mxu0 %v2501
    %v2667 = vpop.f32.mrf.mxu0
    %v2668 = vadd.f32 %v2158, %v2667
    %v2669 = vpop.f32.mrf.mxu0
    %v2670 = vpop.f32.mrf.mxu0
    %v2671 = vadd.f32 %v2163, %v2670
    %v2672 = vpop.f32.mrf.mxu0
    %2673 = vmatprep.mubr.bf16.mxu0 %v2506
    %2674 = vmatmul.mubr.bf16.gmra.mxu0 %v2505
    %v2675 = vpop.f32.mrf.mxu0
    %v2676 = vadd.f32 %v2168, %v2675
    %v2677 = vpop.f32.mrf.mxu0
    %v2678 = vpop.f32.mrf.mxu0
    %v2679 = vadd.f32 %v2173, %v2678
    %v2680 = vpop.f32.mrf.mxu0
    %2681 = vmatprep.mubr.bf16.mxu0 %v2510
    %2682 = vmatmul.mubr.bf16.gmra.mxu0 %v2509
    %v2683 = vpop.f32.mrf.mxu0
    %v2684 = vadd.f32 %v2178, %v2683
    %v2685 = vpop.f32.mrf.mxu0
    %v2686 = vpop.f32.mrf.mxu0
    %v2687 = vadd.f32 %v2183, %v2686
    %v2688 = vpop.f32.mrf.mxu0
    %2689 = vmatprep.mubr.bf16.mxu0 %v2514
    %2690 = vmatmul.mubr.bf16.gmra.mxu0 %v2513
    %v2691 = vpop.f32.mrf.mxu0
    %v2692 = vadd.f32 %v2188, %v2691
    %v2693 = vpop.f32.mrf.mxu0
    %v2694 = vpop.f32.mrf.mxu0
    %v2695 = vadd.f32 %v2193, %v2694
    %v2696 = vpop.f32.mrf.mxu0
    %2697 = vmatprep.mubr.bf16.mxu0 %v2518
    %2698 = vmatmul.mubr.bf16.gmra.mxu0 %v2517
    %v2699 = vpop.f32.mrf.mxu0
    %v2700 = vadd.f32 %v2198, %v2699
    %v2701 = vpop.f32.mrf.mxu0
    %v2702 = vpop.f32.mrf.mxu0
    %v2703 = vadd.f32 %v2203, %v2702
    %v2704 = vpop.f32.mrf.mxu0
    %2705 = vmatprep.mubr.bf16.mxu0 %v2522
    %2706 = vmatmul.mubr.bf16.gmra.mxu0 %v2521
    %v2707 = vpop.f32.mrf.mxu0
    %v2708 = vadd.f32 %v2208, %v2707
    %v2709 = vpop.f32.mrf.mxu0
    %v2710 = vpop.f32.mrf.mxu0
    %v2711 = vadd.f32 %v2213, %v2710
    %v2712 = vpop.f32.mrf.mxu0
    %2713 = vmatprep.mubr.bf16.mxu0 %v2526
    %2714 = vmatmul.mubr.bf16.gmra.mxu0 %v2525
    %v2715 = vpop.f32.mrf.mxu0
    %v2716 = vadd.f32 %v2218, %v2715
    %v2717 = vpop.f32.mrf.mxu0
    %v2718 = vpop.f32.mrf.mxu0
    %v2719 = vadd.f32 %v2223, %v2718
    %v2720 = vpop.f32.mrf.mxu0
    %2721 = vmatprep.mubr.bf16.mxu0 %v2530
    %2722 = vmatmul.mubr.bf16.gmra.mxu0 %v2529
    %v2723 = vpop.f32.mrf.mxu0
    %v2724 = vadd.f32 %v2228, %v2723
    %v2725 = vpop.f32.mrf.mxu0
    %v2726 = vpop.f32.mrf.mxu0
    %v2727 = vadd.f32 %v2233, %v2726
    %v2728 = vpop.f32.mrf.mxu0
    %2729 = vmatprep.mubr.bf16.mxu0 %v2534
    %2730 = vmatmul.mubr.bf16.gmra.mxu0 %v2533
    %v2731 = vpop.f32.mrf.mxu0
    %v2732 = vadd.f32 %v2238, %v2731
    %v2733 = vpop.f32.mrf.mxu0
    %v2734 = vpop.f32.mrf.mxu0
    %v2735 = vadd.f32 %v2243, %v2734
    %v2736 = vpop.f32.mrf.mxu0
    %2737 = vmatprep.mubr.bf16.mxu0 %v2538
    %2738 = vmatmul.mubr.bf16.gmra.mxu0 %v2537
    %v2739 = vpop.f32.mrf.mxu0
    %v2740 = vadd.f32 %v2248, %v2739
    %v2741 = vpop.f32.mrf.mxu0
    %v2742 = vpop.f32.mrf.mxu0
    %v2743 = vadd.f32 %v2253, %v2742
    %v2744 = vpop.f32.mrf.mxu0
    %2745 = vmatprep.mubr.bf16.mxu0 %v2542
    %2746 = vmatmul.mubr.bf16.gmra.mxu0 %v2541
    %v2747 = vpop.f32.mrf.mxu0
    %v2748 = vadd.f32 %v2258, %v2747
    %v2749 = vpop.f32.mrf.mxu0
    %v2750 = vpop.f32.mrf.mxu0
    %v2751 = vadd.f32 %v2263, %v2750
    %v2752 = vpop.f32.mrf.mxu0
    %2753 = vmatprep.mubr.bf16.mxu0 %v2546
    %2754 = vmatmul.mubr.bf16.gmra.mxu0 %v2545
    %v2755 = vpop.f32.mrf.mxu0
    %v2756 = vadd.f32 %v2268, %v2755
    %v2757 = vpop.f32.mrf.mxu0
    %v2758 = vpop.f32.mrf.mxu0
    %v2759 = vadd.f32 %v2273, %v2758
    %v2760 = vpop.f32.mrf.mxu0
    %2761 = vmatprep.mubr.bf16.mxu0 %v2550
    %2762 = vmatmul.mubr.bf16.gmra.mxu0 %v2549
    %v2763 = vpop.f32.mrf.mxu0
    %v2764 = vadd.f32 %v2278, %v2763
    %v2765 = vpop.f32.mrf.mxu0
    %v2766 = vpop.f32.mrf.mxu0
    %v2767 = vadd.f32 %v2283, %v2766
    %v2768 = vpop.f32.mrf.mxu0
    %2769 = vmatprep.mubr.bf16.mxu0 %v2554
    %2770 = vmatmul.mubr.bf16.gmra.mxu0 %v2553
    %v2771 = vpop.f32.mrf.mxu0
    %v2772 = vadd.f32 %v2288, %v2771
    %v2773 = vpop.f32.mrf.mxu0
    %v2774 = vpop.f32.mrf.mxu0
    %v2775 = vadd.f32 %v2293, %v2774
    %v2776 = vpop.f32.mrf.mxu0
    %2777 = vmatprep.mubr.bf16.mxu0 %v2558
    %2778 = vmatmul.mubr.bf16.gmra.mxu0 %v2557
    %v2779 = vpop.f32.mrf.mxu0
    %v2780 = vadd.f32 %v2298, %v2779
    %v2781 = vpop.f32.mrf.mxu0
    %v2782 = vpop.f32.mrf.mxu0
    %v2783 = vadd.f32 %v2303, %v2782
    %v2784 = vpop.f32.mrf.mxu0
    %2785 = vdwg.mxu0
    %2786 = vmatprep.subr.bf16.mxu0 0
    %2787 = vmatpush1.bf16.msra.mxu0 %v2104
    %2788 = vmatprep.subr.bf16.mxu0 0
    %2789 = vmatpush1.bf16.msra.mxu0 %v2103
    %2790 = vmatprep.subr.bf16.mxu0 0
    %2791 = vmatpush1.bf16.msra.mxu0 %v2102
    %2792 = vmatprep.subr.bf16.mxu0 0
    %2793 = vmatpush1.bf16.msra.mxu0 %v2101
    %2794 = vmatprep.subr.bf16.mxu0 0
    %2795 = vmatpush1.bf16.msra.mxu0 %v2100
    %2796 = vmatprep.subr.bf16.mxu0 0
    %2797 = vmatpush1.bf16.msra.mxu0 %v2099
    %2798 = vmatprep.subr.bf16.mxu0 0
    %2799 = vmatpush1.bf16.msra.mxu0 %v2098
    %2800 = vmatprep.subr.bf16.mxu0 0
    %2801 = vmatpush1.bf16.msra.mxu0 %v2097
    %2802 = vmatprep.subr.bf16.mxu0 0
    %2803 = vmatpush2.bf16.msra.mxu0 %v2112
    %2804 = vmatprep.subr.bf16.mxu0 0
    %2805 = vmatpush2.bf16.msra.mxu0 %v2111
    %2806 = vmatprep.subr.bf16.mxu0 0
    %2807 = vmatpush2.bf16.msra.mxu0 %v2110
    %2808 = vmatprep.subr.bf16.mxu0 0
    %2809 = vmatpush2.bf16.msra.mxu0 %v2109
    %2810 = vmatprep.subr.bf16.mxu0 0
    %2811 = vmatpush2.bf16.msra.mxu0 %v2108
    %2812 = vmatprep.subr.bf16.mxu0 0
    %2813 = vmatpush2.bf16.msra.mxu0 %v2107
    %2814 = vmatprep.subr.bf16.mxu0 0
    %2815 = vmatpush2.bf16.msra.mxu0 %v2106
    %2816 = vmatprep.subr.bf16.mxu0 0
    %2817 = vmatpush2.bf16.msra.mxu0 %v2105
    %2818 = vmatprep.mubr.bf16.mxu0 %v2500
    %2819 = vmatmul.mubr.bf16.gmra.mxu0 %v2499
    %v2820 = vpop.f32.mrf.mxu0
    %v2821 = vadd.f32 %v2660, %v2820
    %v2822 = vpop.f32.mrf.mxu0
    %v2823 = vpop.f32.mrf.mxu0
    %v2824 = vadd.f32 %v2663, %v2823
    %v2825 = vpop.f32.mrf.mxu0
    %2826 = vmatprep.mubr.bf16.mxu0 %v2504
    %2827 = vmatmul.mubr.bf16.gmra.mxu0 %v2503
    %v2828 = vpop.f32.mrf.mxu0
    %v2829 = vadd.f32 %v2668, %v2828
    %v2830 = vpop.f32.mrf.mxu0
    %v2831 = vpop.f32.mrf.mxu0
    %v2832 = vadd.f32 %v2671, %v2831
    %v2833 = vpop.f32.mrf.mxu0
    %2834 = vmatprep.mubr.bf16.mxu0 %v2508
    %2835 = vmatmul.mubr.bf16.gmra.mxu0 %v2507
    %v2836 = vpop.f32.mrf.mxu0
    %v2837 = vadd.f32 %v2676, %v2836
    %v2838 = vpop.f32.mrf.mxu0
    %v2839 = vpop.f32.mrf.mxu0
    %v2840 = vadd.f32 %v2679, %v2839
    %v2841 = vpop.f32.mrf.mxu0
    %2842 = vmatprep.mubr.bf16.mxu0 %v2512
    %2843 = vmatmul.mubr.bf16.gmra.mxu0 %v2511
    %v2844 = vpop.f32.mrf.mxu0
    %v2845 = vadd.f32 %v2684, %v2844
    %v2846 = vpop.f32.mrf.mxu0
    %v2847 = vpop.f32.mrf.mxu0
    %v2848 = vadd.f32 %v2687, %v2847
    %v2849 = vpop.f32.mrf.mxu0
    %2850 = vmatprep.mubr.bf16.mxu0 %v2516
    %2851 = vmatmul.mubr.bf16.gmra.mxu0 %v2515
    %v2852 = vpop.f32.mrf.mxu0
    %v2853 = vadd.f32 %v2692, %v2852
    %v2854 = vpop.f32.mrf.mxu0
    %v2855 = vpop.f32.mrf.mxu0
    %v2856 = vadd.f32 %v2695, %v2855
    %v2857 = vpop.f32.mrf.mxu0
    %2858 = vmatprep.mubr.bf16.mxu0 %v2520
    %2859 = vmatmul.mubr.bf16.gmra.mxu0 %v2519
    %v2860 = vpop.f32.mrf.mxu0
    %v2861 = vadd.f32 %v2700, %v2860
    %v2862 = vpop.f32.mrf.mxu0
    %v2863 = vpop.f32.mrf.mxu0
    %v2864 = vadd.f32 %v2703, %v2863
    %v2865 = vpop.f32.mrf.mxu0
    %2866 = vmatprep.mubr.bf16.mxu0 %v2524
    %2867 = vmatmul.mubr.bf16.gmra.mxu0 %v2523
    %v2868 = vpop.f32.mrf.mxu0
    %v2869 = vadd.f32 %v2708, %v2868
    %v2870 = vpop.f32.mrf.mxu0
    %v2871 = vpop.f32.mrf.mxu0
    %v2872 = vadd.f32 %v2711, %v2871
    %v2873 = vpop.f32.mrf.mxu0
    %2874 = vmatprep.mubr.bf16.mxu0 %v2528
    %2875 = vmatmul.mubr.bf16.gmra.mxu0 %v2527
    %v2876 = vpop.f32.mrf.mxu0
    %v2877 = vadd.f32 %v2716, %v2876
    %v2878 = vpop.f32.mrf.mxu0
    %v2879 = vpop.f32.mrf.mxu0
    %v2880 = vadd.f32 %v2719, %v2879
    %v2881 = vpop.f32.mrf.mxu0
    %2882 = vmatprep.mubr.bf16.mxu0 %v2532
    %2883 = vmatmul.mubr.bf16.gmra.mxu0 %v2531
    %v2884 = vpop.f32.mrf.mxu0
    %v2885 = vadd.f32 %v2724, %v2884
    %v2886 = vpop.f32.mrf.mxu0
    %v2887 = vpop.f32.mrf.mxu0
    %v2888 = vadd.f32 %v2727, %v2887
    %v2889 = vpop.f32.mrf.mxu0
    %2890 = vmatprep.mubr.bf16.mxu0 %v2536
    %2891 = vmatmul.mubr.bf16.gmra.mxu0 %v2535
    %v2892 = vpop.f32.mrf.mxu0
    %v2893 = vadd.f32 %v2732, %v2892
    %v2894 = vpop.f32.mrf.mxu0
    %v2895 = vpop.f32.mrf.mxu0
    %v2896 = vadd.f32 %v2735, %v2895
    %v2897 = vpop.f32.mrf.mxu0
    %2898 = vmatprep.mubr.bf16.mxu0 %v2540
    %2899 = vmatmul.mubr.bf16.gmra.mxu0 %v2539
    %v2900 = vpop.f32.mrf.mxu0
    %v2901 = vadd.f32 %v2740, %v2900
    %v2902 = vpop.f32.mrf.mxu0
    %v2903 = vpop.f32.mrf.mxu0
    %v2904 = vadd.f32 %v2743, %v2903
    %v2905 = vpop.f32.mrf.mxu0
    %2906 = vmatprep.mubr.bf16.mxu0 %v2544
    %2907 = vmatmul.mubr.bf16.gmra.mxu0 %v2543
    %v2908 = vpop.f32.mrf.mxu0
    %v2909 = vadd.f32 %v2748, %v2908
    %v2910 = vpop.f32.mrf.mxu0
    %v2911 = vpop.f32.mrf.mxu0
    %v2912 = vadd.f32 %v2751, %v2911
    %v2913 = vpop.f32.mrf.mxu0
    %2914 = vmatprep.mubr.bf16.mxu0 %v2548
    %2915 = vmatmul.mubr.bf16.gmra.mxu0 %v2547
    %v2916 = vpop.f32.mrf.mxu0
    %v2917 = vadd.f32 %v2756, %v2916
    %v2918 = vpop.f32.mrf.mxu0
    %v2919 = vpop.f32.mrf.mxu0
    %v2920 = vadd.f32 %v2759, %v2919
    %v2921 = vpop.f32.mrf.mxu0
    %2922 = vmatprep.mubr.bf16.mxu0 %v2552
    %2923 = vmatmul.mubr.bf16.gmra.mxu0 %v2551
    %v2924 = vpop.f32.mrf.mxu0
    %v2925 = vadd.f32 %v2764, %v2924
    %v2926 = vpop.f32.mrf.mxu0
    %v2927 = vpop.f32.mrf.mxu0
    %v2928 = vadd.f32 %v2767, %v2927
    %v2929 = vpop.f32.mrf.mxu0
    %2930 = vmatprep.mubr.bf16.mxu0 %v2556
    %2931 = vmatmul.mubr.bf16.gmra.mxu0 %v2555
    %v2932 = vpop.f32.mrf.mxu0
    %v2933 = vadd.f32 %v2772, %v2932
    %v2934 = vpop.f32.mrf.mxu0
    %v2935 = vpop.f32.mrf.mxu0
    %v2936 = vadd.f32 %v2775, %v2935
    %v2937 = vpop.f32.mrf.mxu0
    %2938 = vmatprep.mubr.bf16.mxu0 %v2560
    %2939 = vmatmul.mubr.bf16.gmra.mxu0 %v2559
    %v2940 = vpop.f32.mrf.mxu0
    %v2941 = vadd.f32 %v2780, %v2940
    %v2942 = vpop.f32.mrf.mxu0
    %v2943 = vpop.f32.mrf.mxu0
    %v2944 = vadd.f32 %v2783, %v2943
    %v2945 = vpop.f32.mrf.mxu0
    %2946 = vdwg.mxu0
    %v2947 = vmax.f32 %v2821, 0.0
    %v2948 = vmax.f32 %v2824, 0.0
    %v2949 = vmax.f32 %v2829, 0.0
    %v2950 = vmax.f32 %v2832, 0.0
    %v2951 = vmax.f32 %v2837, 0.0
    %v2952 = vmax.f32 %v2840, 0.0
    %v2953 = vmax.f32 %v2845, 0.0
    %v2954 = vmax.f32 %v2848, 0.0
    %v2955 = vmax.f32 %v2853, 0.0
    %v2956 = vmax.f32 %v2856, 0.0
    %v2957 = vmax.f32 %v2861, 0.0
    %v2958 = vmax.f32 %v2864, 0.0
    %v2959 = vmax.f32 %v2869, 0.0
    %v2960 = vmax.f32 %v2872, 0.0
    %v2961 = vmax.f32 %v2877, 0.0
    %v2962 = vmax.f32 %v2880, 0.0
    %v2963 = vmax.f32 %v2885, 0.0
    %v2964 = vmax.f32 %v2888, 0.0
    %v2965 = vmax.f32 %v2893, 0.0
    %v2966 = vmax.f32 %v2896, 0.0
    %v2967 = vmax.f32 %v2901, 0.0
    %v2968 = vmax.f32 %v2904, 0.0
    %v2969 = vmax.f32 %v2909, 0.0
    %v2970 = vmax.f32 %v2912, 0.0
    %v2971 = vmax.f32 %v2917, 0.0
    %v2972 = vmax.f32 %v2920, 0.0
    %v2973 = vmax.f32 %v2925, 0.0
    %v2974 = vmax.f32 %v2928, 0.0
    %v2975 = vmax.f32 %v2933, 0.0
    %v2976 = vmax.f32 %v2936, 0.0
    %v2977 = vmax.f32 %v2941, 0.0
    %v2978 = vmax.f32 %v2944, 0.0
    %v2979 = vld [vmem:[%s5] sm:$0xff]
    %v2980 = vld [vmem:[%s5 + $0x8] sm:$0xff]
    %v2981 = vld [vmem:[%s5 + $0x10] sm:$0xff]
    %v2982 = vld [vmem:[%s5 + $0x18] sm:$0xff]
    %v2983 = vld [vmem:[%s5 + $0x20] sm:$0xff]
    %v2984 = vld [vmem:[%s5 + $0x28] sm:$0xff]
    %v2985 = vld [vmem:[%s5 + $0x30] sm:$0xff]
    %v2986 = vld [vmem:[%s5 + $0x38] sm:$0xff]
    %v2987 = vld [vmem:[%s5 + $0x40] sm:$0xff]
    %v2988 = vld [vmem:[%s5 + $0x48] sm:$0xff]
    %v2989 = vld [vmem:[%s5 + $0x50] sm:$0xff]
    %v2990 = vld [vmem:[%s5 + $0x58] sm:$0xff]
    %v2991 = vld [vmem:[%s5 + $0x60] sm:$0xff]
    %v2992 = vld [vmem:[%s5 + $0x68] sm:$0xff]
    %v2993 = vld [vmem:[%s5 + $0x70] sm:$0xff]
    %v2994 = vld [vmem:[%s5 + $0x78] sm:$0xff]
    %v2995 = vpack.c.bf16 %v2948, %v2947
    %v2996 = vpack.c.bf16 %v2950, %v2949
    %v2997 = vpack.c.bf16 %v2952, %v2951
    %v2998 = vpack.c.bf16 %v2954, %v2953
    %v2999 = vpack.c.bf16 %v2956, %v2955
    %v3000 = vpack.c.bf16 %v2958, %v2957
    %v3001 = vpack.c.bf16 %v2960, %v2959
    %v3002 = vpack.c.bf16 %v2962, %v2961
    %v3003 = vpack.c.bf16 %v2964, %v2963
    %v3004 = vpack.c.bf16 %v2966, %v2965
    %v3005 = vpack.c.bf16 %v2968, %v2967
    %v3006 = vpack.c.bf16 %v2970, %v2969
    %v3007 = vpack.c.bf16 %v2972, %v2971
    %v3008 = vpack.c.bf16 %v2974, %v2973
    %v3009 = vpack.c.bf16 %v2976, %v2975
    %v3010 = vpack.c.bf16 %v2978, %v2977
    %v3011 = vld [vmem:[%s6] sm:$0xff]
    %v3012 = vld [vmem:[%s6 + $0x8] sm:$0xff]
    %v3013 = vld [vmem:[%s6 + $0x10] sm:$0xff]
    %v3014 = vld [vmem:[%s6 + $0x18] sm:$0xff]
    %v3015 = vld [vmem:[%s6 + $0x20] sm:$0xff]
    %v3016 = vld [vmem:[%s6 + $0x28] sm:$0xff]
    %v3017 = vld [vmem:[%s6 + $0x30] sm:$0xff]
    %v3018 = vld [vmem:[%s6 + $0x38] sm:$0xff]
    %v3019 = vld [vmem:[%s6 + $0x40] sm:$0xff]
    %v3020 = vld [vmem:[%s6 + $0x48] sm:$0xff]
    %v3021 = vld [vmem:[%s6 + $0x50] sm:$0xff]
    %v3022 = vld [vmem:[%s6 + $0x58] sm:$0xff]
    %v3023 = vld [vmem:[%s6 + $0x60] sm:$0xff]
    %v3024 = vld [vmem:[%s6 + $0x68] sm:$0xff]
    %v3025 = vld [vmem:[%s6 + $0x70] sm:$0xff]
    %v3026 = vld [vmem:[%s6 + $0x78] sm:$0xff]
    %3028 = vset.pattern.permute.xlu0 0
    %3029 = vperm.xlu0 %3028, %v3011
    %v3030 = vpop.permute.xlu0 %3029
    %3033 = vset.pattern.permute.xlu0 0
    %3034 = vperm.xlu0 %3033, %v3012
    %v3035 = vpop.permute.xlu0 %3034
    %3038 = vset.pattern.permute.xlu0 0
    %3039 = vperm.xlu0 %3038, %v3013
    %v3040 = vpop.permute.xlu0 %3039
    %3043 = vset.pattern.permute.xlu0 0
    %3044 = vperm.xlu0 %3043, %v3014
    %v3045 = vpop.permute.xlu0 %3044
    %3048 = vset.pattern.permute.xlu0 0
    %3049 = vperm.xlu0 %3048, %v3015
    %v3050 = vpop.permute.xlu0 %3049
    %3053 = vset.pattern.permute.xlu0 0
    %3054 = vperm.xlu0 %3053, %v3016
    %v3055 = vpop.permute.xlu0 %3054
    %3058 = vset.pattern.permute.xlu0 0
    %3059 = vperm.xlu0 %3058, %v3017
    %v3060 = vpop.permute.xlu0 %3059
    %3063 = vset.pattern.permute.xlu0 0
    %3064 = vperm.xlu0 %3063, %v3018
    %v3065 = vpop.permute.xlu0 %3064
    %3068 = vset.pattern.permute.xlu0 0
    %3069 = vperm.xlu0 %3068, %v3019
    %v3070 = vpop.permute.xlu0 %3069
    %3073 = vset.pattern.permute.xlu0 0
    %3074 = vperm.xlu0 %3073, %v3020
    %v3075 = vpop.permute.xlu0 %3074
    %3078 = vset.pattern.permute.xlu0 0
    %3079 = vperm.xlu0 %3078, %v3021
    %v3080 = vpop.permute.xlu0 %3079
    %3083 = vset.pattern.permute.xlu0 0
    %3084 = vperm.xlu0 %3083, %v3022
    %v3085 = vpop.permute.xlu0 %3084
    %3088 = vset.pattern.permute.xlu0 0
    %3089 = vperm.xlu0 %3088, %v3023
    %v3090 = vpop.permute.xlu0 %3089
    %3093 = vset.pattern.permute.xlu0 0
    %3094 = vperm.xlu0 %3093, %v3024
    %v3095 = vpop.permute.xlu0 %3094
    %3098 = vset.pattern.permute.xlu0 0
    %3099 = vperm.xlu0 %3098, %v3025
    %v3100 = vpop.permute.xlu0 %3099
    %3103 = vset.pattern.permute.xlu0 0
    %3104 = vperm.xlu0 %3103, %v3026
    %v3105 = vpop.permute.xlu0 %3104
    %v3123 = vunpack.c.l.b16 %v2979
    %v3124 = vunpack.c.h.b16 %v2979
    %v3125 = vunpack.c.l.b16 %v2980
    %v3126 = vunpack.c.h.b16 %v2980
    %v3127 = vunpack.c.l.b16 %v2981
    %v3128 = vunpack.c.h.b16 %v2981
    %v3129 = vunpack.c.l.b16 %v2982
    %v3130 = vunpack.c.h.b16 %v2982
    %v3131 = vunpack.c.l.b16 %v2983
    %v3132 = vunpack.c.h.b16 %v2983
    %v3133 = vunpack.c.l.b16 %v2984
    %v3134 = vunpack.c.h.b16 %v2984
    %v3135 = vunpack.c.l.b16 %v2985
    %v3136 = vunpack.c.h.b16 %v2985
    %v3137 = vunpack.c.l.b16 %v2986
    %v3138 = vunpack.c.h.b16 %v2986
    %v3139 = vunpack.c.l.b16 %v2987
    %v3140 = vunpack.c.h.b16 %v2987
    %v3141 = vunpack.c.l.b16 %v2988
    %v3142 = vunpack.c.h.b16 %v2988
    %v3143 = vunpack.c.l.b16 %v2989
    %v3144 = vunpack.c.h.b16 %v2989
    %v3145 = vunpack.c.l.b16 %v2990
    %v3146 = vunpack.c.h.b16 %v2990
    %v3147 = vunpack.c.l.b16 %v2991
    %v3148 = vunpack.c.h.b16 %v2991
    %v3149 = vunpack.c.l.b16 %v2992
    %v3150 = vunpack.c.h.b16 %v2992
    %v3151 = vunpack.c.l.b16 %v2993
    %v3152 = vunpack.c.h.b16 %v2993
    %v3153 = vunpack.c.l.b16 %v2994
    %v3154 = vunpack.c.h.b16 %v2994
    %v3155 = vpack.c.b16 %v3125, %v3123
    %v3156 = vpack.c.b16 %v3126, %v3124
    %v3157 = vpack.c.b16 %v3129, %v3127
    %v3158 = vpack.c.b16 %v3130, %v3128
    %v3159 = vpack.c.b16 %v3133, %v3131
    %v3160 = vpack.c.b16 %v3134, %v3132
    %v3161 = vpack.c.b16 %v3137, %v3135
    %v3162 = vpack.c.b16 %v3138, %v3136
    %v3163 = vpack.c.b16 %v3141, %v3139
    %v3164 = vpack.c.b16 %v3142, %v3140
    %v3165 = vpack.c.b16 %v3145, %v3143
    %v3166 = vpack.c.b16 %v3146, %v3144
    %v3167 = vpack.c.b16 %v3149, %v3147
    %v3168 = vpack.c.b16 %v3150, %v3148
    %v3169 = vpack.c.b16 %v3153, %v3151
    %v3170 = vpack.c.b16 %v3154, %v3152
    %3187 = vmatprep.subr.bf16.mxu0 0
    %3188 = vmatpush1.bf16.msra.mxu0 %v3002
    %3189 = vmatprep.subr.bf16.mxu0 0
    %3190 = vmatpush1.bf16.msra.mxu0 %v3001
    %3191 = vmatprep.subr.bf16.mxu0 0
    %3192 = vmatpush1.bf16.msra.mxu0 %v3000
    %3193 = vmatprep.subr.bf16.mxu0 0
    %3194 = vmatpush1.bf16.msra.mxu0 %v2999
    %3195 = vmatprep.subr.bf16.mxu0 0
    %3196 = vmatpush1.bf16.msra.mxu0 %v2998
    %3197 = vmatprep.subr.bf16.mxu0 0
    %3198 = vmatpush1.bf16.msra.mxu0 %v2997
    %3199 = vmatprep.subr.bf16.mxu0 0
    %3200 = vmatpush1.bf16.msra.mxu0 %v2996
    %3201 = vmatprep.subr.bf16.mxu0 0
    %3202 = vmatpush1.bf16.msra.mxu0 %v2995
    %3203 = vmatprep.subr.bf16.mxu0 0
    %3204 = vmatpush2.bf16.msra.mxu0 %v3010
    %3205 = vmatprep.subr.bf16.mxu0 0
    %3206 = vmatpush2.bf16.msra.mxu0 %v3009
    %3207 = vmatprep.subr.bf16.mxu0 0
    %3208 = vmatpush2.bf16.msra.mxu0 %v3008
    %3209 = vmatprep.subr.bf16.mxu0 0
    %3210 = vmatpush2.bf16.msra.mxu0 %v3007
    %3211 = vmatprep.subr.bf16.mxu0 0
    %3212 = vmatpush2.bf16.msra.mxu0 %v3006
    %3213 = vmatprep.subr.bf16.mxu0 0
    %3214 = vmatpush2.bf16.msra.mxu0 %v3005
    %3215 = vmatprep.subr.bf16.mxu0 0
    %3216 = vmatpush2.bf16.msra.mxu0 %v3004
    %3217 = vmatprep.subr.bf16.mxu0 0
    %3218 = vmatpush2.bf16.msra.mxu0 %v3003
    %3219 = vmatprep.mubr.bf16.mxu0 %v3156
    %3220 = vmatmul.mubr.bf16.gmra.mxu0 %v3155
    %v3221 = vpop.f32.mrf.mxu0
    %v3222 = vadd.f32 %v3030, %v3221
    %v3223 = vpop.f32.mrf.mxu0
    %v3224 = vpop.f32.mrf.mxu0
    %v3225 = vadd.f32 %v3035, %v3224
    %v3226 = vpop.f32.mrf.mxu0
    %3227 = vmatprep.mubr.bf16.mxu0 %v3158
    %3228 = vmatmul.mubr.bf16.gmra.mxu0 %v3157
    %v3229 = vpop.f32.mrf.mxu0
    %v3230 = vadd.f32 %v3040, %v3229
    %v3231 = vpop.f32.mrf.mxu0
    %v3232 = vpop.f32.mrf.mxu0
    %v3233 = vadd.f32 %v3045, %v3232
    %v3234 = vpop.f32.mrf.mxu0
    %3235 = vmatprep.mubr.bf16.mxu0 %v3160
    %3236 = vmatmul.mubr.bf16.gmra.mxu0 %v3159
    %v3237 = vpop.f32.mrf.mxu0
    %v3238 = vadd.f32 %v3050, %v3237
    %v3239 = vpop.f32.mrf.mxu0
    %v3240 = vpop.f32.mrf.mxu0
    %v3241 = vadd.f32 %v3055, %v3240
    %v3242 = vpop.f32.mrf.mxu0
    %3243 = vmatprep.mubr.bf16.mxu0 %v3162
    %3244 = vmatmul.mubr.bf16.gmra.mxu0 %v3161
    %v3245 = vpop.f32.mrf.mxu0
    %v3246 = vadd.f32 %v3060, %v3245
    %v3247 = vpop.f32.mrf.mxu0
    %v3248 = vpop.f32.mrf.mxu0
    %v3249 = vadd.f32 %v3065, %v3248
    %v3250 = vpop.f32.mrf.mxu0
    %3251 = vmatprep.mubr.bf16.mxu0 %v3164
    %3252 = vmatmul.mubr.bf16.gmra.mxu0 %v3163
    %v3253 = vpop.f32.mrf.mxu0
    %v3254 = vadd.f32 %v3070, %v3253
    %v3255 = vpop.f32.mrf.mxu0
    %v3256 = vpop.f32.mrf.mxu0
    %v3257 = vadd.f32 %v3075, %v3256
    %v3258 = vpop.f32.mrf.mxu0
    %3259 = vmatprep.mubr.bf16.mxu0 %v3166
    %3260 = vmatmul.mubr.bf16.gmra.mxu0 %v3165
    %v3261 = vpop.f32.mrf.mxu0
    %v3262 = vadd.f32 %v3080, %v3261
    %v3263 = vpop.f32.mrf.mxu0
    %v3264 = vpop.f32.mrf.mxu0
    %v3265 = vadd.f32 %v3085, %v3264
    %v3266 = vpop.f32.mrf.mxu0
    %3267 = vmatprep.mubr.bf16.mxu0 %v3168
    %3268 = vmatmul.mubr.bf16.gmra.mxu0 %v3167
    %v3269 = vpop.f32.mrf.mxu0
    %v3270 = vadd.f32 %v3090, %v3269
    %v3271 = vpop.f32.mrf.mxu0
    %v3272 = vpop.f32.mrf.mxu0
    %v3273 = vadd.f32 %v3095, %v3272
    %v3274 = vpop.f32.mrf.mxu0
    %3275 = vmatprep.mubr.bf16.mxu0 %v3170
    %3276 = vmatmul.mubr.bf16.gmra.mxu0 %v3169
    %v3277 = vpop.f32.mrf.mxu0
    %v3278 = vadd.f32 %v3100, %v3277
    %v3279 = vpop.f32.mrf.mxu0
    %v3280 = vpop.f32.mrf.mxu0
    %v3281 = vadd.f32 %v3105, %v3280
    %v3282 = vpop.f32.mrf.mxu0
    %3283 = vdwg.mxu0
    %v3284 = vmax.f32 %v3222, 0.0
    %v3285 = vmax.f32 %v3225, 0.0
    %v3286 = vmax.f32 %v3230, 0.0
    %v3287 = vmax.f32 %v3233, 0.0
    %v3288 = vmax.f32 %v3238, 0.0
    %v3289 = vmax.f32 %v3241, 0.0
    %v3290 = vmax.f32 %v3246, 0.0
    %v3291 = vmax.f32 %v3249, 0.0
    %v3292 = vmax.f32 %v3254, 0.0
    %v3293 = vmax.f32 %v3257, 0.0
    %v3294 = vmax.f32 %v3262, 0.0
    %v3295 = vmax.f32 %v3265, 0.0
    %v3296 = vmax.f32 %v3270, 0.0
    %v3297 = vmax.f32 %v3273, 0.0
    %v3298 = vmax.f32 %v3278, 0.0
    %v3299 = vmax.f32 %v3281, 0.0
    %v3300 = vld [vmem:[#allocation2] sm:$0xff]
    %v3301 = vadd.f32 %v3300, 0.0
    %v3302 = vld [vmem:[#allocation2 + $0x8] sm:$0xff]
    %v3303 = vadd.f32 %v3301, %v3302
    %v3304 = vmin.f32 %v3300, %v3302
    %v3305 = vmax.f32 %v3300, %v3302
    %v3306 = vld [vmem:[#allocation2 + $0x10] sm:$0xff]
    %v3307 = vadd.f32 %v3303, %v3306
    %v3308 = vmin.f32 %v3304, %v3306
    %v3309 = vmax.f32 %v3305, %v3306
    %v3310 = vld [vmem:[#allocation2 + $0x18] sm:$0xff]
    %v3311 = vadd.f32 %v3307, %v3310
    %v3312 = vmin.f32 %v3308, %v3310
    %v3313 = vmax.f32 %v3309, %v3310
    %v3314 = vld [vmem:[#allocation2 + $0x20] sm:$0xff]
    %v3315 = vadd.f32 %v3311, %v3314
    %v3316 = vmin.f32 %v3312, %v3314
    %v3317 = vmax.f32 %v3313, %v3314
    %v3318 = vld [vmem:[#allocation2 + $0x28] sm:$0xff]
    %v3319 = vadd.f32 %v3315, %v3318
    %v3320 = vmin.f32 %v3316, %v3318
    %v3321 = vmax.f32 %v3317, %v3318
    %v3322 = vld [vmem:[#allocation2 + $0x30] sm:$0xff]
    %v3323 = vadd.f32 %v3319, %v3322
    %v3324 = vmin.f32 %v3320, %v3322
    %v3325 = vmax.f32 %v3321, %v3322
    %v3326 = vld [vmem:[#allocation2 + $0x38] sm:$0xff]
    %v3327 = vadd.f32 %v3323, %v3326
    %v3328 = vmin.f32 %v3324, %v3326
    %v3329 = vmax.f32 %v3325, %v3326
    %v3330 = vld [vmem:[#allocation2 + $0x40] sm:$0xff]
    %v3331 = vadd.f32 %v3327, %v3330
    %v3332 = vmin.f32 %v3328, %v3330
    %v3333 = vmax.f32 %v3329, %v3330
    %v3334 = vld [vmem:[#allocation2 + $0x48] sm:$0xff]
    %v3335 = vadd.f32 %v3331, %v3334
    %v3336 = vmin.f32 %v3332, %v3334
    %v3337 = vmax.f32 %v3333, %v3334
    %v3338 = vld [vmem:[#allocation2 + $0x50] sm:$0xff]
    %v3339 = vadd.f32 %v3335, %v3338
    %v3340 = vmin.f32 %v3336, %v3338
    %v3341 = vmax.f32 %v3337, %v3338
    %v3342 = vld [vmem:[#allocation2 + $0x58] sm:$0xff]
    %v3343 = vadd.f32 %v3339, %v3342
    %v3344 = vmin.f32 %v3340, %v3342
    %v3345 = vmax.f32 %v3341, %v3342
    %v3346 = vld [vmem:[#allocation2 + $0x60] sm:$0xff]
    %v3347 = vadd.f32 %v3343, %v3346
    %v3348 = vmin.f32 %v3344, %v3346
    %v3349 = vmax.f32 %v3345, %v3346
    %v3350 = vld [vmem:[#allocation2 + $0x68] sm:$0xff]
    %v3351 = vadd.f32 %v3347, %v3350
    %v3352 = vmin.f32 %v3348, %v3350
    %v3353 = vmax.f32 %v3349, %v3350
    %v3354 = vld [vmem:[#allocation2 + $0x70] sm:$0xff]
    %v3355 = vadd.f32 %v3351, %v3354
    %v3356 = vmin.f32 %v3352, %v3354
    %v3357 = vmax.f32 %v3353, %v3354
    %v3358 = vld [vmem:[#allocation2 + $0x78] sm:$0xff]
    %v3359 = vadd.f32 %v3355, %v3358
    %v3360 = vmin.f32 %v3356, %v3358
    %v3361 = vmax.f32 %v3357, %v3358
    %v3362 = vld [vmem:[#allocation2 + $0x80] sm:$0xff]
    %v3363 = vadd.f32 %v3359, %v3362
    %v3364 = vmin.f32 %v3360, %v3362
    %v3365 = vmax.f32 %v3361, %v3362
    %v3366 = vld [vmem:[#allocation2 + $0x88] sm:$0xff]
    %v3367 = vadd.f32 %v3363, %v3366
    %v3368 = vmin.f32 %v3364, %v3366
    %v3369 = vmax.f32 %v3365, %v3366
    %v3370 = vld [vmem:[#allocation2 + $0x90] sm:$0xff]
    %v3371 = vadd.f32 %v3367, %v3370
    %v3372 = vmin.f32 %v3368, %v3370
    %v3373 = vmax.f32 %v3369, %v3370
    %v3374 = vld [vmem:[#allocation2 + $0x98] sm:$0xff]
    %v3375 = vadd.f32 %v3371, %v3374
    %v3376 = vmin.f32 %v3372, %v3374
    %v3377 = vmax.f32 %v3373, %v3374
    %v3378 = vld [vmem:[#allocation2 + $0xa0] sm:$0xff]
    %v3379 = vadd.f32 %v3375, %v3378
    %v3380 = vmin.f32 %v3376, %v3378
    %v3381 = vmax.f32 %v3377, %v3378
    %v3382 = vld [vmem:[#allocation2 + $0xa8] sm:$0xff]
    %v3383 = vadd.f32 %v3379, %v3382
    %v3384 = vmin.f32 %v3380, %v3382
    %v3385 = vmax.f32 %v3381, %v3382
    %v3386 = vld [vmem:[#allocation2 + $0xb0] sm:$0xff]
    %v3387 = vadd.f32 %v3383, %v3386
    %v3388 = vmin.f32 %v3384, %v3386
    %v3389 = vmax.f32 %v3385, %v3386
    %v3390 = vld [vmem:[#allocation2 + $0xb8] sm:$0xff]
    %v3391 = vadd.f32 %v3387, %v3390
    %v3392 = vmin.f32 %v3388, %v3390
    %v3393 = vmax.f32 %v3389, %v3390
    %v3394 = vld [vmem:[#allocation2 + $0xc0] sm:$0xff]
    %v3395 = vadd.f32 %v3391, %v3394
    %v3396 = vmin.f32 %v3392, %v3394
    %v3397 = vmax.f32 %v3393, %v3394
    %v3398 = vld [vmem:[#allocation2 + $0xc8] sm:$0xff]
    %v3399 = vadd.f32 %v3395, %v3398
    %v3400 = vmin.f32 %v3396, %v3398
    %v3401 = vmax.f32 %v3397, %v3398
    %v3402 = vld [vmem:[#allocation2 + $0xd0] sm:$0xff]
    %v3403 = vadd.f32 %v3399, %v3402
    %v3404 = vmin.f32 %v3400, %v3402
    %v3405 = vmax.f32 %v3401, %v3402
    %v3406 = vld [vmem:[#allocation2 + $0xd8] sm:$0xff]
    %v3407 = vadd.f32 %v3403, %v3406
    %v3408 = vmin.f32 %v3404, %v3406
    %v3409 = vmax.f32 %v3405, %v3406
    %v3410 = vld [vmem:[#allocation2 + $0xe0] sm:$0xff]
    %v3411 = vadd.f32 %v3407, %v3410
    %v3412 = vmin.f32 %v3408, %v3410
    %v3413 = vmax.f32 %v3409, %v3410
    %v3414 = vld [vmem:[#allocation2 + $0xe8] sm:$0xff]
    %v3415 = vadd.f32 %v3411, %v3414
    %v3416 = vmin.f32 %v3412, %v3414
    %v3417 = vmax.f32 %v3413, %v3414
    %v3418 = vld [vmem:[#allocation2 + $0xf0] sm:$0xff]
    %v3419 = vadd.f32 %v3415, %v3418
    %v3420 = vmin.f32 %v3416, %v3418
    %v3421 = vmax.f32 %v3417, %v3418
    %v3422 = vld [vmem:[#allocation2 + $0xf8] sm:$0xff]
    %v3423 = vadd.f32 %v3419, %v3422
    %v3424 = vmin.f32 %v3420, %v3422
    %v3425 = vmax.f32 %v3421, %v3422
    %v3426 = vld [vmem:[#allocation2 + $0x100] sm:$0xff]
    %v3427 = vadd.f32 %v3423, %v3426
    %v3428 = vmin.f32 %v3424, %v3426
    %v3429 = vmax.f32 %v3425, %v3426
    %v3430 = vld [vmem:[#allocation2 + $0x108] sm:$0xff]
    %v3431 = vadd.f32 %v3427, %v3430
    %v3432 = vmin.f32 %v3428, %v3430
    %v3433 = vmax.f32 %v3429, %v3430
    %v3434 = vld [vmem:[#allocation2 + $0x110] sm:$0xff]
    %v3435 = vadd.f32 %v3431, %v3434
    %v3436 = vmin.f32 %v3432, %v3434
    %v3437 = vmax.f32 %v3433, %v3434
    %v3438 = vld [vmem:[#allocation2 + $0x118] sm:$0xff]
    %v3439 = vadd.f32 %v3435, %v3438
    %v3440 = vmin.f32 %v3436, %v3438
    %v3441 = vmax.f32 %v3437, %v3438
    %v3442 = vld [vmem:[#allocation2 + $0x120] sm:$0xff]
    %v3443 = vadd.f32 %v3439, %v3442
    %v3444 = vmin.f32 %v3440, %v3442
    %v3445 = vmax.f32 %v3441, %v3442
    %v3446 = vld [vmem:[#allocation2 + $0x128] sm:$0xff]
    %v3447 = vadd.f32 %v3443, %v3446
    %v3448 = vmin.f32 %v3444, %v3446
    %v3449 = vmax.f32 %v3445, %v3446
    %v3450 = vld [vmem:[#allocation2 + $0x130] sm:$0xff]
    %v3451 = vadd.f32 %v3447, %v3450
    %v3452 = vmin.f32 %v3448, %v3450
    %v3453 = vmax.f32 %v3449, %v3450
    %v3454 = vld [vmem:[#allocation2 + $0x138] sm:$0xff]
    %v3455 = vadd.f32 %v3451, %v3454
    %v3456 = vmin.f32 %v3452, %v3454
    %v3457 = vmax.f32 %v3453, %v3454
    %v3458 = vld [vmem:[#allocation2 + $0x140] sm:$0xff]
    %v3459 = vadd.f32 %v3455, %v3458
    %v3460 = vmin.f32 %v3456, %v3458
    %v3461 = vmax.f32 %v3457, %v3458
    %v3462 = vld [vmem:[#allocation2 + $0x148] sm:$0xff]
    %v3463 = vadd.f32 %v3459, %v3462
    %v3464 = vmin.f32 %v3460, %v3462
    %v3465 = vmax.f32 %v3461, %v3462
    %v3466 = vld [vmem:[#allocation2 + $0x150] sm:$0xff]
    %v3467 = vadd.f32 %v3463, %v3466
    %v3468 = vmin.f32 %v3464, %v3466
    %v3469 = vmax.f32 %v3465, %v3466
    %v3470 = vld [vmem:[#allocation2 + $0x158] sm:$0xff]
    %v3471 = vadd.f32 %v3467, %v3470
    %v3472 = vmin.f32 %v3468, %v3470
    %v3473 = vmax.f32 %v3469, %v3470
    %v3474 = vld [vmem:[#allocation2 + $0x160] sm:$0xff]
    %v3475 = vadd.f32 %v3471, %v3474
    %v3476 = vmin.f32 %v3472, %v3474
    %v3477 = vmax.f32 %v3473, %v3474
    %v3478 = vsel %vm90, %v3475, 0.0
    %v3479 = vrot.slane %v3478, 4
    %v3480 = vadd.f32 %v3478, %v3479
    %v3481 = vrot.slane %v3480, 2
    %v3482 = vadd.f32 %v3480, %v3481
    %v3483 = vrot.slane %v3482, 1
    %v3484 = vadd.f32 %v3482, %v3483
    %v3485 = vsel %vm90, %v3476, inf
    %v3486 = vrot.slane %v3485, 4
    %v3487 = vmin.f32 %v3485, %v3486
    %v3488 = vrot.slane %v3487, 2
    %v3489 = vmin.f32 %v3487, %v3488
    %v3490 = vrot.slane %v3489, 1
    %v3491 = vmin.f32 %v3489, %v3490
    %v3492 = vsel %vm90, %v3477, -inf
    %v3493 = vrot.slane %v3492, 4
    %v3494 = vmax.f32 %v3492, %v3493
    %v3495 = vrot.slane %v3494, 2
    %v3496 = vmax.f32 %v3494, %v3495
    %v3497 = vrot.slane %v3496, 1
    %v3498 = vmax.f32 %v3496, %v3497
    %v3499 = vld [vmem:[#allocation2 + $0x168] sm:$0x1f]
    %vm3500 = vcmask 61440
    %v3501 = vsel %vm3500, %v3499, 0.0
    %v3502 = vrot.slane %v3501, 4
    %v3503 = vadd.f32 %v3501, %v3502
    %v3504 = vrot.slane %v3503, 2
    %v3505 = vadd.f32 %v3503, %v3504
    %v3506 = vrot.slane %v3505, 1
    %v3507 = vadd.f32 %v3505, %v3506
    %v3508 = vadd.f32 %v3484, %v3507
    %v3509 = vsel %vm3500, %v3499, inf
    %v3510 = vrot.slane %v3509, 4
    %v3511 = vmin.f32 %v3509, %v3510
    %v3512 = vrot.slane %v3511, 2
    %v3513 = vmin.f32 %v3511, %v3512
    %v3514 = vrot.slane %v3513, 1
    %v3515 = vmin.f32 %v3513, %v3514
    %v3516 = vmin.f32 %v3491, %v3515
    %v3517 = vsel %vm3500, %v3499, -inf
    %v3518 = vrot.slane %v3517, 4
    %v3519 = vmax.f32 %v3517, %v3518
    %v3520 = vrot.slane %v3519, 2
    %v3521 = vmax.f32 %v3519, %v3520
    %v3522 = vrot.slane %v3521, 1
    %v3523 = vmax.f32 %v3521, %v3522
    %v3524 = vmax.f32 %v3498, %v3523
    %v3525 = vmul.f32 %v3508, 0.002739726
    %v3526 = vsub.f32 %v3300, %v3525
    %v3527 = vmul.f32 %v3526, %v3526
    %v3528 = vadd.f32 %v3527, 0.0
    %v3529 = vmul.f32 %v3527, %v3526
    %v3530 = vadd.f32 %v3529, 0.0
    %v3531 = vmul.f32 %v3527, %v3527
    %v3532 = vadd.f32 %v3531, 0.0
    %v3533 = vsub.f32 %v3302, %v3525
    %v3534 = vmul.f32 %v3533, %v3533
    %v3535 = vadd.f32 %v3528, %v3534
    %v3536 = vmul.f32 %v3534, %v3533
    %v3537 = vadd.f32 %v3530, %v3536
    %v3538 = vmul.f32 %v3534, %v3534
    %v3539 = vadd.f32 %v3532, %v3538
    %v3540 = vsub.f32 %v3306, %v3525
    %v3541 = vmul.f32 %v3540, %v3540
    %v3542 = vadd.f32 %v3535, %v3541
    %v3543 = vmul.f32 %v3541, %v3540
    %v3544 = vadd.f32 %v3537, %v3543
    %v3545 = vmul.f32 %v3541, %v3541
    %v3546 = vadd.f32 %v3539, %v3545
    %v3547 = vsub.f32 %v3310, %v3525
    %v3548 = vmul.f32 %v3547, %v3547
    %v3549 = vadd.f32 %v3542, %v3548
    %v3550 = vmul.f32 %v3548, %v3547
    %v3551 = vadd.f32 %v3544, %v3550
    %v3552 = vmul.f32 %v3548, %v3548
    %v3553 = vadd.f32 %v3546, %v3552
    %v3554 = vsub.f32 %v3314, %v3525
    %v3555 = vmul.f32 %v3554, %v3554
    %v3556 = vadd.f32 %v3549, %v3555
    %v3557 = vmul.f32 %v3555, %v3554
    %v3558 = vadd.f32 %v3551, %v3557
    %v3559 = vmul.f32 %v3555, %v3555
    %v3560 = vadd.f32 %v3553, %v3559
    %v3561 = vsub.f32 %v3318, %v3525
    %v3562 = vmul.f32 %v3561, %v3561
    %v3563 = vadd.f32 %v3556, %v3562
    %v3564 = vmul.f32 %v3562, %v3561
    %v3565 = vadd.f32 %v3558, %v3564
    %v3566 = vmul.f32 %v3562, %v3562
    %v3567 = vadd.f32 %v3560, %v3566
    %v3568 = vsub.f32 %v3322, %v3525
    %v3569 = vmul.f32 %v3568, %v3568
    %v3570 = vadd.f32 %v3563, %v3569
    %v3571 = vmul.f32 %v3569, %v3568
    %v3572 = vadd.f32 %v3565, %v3571
    %v3573 = vmul.f32 %v3569, %v3569
    %v3574 = vadd.f32 %v3567, %v3573
    %v3575 = vsub.f32 %v3326, %v3525
    %v3576 = vmul.f32 %v3575, %v3575
    %v3577 = vadd.f32 %v3570, %v3576
    %v3578 = vmul.f32 %v3576, %v3575
    %v3579 = vadd.f32 %v3572, %v3578
    %v3580 = vmul.f32 %v3576, %v3576
    %v3581 = vadd.f32 %v3574, %v3580
    %v3582 = vsub.f32 %v3330, %v3525
    %v3583 = vmul.f32 %v3582, %v3582
    %v3584 = vadd.f32 %v3577, %v3583
    %v3585 = vmul.f32 %v3583, %v3582
    %v3586 = vadd.f32 %v3579, %v3585
    %v3587 = vmul.f32 %v3583, %v3583
    %v3588 = vadd.f32 %v3581, %v3587
    %v3589 = vsub.f32 %v3334, %v3525
    %v3590 = vmul.f32 %v3589, %v3589
    %v3591 = vadd.f32 %v3584, %v3590
    %v3592 = vmul.f32 %v3590, %v3589
    %v3593 = vadd.f32 %v3586, %v3592
    %v3594 = vmul.f32 %v3590, %v3590
    %v3595 = vadd.f32 %v3588, %v3594
    %v3596 = vsub.f32 %v3338, %v3525
    %v3597 = vmul.f32 %v3596, %v3596
    %v3598 = vadd.f32 %v3591, %v3597
    %v3599 = vmul.f32 %v3597, %v3596
    %v3600 = vadd.f32 %v3593, %v3599
    %v3601 = vmul.f32 %v3597, %v3597
    %v3602 = vadd.f32 %v3595, %v3601
    %v3603 = vsub.f32 %v3342, %v3525
    %v3604 = vmul.f32 %v3603, %v3603
    %v3605 = vadd.f32 %v3598, %v3604
    %v3606 = vmul.f32 %v3604, %v3603
    %v3607 = vadd.f32 %v3600, %v3606
    %v3608 = vmul.f32 %v3604, %v3604
    %v3609 = vadd.f32 %v3602, %v3608
    %v3610 = vsub.f32 %v3346, %v3525
    %v3611 = vmul.f32 %v3610, %v3610
    %v3612 = vadd.f32 %v3605, %v3611
    %v3613 = vmul.f32 %v3611, %v3610
    %v3614 = vadd.f32 %v3607, %v3613
    %v3615 = vmul.f32 %v3611, %v3611
    %v3616 = vadd.f32 %v3609, %v3615
    %v3617 = vsub.f32 %v3350, %v3525
    %v3618 = vmul.f32 %v3617, %v3617
    %v3619 = vadd.f32 %v3612, %v3618
    %v3620 = vmul.f32 %v3618, %v3617
    %v3621 = vadd.f32 %v3614, %v3620
    %v3622 = vmul.f32 %v3618, %v3618
    %v3623 = vadd.f32 %v3616, %v3622
    %v3624 = vsub.f32 %v3354, %v3525
    %v3625 = vmul.f32 %v3624, %v3624
    %v3626 = vadd.f32 %v3619, %v3625
    %v3627 = vmul.f32 %v3625, %v3624
    %v3628 = vadd.f32 %v3621, %v3627
    %v3629 = vmul.f32 %v3625, %v3625
    %v3630 = vadd.f32 %v3623, %v3629
    %v3631 = vsub.f32 %v3358, %v3525
    %v3632 = vmul.f32 %v3631, %v3631
    %v3633 = vadd.f32 %v3626, %v3632
    %v3634 = vmul.f32 %v3632, %v3631
    %v3635 = vadd.f32 %v3628, %v3634
    %v3636 = vmul.f32 %v3632, %v3632
    %v3637 = vadd.f32 %v3630, %v3636
    %v3638 = vsub.f32 %v3362, %v3525
    %v3639 = vmul.f32 %v3638, %v3638
    %v3640 = vadd.f32 %v3633, %v3639
    %v3641 = vmul.f32 %v3639, %v3638
    %v3642 = vadd.f32 %v3635, %v3641
    %v3643 = vmul.f32 %v3639, %v3639
    %v3644 = vadd.f32 %v3637, %v3643
    %v3645 = vsub.f32 %v3366, %v3525
    %v3646 = vmul.f32 %v3645, %v3645
    %v3647 = vadd.f32 %v3640, %v3646
    %v3648 = vmul.f32 %v3646, %v3645
    %v3649 = vadd.f32 %v3642, %v3648
    %v3650 = vmul.f32 %v3646, %v3646
    %v3651 = vadd.f32 %v3644, %v3650
    %v3652 = vsub.f32 %v3370, %v3525
    %v3653 = vmul.f32 %v3652, %v3652
    %v3654 = vadd.f32 %v3647, %v3653
    %v3655 = vmul.f32 %v3653, %v3652
    %v3656 = vadd.f32 %v3649, %v3655
    %v3657 = vmul.f32 %v3653, %v3653
    %v3658 = vadd.f32 %v3651, %v3657
    %v3659 = vsub.f32 %v3374, %v3525
    %v3660 = vmul.f32 %v3659, %v3659
    %v3661 = vadd.f32 %v3654, %v3660
    %v3662 = vmul.f32 %v3660, %v3659
    %v3663 = vadd.f32 %v3656, %v3662
    %v3664 = vmul.f32 %v3660, %v3660
    %v3665 = vadd.f32 %v3658, %v3664
    %v3666 = vsub.f32 %v3378, %v3525
    %v3667 = vmul.f32 %v3666, %v3666
    %v3668 = vadd.f32 %v3661, %v3667
    %v3669 = vmul.f32 %v3667, %v3666
    %v3670 = vadd.f32 %v3663, %v3669
    %v3671 = vmul.f32 %v3667, %v3667
    %v3672 = vadd.f32 %v3665, %v3671
    %v3673 = vsub.f32 %v3382, %v3525
    %v3674 = vmul.f32 %v3673, %v3673
    %v3675 = vadd.f32 %v3668, %v3674
    %v3676 = vmul.f32 %v3674, %v3673
    %v3677 = vadd.f32 %v3670, %v3676
    %v3678 = vmul.f32 %v3674, %v3674
    %v3679 = vadd.f32 %v3672, %v3678
    %v3680 = vsub.f32 %v3386, %v3525
    %v3681 = vmul.f32 %v3680, %v3680
    %v3682 = vadd.f32 %v3675, %v3681
    %v3683 = vmul.f32 %v3681, %v3680
    %v3684 = vadd.f32 %v3677, %v3683
    %v3685 = vmul.f32 %v3681, %v3681
    %v3686 = vadd.f32 %v3679, %v3685
    %v3687 = vsub.f32 %v3390, %v3525
    %v3688 = vmul.f32 %v3687, %v3687
    %v3689 = vadd.f32 %v3682, %v3688
    %v3690 = vmul.f32 %v3688, %v3687
    %v3691 = vadd.f32 %v3684, %v3690
    %v3692 = vmul.f32 %v3688, %v3688
    %v3693 = vadd.f32 %v3686, %v3692
    %v3694 = vsub.f32 %v3394, %v3525
    %v3695 = vmul.f32 %v3694, %v3694
    %v3696 = vadd.f32 %v3689, %v3695
    %v3697 = vmul.f32 %v3695, %v3694
    %v3698 = vadd.f32 %v3691, %v3697
    %v3699 = vmul.f32 %v3695, %v3695
    %v3700 = vadd.f32 %v3693, %v3699
    %v3701 = vsub.f32 %v3398, %v3525
    %v3702 = vmul.f32 %v3701, %v3701
    %v3703 = vadd.f32 %v3696, %v3702
    %v3704 = vmul.f32 %v3702, %v3701
    %v3705 = vadd.f32 %v3698, %v3704
    %v3706 = vmul.f32 %v3702, %v3702
    %v3707 = vadd.f32 %v3700, %v3706
    %v3708 = vsub.f32 %v3402, %v3525
    %v3709 = vmul.f32 %v3708, %v3708
    %v3710 = vadd.f32 %v3703, %v3709
    %v3711 = vmul.f32 %v3709, %v3708
    %v3712 = vadd.f32 %v3705, %v3711
    %v3713 = vmul.f32 %v3709, %v3709
    %v3714 = vadd.f32 %v3707, %v3713
    %v3715 = vsub.f32 %v3406, %v3525
    %v3716 = vmul.f32 %v3715, %v3715
    %v3717 = vadd.f32 %v3710, %v3716
    %v3718 = vmul.f32 %v3716, %v3715
    %v3719 = vadd.f32 %v3712, %v3718
    %v3720 = vmul.f32 %v3716, %v3716
    %v3721 = vadd.f32 %v3714, %v3720
    %v3722 = vsub.f32 %v3410, %v3525
    %v3723 = vmul.f32 %v3722, %v3722
    %v3724 = vadd.f32 %v3717, %v3723
    %v3725 = vmul.f32 %v3723, %v3722
    %v3726 = vadd.f32 %v3719, %v3725
    %v3727 = vmul.f32 %v3723, %v3723
    %v3728 = vadd.f32 %v3721, %v3727
    %v3729 = vsub.f32 %v3414, %v3525
    %v3730 = vmul.f32 %v3729, %v3729
    %v3731 = vadd.f32 %v3724, %v3730
    %v3732 = vmul.f32 %v3730, %v3729
    %v3733 = vadd.f32 %v3726, %v3732
    %v3734 = vmul.f32 %v3730, %v3730
    %v3735 = vadd.f32 %v3728, %v3734
    %v3736 = vsub.f32 %v3418, %v3525
    %v3737 = vmul.f32 %v3736, %v3736
    %v3738 = vadd.f32 %v3731, %v3737
    %v3739 = vmul.f32 %v3737, %v3736
    %v3740 = vadd.f32 %v3733, %v3739
    %v3741 = vmul.f32 %v3737, %v3737
    %v3742 = vadd.f32 %v3735, %v3741
    %v3743 = vsub.f32 %v3422, %v3525
    %v3744 = vmul.f32 %v3743, %v3743
    %v3745 = vadd.f32 %v3738, %v3744
    %v3746 = vmul.f32 %v3744, %v3743
    %v3747 = vadd.f32 %v3740, %v3746
    %v3748 = vmul.f32 %v3744, %v3744
    %v3749 = vadd.f32 %v3742, %v3748
    %v3750 = vsub.f32 %v3426, %v3525
    %v3751 = vmul.f32 %v3750, %v3750
    %v3752 = vadd.f32 %v3745, %v3751
    %v3753 = vmul.f32 %v3751, %v3750
    %v3754 = vadd.f32 %v3747, %v3753
    %v3755 = vmul.f32 %v3751, %v3751
    %v3756 = vadd.f32 %v3749, %v3755
    %v3757 = vsub.f32 %v3430, %v3525
    %v3758 = vmul.f32 %v3757, %v3757
    %v3759 = vadd.f32 %v3752, %v3758
    %v3760 = vmul.f32 %v3758, %v3757
    %v3761 = vadd.f32 %v3754, %v3760
    %v3762 = vmul.f32 %v3758, %v3758
    %v3763 = vadd.f32 %v3756, %v3762
    %v3764 = vsub.f32 %v3434, %v3525
    %v3765 = vmul.f32 %v3764, %v3764
    %v3766 = vadd.f32 %v3759, %v3765
    %v3767 = vmul.f32 %v3765, %v3764
    %v3768 = vadd.f32 %v3761, %v3767
    %v3769 = vmul.f32 %v3765, %v3765
    %v3770 = vadd.f32 %v3763, %v3769
    %v3771 = vsub.f32 %v3438, %v3525
    %v3772 = vmul.f32 %v3771, %v3771
    %v3773 = vadd.f32 %v3766, %v3772
    %v3774 = vmul.f32 %v3772, %v3771
    %v3775 = vadd.f32 %v3768, %v3774
    %v3776 = vmul.f32 %v3772, %v3772
    %v3777 = vadd.f32 %v3770, %v3776
    %v3778 = vsub.f32 %v3442, %v3525
    %v3779 = vmul.f32 %v3778, %v3778
    %v3780 = vadd.f32 %v3773, %v3779
    %v3781 = vmul.f32 %v3779, %v3778
    %v3782 = vadd.f32 %v3775, %v3781
    %v3783 = vmul.f32 %v3779, %v3779
    %v3784 = vadd.f32 %v3777, %v3783
    %v3785 = vsub.f32 %v3446, %v3525
    %v3786 = vmul.f32 %v3785, %v3785
    %v3787 = vadd.f32 %v3780, %v3786
    %v3788 = vmul.f32 %v3786, %v3785
    %v3789 = vadd.f32 %v3782, %v3788
    %v3790 = vmul.f32 %v3786, %v3786
    %v3791 = vadd.f32 %v3784, %v3790
    %v3792 = vsub.f32 %v3450, %v3525
    %v3793 = vmul.f32 %v3792, %v3792
    %v3794 = vadd.f32 %v3787, %v3793
    %v3795 = vmul.f32 %v3793, %v3792
    %v3796 = vadd.f32 %v3789, %v3795
    %v3797 = vmul.f32 %v3793, %v3793
    %v3798 = vadd.f32 %v3791, %v3797
    %v3799 = vsub.f32 %v3454, %v3525
    %v3800 = vmul.f32 %v3799, %v3799
    %v3801 = vadd.f32 %v3794, %v3800
    %v3802 = vmul.f32 %v3800, %v3799
    %v3803 = vadd.f32 %v3796, %v3802
    %v3804 = vmul.f32 %v3800, %v3800
    %v3805 = vadd.f32 %v3798, %v3804
    %v3806 = vsub.f32 %v3458, %v3525
    %v3807 = vmul.f32 %v3806, %v3806
    %v3808 = vadd.f32 %v3801, %v3807
    %v3809 = vmul.f32 %v3807, %v3806
    %v3810 = vadd.f32 %v3803, %v3809
    %v3811 = vmul.f32 %v3807, %v3807
    %v3812 = vadd.f32 %v3805, %v3811
    %v3813 = vsub.f32 %v3462, %v3525
    %v3814 = vmul.f32 %v3813, %v3813
    %v3815 = vadd.f32 %v3808, %v3814
    %v3816 = vmul.f32 %v3814, %v3813
    %v3817 = vadd.f32 %v3810, %v3816
    %v3818 = vmul.f32 %v3814, %v3814
    %v3819 = vadd.f32 %v3812, %v3818
    %v3820 = vsub.f32 %v3466, %v3525
    %v3821 = vmul.f32 %v3820, %v3820
    %v3822 = vadd.f32 %v3815, %v3821
    %v3823 = vmul.f32 %v3821, %v3820
    %v3824 = vadd.f32 %v3817, %v3823
    %v3825 = vmul.f32 %v3821, %v3821
    %v3826 = vadd.f32 %v3819, %v3825
    %v3827 = vsub.f32 %v3470, %v3525
    %v3828 = vmul.f32 %v3827, %v3827
    %v3829 = vadd.f32 %v3822, %v3828
    %v3830 = vmul.f32 %v3828, %v3827
    %v3831 = vadd.f32 %v3824, %v3830
    %v3832 = vmul.f32 %v3828, %v3828
    %v3833 = vadd.f32 %v3826, %v3832
    %v3834 = vsub.f32 %v3474, %v3525
    %v3835 = vmul.f32 %v3834, %v3834
    %v3836 = vadd.f32 %v3829, %v3835
    %v3837 = vmul.f32 %v3835, %v3834
    %v3838 = vadd.f32 %v3831, %v3837
    %v3839 = vmul.f32 %v3835, %v3835
    %v3840 = vadd.f32 %v3833, %v3839
    %v3841 = vsel %vm90, %v3836, 0.0
    %v3842 = vrot.slane %v3841, 4
    %v3843 = vadd.f32 %v3841, %v3842
    %v3844 = vrot.slane %v3843, 2
    %v3845 = vadd.f32 %v3843, %v3844
    %v3846 = vrot.slane %v3845, 1
    %v3847 = vadd.f32 %v3845, %v3846
    %v3848 = vsel %vm90, %v3838, 0.0
    %v3849 = vrot.slane %v3848, 4
    %v3850 = vadd.f32 %v3848, %v3849
    %v3851 = vrot.slane %v3850, 2
    %v3852 = vadd.f32 %v3850, %v3851
    %v3853 = vrot.slane %v3852, 1
    %v3854 = vadd.f32 %v3852, %v3853
    %v3855 = vsel %vm90, %v3840, 0.0
    %v3856 = vrot.slane %v3855, 4
    %v3857 = vadd.f32 %v3855, %v3856
    %v3858 = vrot.slane %v3857, 2
    %v3859 = vadd.f32 %v3857, %v3858
    %v3860 = vrot.slane %v3859, 1
    %v3861 = vadd.f32 %v3859, %v3860
    %v3862 = vsub.f32 %v3499, %v3525
    %v3863 = vmul.f32 %v3862, %v3862
    %v3864 = vsel %vm3500, %v3863, 0.0
    %v3865 = vrot.slane %v3864, 4
    %v3866 = vadd.f32 %v3864, %v3865
    %v3867 = vrot.slane %v3866, 2
    %v3868 = vadd.f32 %v3866, %v3867
    %v3869 = vrot.slane %v3868, 1
    %v3870 = vadd.f32 %v3868, %v3869
    %v3871 = vadd.f32 %v3847, %v3870
    %v3872 = vmul.f32 %v3863, %v3862
    %v3873 = vsel %vm3500, %v3872, 0.0
    %v3874 = vrot.slane %v3873, 4
    %v3875 = vadd.f32 %v3873, %v3874
    %v3876 = vrot.slane %v3875, 2
    %v3877 = vadd.f32 %v3875, %v3876
    %v3878 = vrot.slane %v3877, 1
    %v3879 = vadd.f32 %v3877, %v3878
    %v3880 = vadd.f32 %v3854, %v3879
    %v3881 = vmul.f32 %v3863, %v3863
    %v3882 = vsel %vm3500, %v3881, 0.0
    %v3883 = vrot.slane %v3882, 4
    %v3884 = vadd.f32 %v3882, %v3883
    %v3885 = vrot.slane %v3884, 2
    %v3886 = vadd.f32 %v3884, %v3885
    %v3887 = vrot.slane %v3886, 1
    %v3888 = vadd.f32 %v3886, %v3887
    %v3889 = vadd.f32 %v3861, %v3888
    %v3890 = vmul.f32 %v3871, 0.0027472528
    %v3891 = vrsqrt.pop %v3890
    %v3892 = vmul.f32 %v3890, %v3891
    %vm3893 = vcmp.eq.f32.partialorder %v3890, inf
    %v3894 = vsel %vm3893, %v3890, %v3892
    %vm3895 = vcmp.eq.f32.partialorder %v3890, 0.0
    %v3896 = vand.u32 %v3890, 2147483648
    %v3897 = vsel %vm3895, %v3896, %v3894
    %v3898 = vmul.f32 %v3880, 0.002739726
    %v3899 = vmul.f32 %v3889, 0.002739726
    %v3900 = vmul.f32 %v3897, %v3890
    %v3901 = vadd.f32 %v3900, 1e-08
    %v3902 = vrcp.pop %v3901
    %v3903 = vmul.f32 %v3898, %v3902
    %v3904 = vmul.f32 %v3890, %v3890
    %v3905 = vadd.f32 %v3904, 1e-08
    %v3906 = vrcp.pop %v3905
    %v3907 = vmul.f32 %v3899, %v3906
    %vm3908 = vcmask 57344
    %3909 = vst.msk [vmem:[#allocation3] sm:$0x1] %vm3908, %v3525
    %3910 = vst.msk [vmem:[#allocation3 + $0x1] sm:$0x1] %vm3908, %v3897
    %3911 = vst.msk [vmem:[#allocation3 + $0x2] sm:$0x1] %vm3908, %v3516
    %3912 = vst.msk [vmem:[#allocation3 + $0x3] sm:$0x1] %vm3908, %v3524
    %3913 = vst.msk [vmem:[#allocation3 + $0x4] sm:$0x1] %vm3908, %v3903
    %3914 = vst.msk [vmem:[#allocation3 + $0x5] sm:$0x1] %vm3908, %v3907
    %v3915 = vld [vmem:[%s7] sm:$0xff]
    %v3916 = vld [vmem:[%s7 + $0x8] sm:$0xff]
    %v3917 = vld [vmem:[%s7 + $0x10] sm:$0xff]
    %v3918 = vld [vmem:[%s7 + $0x18] sm:$0xff]
    %v3919 = vld [vmem:[#allocation3] sm:$0x1]
    %3921 = vset.pattern.permute.xlu0 0
    %3922 = vperm.xlu0 %3921, %v3915
    %v3923 = vpop.permute.xlu0 %3922
    %3926 = vset.pattern.permute.xlu0 0
    %3927 = vperm.xlu0 %3926, %v3916
    %v3928 = vpop.permute.xlu0 %3927
    %3931 = vset.pattern.permute.xlu0 0
    %3932 = vperm.xlu0 %3931, %v3917
    %v3933 = vpop.permute.xlu0 %3932
    %3936 = vset.pattern.permute.xlu0 0
    %3937 = vperm.xlu0 %3936, %v3918
    %v3938 = vpop.permute.xlu0 %3937
    %v3940 = vlaneseq
    %v3941 = vshrl.u32 %v3940, 7
    %v3942 = vsub.s32 0, %v3941
    %v3943 = vrot.slane %v3919, %v3942
    %v3944 = vmul.f32 %v3923, %v3943
    %v3945 = vmul.f32 %v3928, %v3943
    %v3946 = vmul.f32 %v3933, %v3943
    %v3947 = vmul.f32 %v3938, %v3943
    %v3948 = vld [vmem:[#allocation3 + $0x1] sm:$0x1]
    %3949 = vset.pattern.permute.xlu0 1
    %3950 = vperm.xlu0 %3949, %v3915
    %v3951 = vpop.permute.xlu0 %3950
    %3953 = vset.pattern.permute.xlu0 1
    %3954 = vperm.xlu0 %3953, %v3916
    %v3955 = vpop.permute.xlu0 %3954
    %3957 = vset.pattern.permute.xlu0 1
    %3958 = vperm.xlu0 %3957, %v3917
    %v3959 = vpop.permute.xlu0 %3958
    %3961 = vset.pattern.permute.xlu0 1
    %3962 = vperm.xlu0 %3961, %v3918
    %v3963 = vpop.permute.xlu0 %3962
    %v3965 = vlaneseq
    %v3966 = vshrl.u32 %v3965, 7
    %v3967 = vsub.s32 0, %v3966
    %v3968 = vrot.slane %v3948, %v3967
    %v3969 = vmul.f32 %v3951, %v3968
    %v3970 = vmul.f32 %v3955, %v3968
    %v3971 = vmul.f32 %v3959, %v3968
    %v3972 = vmul.f32 %v3963, %v3968
    %v3973 = vadd.f32 %v3944, %v3969
    %v3974 = vadd.f32 %v3945, %v3970
    %v3975 = vadd.f32 %v3946, %v3971
    %v3976 = vadd.f32 %v3947, %v3972
    %v3977 = vld [vmem:[#allocation3 + $0x2] sm:$0x1]
    %3978 = vset.pattern.permute.xlu0 2
    %3979 = vperm.xlu0 %3978, %v3915
    %v3980 = vpop.permute.xlu0 %3979
    %3982 = vset.pattern.permute.xlu0 2
    %3983 = vperm.xlu0 %3982, %v3916
    %v3984 = vpop.permute.xlu0 %3983
    %3986 = vset.pattern.permute.xlu0 2
    %3987 = vperm.xlu0 %3986, %v3917
    %v3988 = vpop.permute.xlu0 %3987
    %3990 = vset.pattern.permute.xlu0 2
    %3991 = vperm.xlu0 %3990, %v3918
    %v3992 = vpop.permute.xlu0 %3991
    %v3994 = vlaneseq
    %v3995 = vshrl.u32 %v3994, 7
    %v3996 = vsub.s32 0, %v3995
    %v3997 = vrot.slane %v3977, %v3996
    %v3998 = vmul.f32 %v3980, %v3997
    %v3999 = vmul.f32 %v3984, %v3997
    %v4000 = vmul.f32 %v3988, %v3997
    %v4001 = vmul.f32 %v3992, %v3997
    %v4002 = vadd.f32 %v3973, %v3998
    %v4003 = vadd.f32 %v3974, %v3999
    %v4004 = vadd.f32 %v3975, %v4000
    %v4005 = vadd.f32 %v3976, %v4001
    %v4006 = vld [vmem:[#allocation3 + $0x3] sm:$0x1]
    %4007 = vset.pattern.permute.xlu0 3
    %4008 = vperm.xlu0 %4007, %v3915
    %v4009 = vpop.permute.xlu0 %4008
    %4011 = vset.pattern.permute.xlu0 3
    %4012 = vperm.xlu0 %4011, %v3916
    %v4013 = vpop.permute.xlu0 %4012
    %4015 = vset.pattern.permute.xlu0 3
    %4016 = vperm.xlu0 %4015, %v3917
    %v4017 = vpop.permute.xlu0 %4016
    %4019 = vset.pattern.permute.xlu0 3
    %4020 = vperm.xlu0 %4019, %v3918
    %v4021 = vpop.permute.xlu0 %4020
    %v4023 = vlaneseq
    %v4024 = vshrl.u32 %v4023, 7
    %v4025 = vsub.s32 0, %v4024
    %v4026 = vrot.slane %v4006, %v4025
    %v4027 = vmul.f32 %v4009, %v4026
    %v4028 = vmul.f32 %v4013, %v4026
    %v4029 = vmul.f32 %v4017, %v4026
    %v4030 = vmul.f32 %v4021, %v4026
    %v4031 = vadd.f32 %v4002, %v4027
    %v4032 = vadd.f32 %v4003, %v4028
    %v4033 = vadd.f32 %v4004, %v4029
    %v4034 = vadd.f32 %v4005, %v4030
    %v4035 = vld [vmem:[#allocation3 + $0x4] sm:$0x1]
    %4036 = vset.pattern.permute.xlu0 4
    %4037 = vperm.xlu0 %4036, %v3915
    %v4038 = vpop.permute.xlu0 %4037
    %4040 = vset.pattern.permute.xlu0 4
    %4041 = vperm.xlu0 %4040, %v3916
    %v4042 = vpop.permute.xlu0 %4041
    %4044 = vset.pattern.permute.xlu0 4
    %4045 = vperm.xlu0 %4044, %v3917
    %v4046 = vpop.permute.xlu0 %4045
    %4048 = vset.pattern.permute.xlu0 4
    %4049 = vperm.xlu0 %4048, %v3918
    %v4050 = vpop.permute.xlu0 %4049
    %v4052 = vlaneseq
    %v4053 = vshrl.u32 %v4052, 7
    %v4054 = vsub.s32 0, %v4053
    %v4055 = vrot.slane %v4035, %v4054
    %v4056 = vmul.f32 %v4038, %v4055
    %v4057 = vmul.f32 %v4042, %v4055
    %v4058 = vmul.f32 %v4046, %v4055
    %v4059 = vmul.f32 %v4050, %v4055
    %v4060 = vadd.f32 %v4031, %v4056
    %v4061 = vadd.f32 %v4032, %v4057
    %v4062 = vadd.f32 %v4033, %v4058
    %v4063 = vadd.f32 %v4034, %v4059
    %v4064 = vld [vmem:[#allocation3 + $0x5] sm:$0x1]
    %4065 = vset.pattern.permute.xlu0 5
    %4066 = vperm.xlu0 %4065, %v3915
    %v4067 = vpop.permute.xlu0 %4066
    %4069 = vset.pattern.permute.xlu0 5
    %4070 = vperm.xlu0 %4069, %v3916
    %v4071 = vpop.permute.xlu0 %4070
    %4073 = vset.pattern.permute.xlu0 5
    %4074 = vperm.xlu0 %4073, %v3917
    %v4075 = vpop.permute.xlu0 %4074
    %4077 = vset.pattern.permute.xlu0 5
    %4078 = vperm.xlu0 %4077, %v3918
    %v4079 = vpop.permute.xlu0 %4078
    %v4081 = vlaneseq
    %v4082 = vshrl.u32 %v4081, 7
    %v4083 = vsub.s32 0, %v4082
    %v4084 = vrot.slane %v4064, %v4083
    %v4085 = vmul.f32 %v4067, %v4084
    %v4086 = vmul.f32 %v4071, %v4084
    %v4087 = vmul.f32 %v4075, %v4084
    %v4088 = vmul.f32 %v4079, %v4084
    %v4089 = vadd.f32 %v4060, %v4085
    %v4090 = vadd.f32 %v4061, %v4086
    %v4091 = vadd.f32 %v4062, %v4087
    %v4092 = vadd.f32 %v4063, %v4088
    %v4093 = vld [vmem:[%s8] sm:$0xff]
    %v4094 = vld [vmem:[%s8 + $0x8] sm:$0xff]
    %v4095 = vld [vmem:[%s8 + $0x10] sm:$0xff]
    %v4096 = vld [vmem:[%s8 + $0x18] sm:$0xff]
    %4098 = vset.pattern.permute.xlu0 0
    %4099 = vperm.xlu0 %4098, %v4093
    %v4100 = vpop.permute.xlu0 %4099
    %4103 = vset.pattern.permute.xlu0 0
    %4104 = vperm.xlu0 %4103, %v4094
    %v4105 = vpop.permute.xlu0 %4104
    %4108 = vset.pattern.permute.xlu0 0
    %4109 = vperm.xlu0 %4108, %v4095
    %v4110 = vpop.permute.xlu0 %4109
    %4113 = vset.pattern.permute.xlu0 0
    %4114 = vperm.xlu0 %4113, %v4096
    %v4115 = vpop.permute.xlu0 %4114
    %v4117 = vadd.f32 %v4089, %v4100
    %v4118 = vadd.f32 %v4090, %v4105
    %v4119 = vadd.f32 %v4091, %v4110
    %v4120 = vadd.f32 %v4092, %v4115
    %v4121 = vld [vmem:[%s9] sm:$0xff]
    %v4122 = vld [vmem:[%s9 + $0x8] sm:$0xff]
    %v4123 = vld [vmem:[%s9 + $0x10] sm:$0xff]
    %v4124 = vld [vmem:[%s9 + $0x18] sm:$0xff]
    %v4125 = vld [vmem:[%s9 + $0x20] sm:$0xff]
    %v4126 = vld [vmem:[%s9 + $0x28] sm:$0xff]
    %v4127 = vld [vmem:[%s9 + $0x30] sm:$0xff]
    %v4128 = vld [vmem:[%s9 + $0x38] sm:$0xff]
    %v4129 = vld [vmem:[%s10] sm:$0xff]
    %v4130 = vld [vmem:[%s10 + $0x8] sm:$0xff]
    %v4131 = vld [vmem:[%s10 + $0x10] sm:$0xff]
    %v4132 = vld [vmem:[%s10 + $0x18] sm:$0xff]
    %v4133 = vld [vmem:[%s10 + $0x20] sm:$0xff]
    %v4134 = vld [vmem:[%s10 + $0x28] sm:$0xff]
    %v4135 = vld [vmem:[%s10 + $0x30] sm:$0xff]
    %v4136 = vld [vmem:[%s10 + $0x38] sm:$0xff]
    %vm4137 = vcmask 261120
    %v4139 = vsel %vm4137, %v4129, 0
    %v4142 = vsel %vm4137, %v4130, 0
    %v4145 = vsel %vm4137, %v4131, 0
    %v4148 = vsel %vm4137, %v4132, 0
    %v4151 = vsel %vm4137, %v4133, 0
    %v4154 = vsel %vm4137, %v4134, 0
    %v4157 = vsel %vm4137, %v4135, 0
    %v4160 = vsel %vm4137, %v4136, 0
    %4162 = vmatprep.subr.mxu0 0.0
    %4163 = vmatpush1.msra.mxu0 0.0
    %4164 = vmatprep.subr.mxu0 0.0
    %4165 = vmatpush1.msra.mxu0 0.0
    %4166 = vmatprep.subr.mxu0 0.0
    %4167 = vmatpush1.msra.mxu0 0.0
    %4168 = vmatprep.subr.mxu0 0.0
    %4169 = vmatpush1.msra.mxu0 0.0
    %4170 = vmatprep.subr.mxu0 0.0
    %4171 = vmatpush1.msra.mxu0 0.0
    %4172 = vmatprep.subr.mxu0 0.0
    %4173 = vmatpush1.msra.mxu0 0.0
    %4174 = vmatprep.subr.mxu0 0.0
    %4175 = vmatpush1.msra.mxu0 0.0
    %4176 = vmatprep.subr.mxu0 0.0
    %4177 = vmatpush1.msra.mxu0 0.0
    %4178 = vmatprep.subr.mxu0 0.0
    %4179 = vmatpush1.msra.mxu0 0.0
    %4180 = vmatprep.subr.mxu0 0.0
    %4181 = vmatpush1.msra.mxu0 0.0
    %4182 = vmatprep.subr.mxu0 0.0
    %4183 = vmatpush1.msra.mxu0 0.0
    %4184 = vmatprep.subr.mxu0 0.0
    %4185 = vmatpush1.msra.mxu0 0.0
    %4186 = vmatprep.subr.mxu0 0.0
    %4187 = vmatpush1.msra.mxu0 %v4120
    %4188 = vmatprep.subr.mxu0 0.0
    %4189 = vmatpush1.msra.mxu0 %v4119
    %4190 = vmatprep.subr.mxu0 0.0
    %4191 = vmatpush1.msra.mxu0 %v4118
    %4192 = vmatprep.subr.mxu0 0.0
    %4193 = vmatpush1.msra.mxu0 %v4117
    %4194 = vmatprep.subr.mxu0 0.0
    %4195 = vmatpush2.msra.mxu0 0.0
    %4196 = vmatprep.subr.mxu0 0.0
    %4197 = vmatpush2.msra.mxu0 0.0
    %4198 = vmatprep.subr.mxu0 0.0
    %4199 = vmatpush2.msra.mxu0 0.0
    %4200 = vmatprep.subr.mxu0 0.0
    %4201 = vmatpush2.msra.mxu0 0.0
    %4202 = vmatprep.subr.mxu0 0.0
    %4203 = vmatpush2.msra.mxu0 0.0
    %4204 = vmatprep.subr.mxu0 0.0
    %4205 = vmatpush2.msra.mxu0 0.0
    %4206 = vmatprep.subr.mxu0 0.0
    %4207 = vmatpush2.msra.mxu0 0.0
    %4208 = vmatprep.subr.mxu0 0.0
    %4209 = vmatpush2.msra.mxu0 0.0
    %4210 = vmatprep.subr.mxu0 0.0
    %4211 = vmatpush2.msra.mxu0 0.0
    %4212 = vmatprep.subr.mxu0 0.0
    %4213 = vmatpush2.msra.mxu0 0.0
    %4214 = vmatprep.subr.mxu0 0.0
    %4215 = vmatpush2.msra.mxu0 0.0
    %4216 = vmatprep.subr.mxu0 0.0
    %4217 = vmatpush2.msra.mxu0 0.0
    %4218 = vmatprep.subr.mxu0 0.0
    %4219 = vmatpush2.msra.mxu0 0.0
    %4220 = vmatprep.subr.mxu0 0.0
    %4221 = vmatpush2.msra.mxu0 0.0
    %4222 = vmatprep.subr.mxu0 0.0
    %4223 = vmatpush2.msra.mxu0 0.0
    %4224 = vmatprep.subr.mxu0 0.0
    %4225 = vmatpush2.msra.mxu0 0.0
    %4226 = vmatprep.mubr.f32.mxu0 0.0
    %4227 = vmatmul.mubr.f32.gmra.mxu0 %v4139
    %v4228 = vpop.f32.mrf.mxu0
    %v4229 = vadd.f32 0.0, %v4228
    %v4230 = vpop.f32.mrf.mxu0
    %4231 = vmatprep.mubr.f32.mxu0 0.0
    %4232 = vmatmul.mubr.f32.gmra.mxu0 %v4142
    %v4233 = vpop.f32.mrf.mxu0
    %v4234 = vadd.f32 0.0, %v4233
    %v4235 = vpop.f32.mrf.mxu0
    %4236 = vmatprep.mubr.f32.mxu0 0.0
    %4237 = vmatmul.mubr.f32.gmra.mxu0 %v4145
    %v4238 = vpop.f32.mrf.mxu0
    %v4239 = vadd.f32 0.0, %v4238
    %v4240 = vpop.f32.mrf.mxu0
    %4241 = vmatprep.mubr.f32.mxu0 0.0
    %4242 = vmatmul.mubr.f32.gmra.mxu0 %v4148
    %v4243 = vpop.f32.mrf.mxu0
    %v4244 = vadd.f32 0.0, %v4243
    %v4245 = vpop.f32.mrf.mxu0
    %4246 = vmatprep.mubr.f32.mxu0 0.0
    %4247 = vmatmul.mubr.f32.gmra.mxu0 %v4151
    %v4248 = vpop.f32.mrf.mxu0
    %v4249 = vadd.f32 0.0, %v4248
    %v4250 = vpop.f32.mrf.mxu0
    %4251 = vmatprep.mubr.f32.mxu0 0.0
    %4252 = vmatmul.mubr.f32.gmra.mxu0 %v4154
    %v4253 = vpop.f32.mrf.mxu0
    %v4254 = vadd.f32 0.0, %v4253
    %v4255 = vpop.f32.mrf.mxu0
    %4256 = vmatprep.mubr.f32.mxu0 0.0
    %4257 = vmatmul.mubr.f32.gmra.mxu0 %v4157
    %v4258 = vpop.f32.mrf.mxu0
    %v4259 = vadd.f32 0.0, %v4258
    %v4260 = vpop.f32.mrf.mxu0
    %4261 = vmatprep.mubr.f32.mxu0 0.0
    %4262 = vmatmul.mubr.f32.gmra.mxu0 %v4160
    %v4263 = vpop.f32.mrf.mxu0
    %v4264 = vadd.f32 0.0, %v4263
    %v4265 = vpop.f32.mrf.mxu0
    %4266 = vdwg.mxu0
    %4267 = vmatprep.subr.mxu0 0.0
    %4268 = vmatpush1.msra.mxu0 %v3299
    %4269 = vmatprep.subr.mxu0 0.0
    %4270 = vmatpush1.msra.mxu0 %v3298
    %4271 = vmatprep.subr.mxu0 0.0
    %4272 = vmatpush1.msra.mxu0 %v3297
    %4273 = vmatprep.subr.mxu0 0.0
    %4274 = vmatpush1.msra.mxu0 %v3296
    %4275 = vmatprep.subr.mxu0 0.0
    %4276 = vmatpush1.msra.mxu0 %v3295
    %4277 = vmatprep.subr.mxu0 0.0
    %4278 = vmatpush1.msra.mxu0 %v3294
    %4279 = vmatprep.subr.mxu0 0.0
    %4280 = vmatpush1.msra.mxu0 %v3293
    %4281 = vmatprep.subr.mxu0 0.0
    %4282 = vmatpush1.msra.mxu0 %v3292
    %4283 = vmatprep.subr.mxu0 0.0
    %4284 = vmatpush1.msra.mxu0 %v3291
    %4285 = vmatprep.subr.mxu0 0.0
    %4286 = vmatpush1.msra.mxu0 %v3290
    %4287 = vmatprep.subr.mxu0 0.0
    %4288 = vmatpush1.msra.mxu0 %v3289
    %4289 = vmatprep.subr.mxu0 0.0
    %4290 = vmatpush1.msra.mxu0 %v3288
    %4291 = vmatprep.subr.mxu0 0.0
    %4292 = vmatpush1.msra.mxu0 %v3287
    %4293 = vmatprep.subr.mxu0 0.0
    %4294 = vmatpush1.msra.mxu0 %v3286
    %4295 = vmatprep.subr.mxu0 0.0
    %4296 = vmatpush1.msra.mxu0 %v3285
    %4297 = vmatprep.subr.mxu0 0.0
    %4298 = vmatpush1.msra.mxu0 %v3284
    %4299 = vmatprep.subr.mxu0 0.0
    %4300 = vmatpush2.msra.mxu0 0.0
    %4301 = vmatprep.subr.mxu0 0.0
    %4302 = vmatpush2.msra.mxu0 0.0
    %4303 = vmatprep.subr.mxu0 0.0
    %4304 = vmatpush2.msra.mxu0 0.0
    %4305 = vmatprep.subr.mxu0 0.0
    %4306 = vmatpush2.msra.mxu0 0.0
    %4307 = vmatprep.subr.mxu0 0.0
    %4308 = vmatpush2.msra.mxu0 0.0
    %4309 = vmatprep.subr.mxu0 0.0
    %4310 = vmatpush2.msra.mxu0 0.0
    %4311 = vmatprep.subr.mxu0 0.0
    %4312 = vmatpush2.msra.mxu0 0.0
    %4313 = vmatprep.subr.mxu0 0.0
    %4314 = vmatpush2.msra.mxu0 0.0
    %4315 = vmatprep.subr.mxu0 0.0
    %4316 = vmatpush2.msra.mxu0 0.0
    %4317 = vmatprep.subr.mxu0 0.0
    %4318 = vmatpush2.msra.mxu0 0.0
    %4319 = vmatprep.subr.mxu0 0.0
    %4320 = vmatpush2.msra.mxu0 0.0
    %4321 = vmatprep.subr.mxu0 0.0
    %4322 = vmatpush2.msra.mxu0 0.0
    %4323 = vmatprep.subr.mxu0 0.0
    %4324 = vmatpush2.msra.mxu0 0.0
    %4325 = vmatprep.subr.mxu0 0.0
    %4326 = vmatpush2.msra.mxu0 0.0
    %4327 = vmatprep.subr.mxu0 0.0
    %4328 = vmatpush2.msra.mxu0 0.0
    %4329 = vmatprep.subr.mxu0 0.0
    %4330 = vmatpush2.msra.mxu0 0.0
    %4331 = vmatprep.mubr.f32.mxu0 0.0
    %4332 = vmatmul.mubr.f32.gmra.mxu0 %v4121
    %v4333 = vpop.f32.mrf.mxu0
    %v4334 = vadd.f32 %v4229, %v4333
    %v4335 = vpop.f32.mrf.mxu0
    %4336 = vmatprep.mubr.f32.mxu0 0.0
    %4337 = vmatmul.mubr.f32.gmra.mxu0 %v4122
    %v4338 = vpop.f32.mrf.mxu0
    %v4339 = vadd.f32 %v4234, %v4338
    %v4340 = vpop.f32.mrf.mxu0
    %4341 = vmatprep.mubr.f32.mxu0 0.0
    %4342 = vmatmul.mubr.f32.gmra.mxu0 %v4123
    %v4343 = vpop.f32.mrf.mxu0
    %v4344 = vadd.f32 %v4239, %v4343
    %v4345 = vpop.f32.mrf.mxu0
    %4346 = vmatprep.mubr.f32.mxu0 0.0
    %4347 = vmatmul.mubr.f32.gmra.mxu0 %v4124
    %v4348 = vpop.f32.mrf.mxu0
    %v4349 = vadd.f32 %v4244, %v4348
    %v4350 = vpop.f32.mrf.mxu0
    %4351 = vmatprep.mubr.f32.mxu0 0.0
    %4352 = vmatmul.mubr.f32.gmra.mxu0 %v4125
    %v4353 = vpop.f32.mrf.mxu0
    %v4354 = vadd.f32 %v4249, %v4353
    %v4355 = vpop.f32.mrf.mxu0
    %4356 = vmatprep.mubr.f32.mxu0 0.0
    %4357 = vmatmul.mubr.f32.gmra.mxu0 %v4126
    %v4358 = vpop.f32.mrf.mxu0
    %v4359 = vadd.f32 %v4254, %v4358
    %v4360 = vpop.f32.mrf.mxu0
    %4361 = vmatprep.mubr.f32.mxu0 0.0
    %4362 = vmatmul.mubr.f32.gmra.mxu0 %v4127
    %v4363 = vpop.f32.mrf.mxu0
    %v4364 = vadd.f32 %v4259, %v4363
    %v4365 = vpop.f32.mrf.mxu0
    %4366 = vmatprep.mubr.f32.mxu0 0.0
    %4367 = vmatmul.mubr.f32.gmra.mxu0 %v4128
    %v4368 = vpop.f32.mrf.mxu0
    %v4369 = vadd.f32 %v4264, %v4368
    %v4370 = vpop.f32.mrf.mxu0
    %4371 = vdwg.mxu0
    %v4372 = vld [vmem:[%s11] sm:$0xff]
    %v4373 = vld [vmem:[%s11 + $0x8] sm:$0xff]
    %v4374 = vld [vmem:[%s11 + $0x10] sm:$0xff]
    %v4375 = vld [vmem:[%s11 + $0x18] sm:$0xff]
    %v4376 = vld [vmem:[%s11 + $0x20] sm:$0xff]
    %v4377 = vld [vmem:[%s11 + $0x28] sm:$0xff]
    %v4378 = vld [vmem:[%s11 + $0x30] sm:$0xff]
    %v4379 = vld [vmem:[%s11 + $0x38] sm:$0xff]
    %4381 = vset.pattern.permute.xlu0 0
    %4382 = vperm.xlu0 %4381, %v4372
    %v4383 = vpop.permute.xlu0 %4382
    %4386 = vset.pattern.permute.xlu0 0
    %4387 = vperm.xlu0 %4386, %v4373
    %v4388 = vpop.permute.xlu0 %4387
    %4391 = vset.pattern.permute.xlu0 0
    %4392 = vperm.xlu0 %4391, %v4374
    %v4393 = vpop.permute.xlu0 %4392
    %4396 = vset.pattern.permute.xlu0 0
    %4397 = vperm.xlu0 %4396, %v4375
    %v4398 = vpop.permute.xlu0 %4397
    %4401 = vset.pattern.permute.xlu0 0
    %4402 = vperm.xlu0 %4401, %v4376
    %v4403 = vpop.permute.xlu0 %4402
    %4406 = vset.pattern.permute.xlu0 0
    %4407 = vperm.xlu0 %4406, %v4377
    %v4408 = vpop.permute.xlu0 %4407
    %4411 = vset.pattern.permute.xlu0 0
    %4412 = vperm.xlu0 %4411, %v4378
    %v4413 = vpop.permute.xlu0 %4412
    %4416 = vset.pattern.permute.xlu0 0
    %4417 = vperm.xlu0 %4416, %v4379
    %v4418 = vpop.permute.xlu0 %4417
    %v4420 = vadd.f32 %v4334, %v4383
    %v4421 = vadd.f32 %v4339, %v4388
    %v4422 = vadd.f32 %v4344, %v4393
    %v4423 = vadd.f32 %v4349, %v4398
    %v4424 = vadd.f32 %v4354, %v4403
    %v4425 = vadd.f32 %v4359, %v4408
    %v4426 = vadd.f32 %v4364, %v4413
    %v4427 = vadd.f32 %v4369, %v4418
    %v4428 = vmax.f32 %v4420, 0.0
    %v4429 = vmax.f32 %v4421, 0.0
    %v4430 = vmax.f32 %v4422, 0.0
    %v4431 = vmax.f32 %v4423, 0.0
    %v4432 = vmax.f32 %v4424, 0.0
    %v4433 = vmax.f32 %v4425, 0.0
    %v4434 = vmax.f32 %v4426, 0.0
    %v4435 = vmax.f32 %v4427, 0.0
    %v4436 = vld [vmem:[%s12] sm:$0xff]
    %v4437 = vld [vmem:[%s12 + $0x8] sm:$0xff]
    %v4438 = vld [vmem:[%s12 + $0x10] sm:$0xff]
    %v4439 = vld [vmem:[%s12 + $0x18] sm:$0xff]
    %v4440 = vld [vmem:[%s13] sm:$0xff]
    %v4441 = vld [vmem:[%s13 + $0x8] sm:$0xff]
    %v4442 = vld [vmem:[%s13 + $0x10] sm:$0xff]
    %v4443 = vld [vmem:[%s13 + $0x18] sm:$0xff]
    %4445 = vset.pattern.permute.xlu0 0
    %4446 = vperm.xlu0 %4445, %v4440
    %v4447 = vpop.permute.xlu0 %4446
    %4450 = vset.pattern.permute.xlu0 0
    %4451 = vperm.xlu0 %4450, %v4441
    %v4452 = vpop.permute.xlu0 %4451
    %4455 = vset.pattern.permute.xlu0 0
    %4456 = vperm.xlu0 %4455, %v4442
    %v4457 = vpop.permute.xlu0 %4456
    %4460 = vset.pattern.permute.xlu0 0
    %4461 = vperm.xlu0 %4460, %v4443
    %v4462 = vpop.permute.xlu0 %4461
    %vm4464 = vcmask 523264
    %v4466 = vsel %vm4464, %v4436, 0
    %v4469 = vsel %vm4464, %v4437, 0
    %v4472 = vsel %vm4464, %v4438, 0
    %v4475 = vsel %vm4464, %v4439, 0
    %4477 = vmatprep.subr.mxu0 0.0
    %4478 = vmatpush1.msra.mxu0 0.0
    %4479 = vmatprep.subr.mxu0 0.0
    %4480 = vmatpush1.msra.mxu0 0.0
    %4481 = vmatprep.subr.mxu0 0.0
    %4482 = vmatpush1.msra.mxu0 0.0
    %4483 = vmatprep.subr.mxu0 0.0
    %4484 = vmatpush1.msra.mxu0 0.0
    %4485 = vmatprep.subr.mxu0 0.0
    %4486 = vmatpush1.msra.mxu0 0.0
    %4487 = vmatprep.subr.mxu0 0.0
    %4488 = vmatpush1.msra.mxu0 0.0
    %4489 = vmatprep.subr.mxu0 0.0
    %4490 = vmatpush1.msra.mxu0 0.0
    %4491 = vmatprep.subr.mxu0 0.0
    %4492 = vmatpush1.msra.mxu0 0.0
    %4493 = vmatprep.subr.mxu0 0.0
    %4494 = vmatpush1.msra.mxu0 %v4435
    %4495 = vmatprep.subr.mxu0 0.0
    %4496 = vmatpush1.msra.mxu0 %v4434
    %4497 = vmatprep.subr.mxu0 0.0
    %4498 = vmatpush1.msra.mxu0 %v4433
    %4499 = vmatprep.subr.mxu0 0.0
    %4500 = vmatpush1.msra.mxu0 %v4432
    %4501 = vmatprep.subr.mxu0 0.0
    %4502 = vmatpush1.msra.mxu0 %v4431
    %4503 = vmatprep.subr.mxu0 0.0
    %4504 = vmatpush1.msra.mxu0 %v4430
    %4505 = vmatprep.subr.mxu0 0.0
    %4506 = vmatpush1.msra.mxu0 %v4429
    %4507 = vmatprep.subr.mxu0 0.0
    %4508 = vmatpush1.msra.mxu0 %v4428
    %4509 = vmatprep.subr.mxu0 0.0
    %4510 = vmatpush2.msra.mxu0 0.0
    %4511 = vmatprep.subr.mxu0 0.0
    %4512 = vmatpush2.msra.mxu0 0.0
    %4513 = vmatprep.subr.mxu0 0.0
    %4514 = vmatpush2.msra.mxu0 0.0
    %4515 = vmatprep.subr.mxu0 0.0
    %4516 = vmatpush2.msra.mxu0 0.0
    %4517 = vmatprep.subr.mxu0 0.0
    %4518 = vmatpush2.msra.mxu0 0.0
    %4519 = vmatprep.subr.mxu0 0.0
    %4520 = vmatpush2.msra.mxu0 0.0
    %4521 = vmatprep.subr.mxu0 0.0
    %4522 = vmatpush2.msra.mxu0 0.0
    %4523 = vmatprep.subr.mxu0 0.0
    %4524 = vmatpush2.msra.mxu0 0.0
    %4525 = vmatprep.subr.mxu0 0.0
    %4526 = vmatpush2.msra.mxu0 0.0
    %4527 = vmatprep.subr.mxu0 0.0
    %4528 = vmatpush2.msra.mxu0 0.0
    %4529 = vmatprep.subr.mxu0 0.0
    %4530 = vmatpush2.msra.mxu0 0.0
    %4531 = vmatprep.subr.mxu0 0.0
    %4532 = vmatpush2.msra.mxu0 0.0
    %4533 = vmatprep.subr.mxu0 0.0
    %4534 = vmatpush2.msra.mxu0 0.0
    %4535 = vmatprep.subr.mxu0 0.0
    %4536 = vmatpush2.msra.mxu0 0.0
    %4537 = vmatprep.subr.mxu0 0.0
    %4538 = vmatpush2.msra.mxu0 0.0
    %4539 = vmatprep.subr.mxu0 0.0
    %4540 = vmatpush2.msra.mxu0 0.0
    %4541 = vmatprep.mubr.f32.mxu0 0.0
    %4542 = vmatmul.mubr.f32.gmra.mxu0 %v4466
    %v4543 = vpop.f32.mrf.mxu0
    %v4544 = vadd.f32 %v4447, %v4543
    %v4545 = vpop.f32.mrf.mxu0
    %4546 = vmatprep.mubr.f32.mxu0 0.0
    %4547 = vmatmul.mubr.f32.gmra.mxu0 %v4469
    %v4548 = vpop.f32.mrf.mxu0
    %v4549 = vadd.f32 %v4452, %v4548
    %v4550 = vpop.f32.mrf.mxu0
    %4551 = vmatprep.mubr.f32.mxu0 0.0
    %4552 = vmatmul.mubr.f32.gmra.mxu0 %v4472
    %v4553 = vpop.f32.mrf.mxu0
    %v4554 = vadd.f32 %v4457, %v4553
    %v4555 = vpop.f32.mrf.mxu0
    %4556 = vmatprep.mubr.f32.mxu0 0.0
    %4557 = vmatmul.mubr.f32.gmra.mxu0 %v4475
    %v4558 = vpop.f32.mrf.mxu0
    %v4559 = vadd.f32 %v4462, %v4558
    %v4560 = vpop.f32.mrf.mxu0
    %4561 = vdwg.mxu0
    %v4562 = vmax.f32 %v4544, 0.0
    %v4563 = vmax.f32 %v4549, 0.0
    %v4564 = vmax.f32 %v4554, 0.0
    %v4565 = vmax.f32 %v4559, 0.0
    %v4566 = vld [vmem:[%s14] sm:$0xff]
    %v4567 = vld [vmem:[%s14 + $0x8] sm:$0xff]
    %v4568 = vld [vmem:[%s14 + $0x10] sm:$0xff]
    %v4569 = vld [vmem:[%s14 + $0x18] sm:$0xff]
    %4571 = vset.pattern.permute.xlu0 0
    %4572 = vperm.xlu0 %4571, %v4566
    %v4573 = vpop.permute.xlu0 %4572
    %4576 = vset.pattern.permute.xlu0 0
    %4577 = vperm.xlu0 %4576, %v4567
    %v4578 = vpop.permute.xlu0 %4577
    %4581 = vset.pattern.permute.xlu0 0
    %4582 = vperm.xlu0 %4581, %v4568
    %v4583 = vpop.permute.xlu0 %4582
    %4586 = vset.pattern.permute.xlu0 0
    %4587 = vperm.xlu0 %4586, %v4569
    %v4588 = vpop.permute.xlu0 %4587
    %v4590 = vmul.f32 %v4573, %v4562
    %v4591 = vmul.f32 %v4578, %v4563
    %v4592 = vmul.f32 %v4583, %v4564
    %v4593 = vmul.f32 %v4588, %v4565
    %v4594 = vsel %vm90, %v4590, 0.0
    %v4595 = vsel %vm90, %v4591, 0.0
    %v4596 = vadd.f32 %v4594, %v4595
    %v4597 = vsel %vm90, %v4592, 0.0
    %v4598 = vadd.f32 %v4596, %v4597
    %v4599 = vsel %vm90, %v4593, 0.0
    %v4600 = vadd.f32 %v4598, %v4599
    %v4601 = vrot.slane %v4600, 4
    %v4602 = vadd.f32 %v4600, %v4601
    %v4603 = vrot.slane %v4602, 2
    %v4604 = vadd.f32 %v4602, %v4603
    %v4605 = vrot.slane %v4604, 1
    %v4606 = vadd.f32 %v4604, %v4605
    %v4607 = vld [vmem:[#allocation4] sm:$0x1]
    %4609 = vset.pattern.permute.xlu0 0
    %4610 = vperm.xlu0 %4609, %v4607
    %v4611 = vpop.permute.xlu0 %4610
    %v4613 = vlaneseq
    %v4614 = vshrl.u32 %v4613, 7
    %v4615 = vsub.s32 0, %v4614
    %v4616 = vrot.slane %v4611, %v4615
    %v4617 = vadd.f32 %v4606, %v4616
    %v4618 = vxor.u32 %v4617, 2147483648
    %v4619 = vmul.f32 %v4618, 1.442695
    %v4620 = vpow.pop %v4619
    %v4621 = vadd.f32 %v4620, 1.0
    %v4622 = vrcp.pop %v4621
    %v4623 = vmul.f32 1.0, %v4622
    %v4624 = vmul.f32 %v4623, 4.0
    %v4625 = vadd.f32 %v4624, 6.0
    %4626 = vst.msk [vmem:[#allocation5] sm:$0x1] %vm3908, %v4625
    // Predicated region
    $region66: #{tpu_custom_call.1} parent=1 // pred_check
      _
    $region67: #{tpu_custom_call.1} parent=1 // pred_check_branch
      %4628 = sbr.rel (0) target = $region69
    $region68: #{tpu_custom_call.1} parent=1 // pred_region
      %s4630 = ssub.s32 16, 16
      %4631 = vsyncadd [#allocation6], %s4630
      %s4633 = sshll.u32 [#allocation5], 4
      %s4634 = int_to_ptr.vmem [resolvable:$true] %s4633
      %4636 = dma.vmem_to_hbm [thread:$0]  %s4634, 16, %s16, [#allocation6]
    $region69: #{tpu_custom_call.1} parent=1 // pred_fallthru
      _
    // Predicated region
    $region70: #{tpu_custom_call.1} parent=1 // pred_check
      _
    $region71: #{tpu_custom_call.1} parent=1 // pred_check_branch
      %4638 = sbr.rel (0) target = $region73
    $region72: #{tpu_custom_call.1} parent=1 // pred_region
      %4639 = dma.done [#allocation6], 16
    $region73: #{tpu_custom_call.1} parent=1 // pred_fallthru
      _
    %4640 = vsyncpa [#allocation6], 1

</llo_original>
